<compile_context>
chip_gen: v7x
topology: tpu7x:2x2x1
jax: 0.10.0
libtpu: 0.0.40
codegen_flags: <defaults>
</compile_context>

<pallas_src>
import math
from functools import partial

import jax
import jax.numpy as jnp
from jax import lax
from jax.experimental import pallas as pl
from jax.experimental.pallas import tpu as pltpu


# ---------------------------------------------------------------- helpers ----
def _layernorm(x, gamma, beta, eps=1e-5):
    mu = jnp.mean(x, axis=-1, keepdims=True)
    var = jnp.mean((x - mu) ** 2, axis=-1, keepdims=True)
    return (x - mu) * lax.rsqrt(var + eps) * gamma + beta


def _gelu_exact(x):
    # matches torch.nn.GELU() (exact erf form)
    return 0.5 * x * (1.0 + lax.erf(x * (1.0 / math.sqrt(2.0))))


# ----------------------------------------------------------------- kernel ----
def transformer_block_kernel(
        x_ref,                     # (1, T, D)  f32  full sequence of this batch
        g1_ref, be1_ref,           # (1, D)     f32  LayerNorm 1
        wq_ref, wk_ref, wv_ref,    # (H, D, dh) bf16 (1/sqrt(dh) folded into Wq)
        wo_ref,                    # (H, dh, D) bf16
        bo_ref,                    # (1, D)     f32
        g2_ref, be2_ref,           # (1, D)     f32  LayerNorm 2
        w1_ref, b1_ref,            # (D, F) bf16 / (1, F) f32
        w2_ref, b2_ref,            # (F, D) bf16 / (1, D) f32
        o_ref,                     # (1, TQ, D)
        xn_scr,                    # (T, D)            bf16  LN1(x) cache
        k_scr, v_scr,              # (n_kt, H, TK, dh) bf16  head-major K/V cache
        *, n_heads, d_attn, q_tile, k_tile):
    f32 = jnp.float32
    bf16 = jnp.bfloat16

    T, D = x_ref.shape[1], x_ref.shape[2]
    TQ, TK = q_tile, k_tile
    n_kt = T // TK
    qt = pl.program_id(1)

    # ---- once per batch element (first q-tile): LN1 + K/V projections, cached.
    # Weights are pre-split per head host-side, so each head's K/V lands directly
    # in the head-major cache (no lane-slice / stack / transpose relayouts).
    @pl.when(qt == 0)
    def _build_kv_cache():
        xn = _layernorm(x_ref[0], g1_ref[0], be1_ref[0]).astype(bf16)    # (T, D)
        xn_scr[...] = xn
        for h in range(n_heads):                      # static; once per batch
            k_h = jnp.dot(xn, wk_ref[h], preferred_element_type=f32)     # (T, dh)
            v_h = jnp.dot(xn, wv_ref[h], preferred_element_type=f32)
            for kt in range(n_kt):                    # static
                k_scr[kt, h] = k_h[kt * TK:(kt + 1) * TK, :].astype(bf16)
                v_scr[kt, h] = v_h[kt * TK:(kt + 1) * TK, :].astype(bf16)

    # ---- this q-tile: slice residual rows + cached LN1 rows (no LN recompute) --
    q_start = pl.multiple_of(qt * TQ, TQ)
    x_q = x_ref[0, pl.ds(q_start, TQ), :]             # (TQ, D) f32  residual input
    xn_q = xn_scr[pl.ds(q_start, TQ), :]              # (TQ, D) bf16 cached LN1

    # Q projection per head (scale already folded into Wq), stacked head-major
    # once; every attention contraction below is a single batched einsum.
    qh = jnp.stack(
        [jnp.dot(xn_q, wq_ref[h], preferred_element_type=f32)
         for h in range(n_heads)], axis=0).astype(bf16)                  # (H,TQ,dh)

    # ---- flash attention: online softmax over K tiles, causal tile skip -------
    def kv_step(j, carry):
        m_prev, l_prev, acc_prev = carry
        k_j = k_scr[j]                                 # (H, TK, dh) bf16
        v_j = v_scr[j]
        s = jnp.einsum('hqd,hkd->hqk', qh, k_j,
                       preferred_element_type=f32)     # (H, TQ, TK)
        # Additive causal bias; only the diagonal tile (j == qt) is affected —
        # tiles past the diagonal are skipped entirely by the loop bound below.
        row = q_start + lax.broadcasted_iota(jnp.int32, (TQ, TK), 0)
        col = j * TK + lax.broadcasted_iota(jnp.int32, (TQ, TK), 1)
        s = s + jnp.where(col > row, -1e30, 0.0)[None, :, :]

        m_new = jnp.maximum(m_prev, jnp.max(s, axis=-1, keepdims=True))
        alpha = jnp.exp(m_prev - m_new)
        p = jnp.exp(s - m_new)                         # EUP
        l_new = alpha * l_prev + jnp.sum(p, axis=-1, keepdims=True)
        acc_new = alpha * acc_prev + jnp.einsum(
            'hqk,hkd->hqd', p.astype(bf16), v_j, preferred_element_type=f32)
        return m_new, l_new, acc_new

    m0 = jnp.full((n_heads, TQ, 1), -1e30, f32)
    l0 = jnp.zeros((n_heads, TQ, 1), f32)
    a0 = jnp.zeros((n_heads, TQ, d_attn), f32)
    # causal skip: K tiles with k_start > q_end never run (trip count qt + 1)
    _, l_i, acc = lax.fori_loop(0, qt + 1, kv_step, (m0, l0, a0))

    # attn_dropout: identity (inference)
    ctx = (acc * pl.reciprocal(l_i, approx=True)).astype(bf16)   # (H, TQ, dh)

    # ---- output projection with the head merge fused into the accumulation ----
    # (no (H, TQ, D) intermediate, no lane-dim concatenate)
    attn_out = jnp.zeros((TQ, D), f32)
    for h in range(n_heads):
        attn_out = attn_out + jnp.dot(ctx[h], wo_ref[h],
                                      preferred_element_type=f32)
    attn_out = attn_out + bo_ref[0]
    # out_dropout: identity (inference)

    h1 = x_q + attn_out                                # residual 1 (f32)

    # ---- LayerNorm 2 + FFN (bf16 MXU operands, f32 everywhere else) -----------
    hn = _layernorm(h1, g2_ref[0], be2_ref[0])
    f1 = jnp.dot(hn.astype(bf16), w1_ref[...], preferred_element_type=f32) + b1_ref[0]
    f1 = _gelu_exact(f1)
    f2 = jnp.dot(f1.astype(bf16), w2_ref[...], preferred_element_type=f32) + b2_ref[0]
    # ffn dropout: identity (inference)

    o_ref[0] = (h1 + f2).astype(o_ref.dtype)


# ---------------------------------------------------------------- wrapper ----
def _generation_tuning():
    """Generation-aware (q-tile, vmem_limit_bytes): 256/96MiB on v6e,
    128/96MiB on v5e, conservative 128/48MiB on v7x / unknown hardware."""
    tq, vmem = 128, 48 * 1024 * 1024
    try:
        kind = jax.devices()[0].device_kind.lower()
        if "v6" in kind:
            tq, vmem = 256, 96 * 1024 * 1024
        elif "v5" in kind:
            tq, vmem = 128, 96 * 1024 * 1024
    except Exception:
        pass
    return tq, vmem


def transformer_block(x, params, n_heads):
    (g1, be1, wq, wk, wv, wo, bo, g2, be2, w1, b1, w2, b2) = params
    N, T, D = x.shape
    F = w1.shape[1]
    assert D % n_heads == 0
    d_attn = D // n_heads

    tq_target, vmem_limit = _generation_tuning()
    TQ = min(T, tq_target)
    assert T % TQ == 0, "sequence length must be divisible by the q/k tile"
    TK = TQ                       # equal tiles -> causal trip count is qt + 1
    n_qt = T // TQ
    n_kt = T // TK

    bf16 = jnp.bfloat16
    scale = 1.0 / math.sqrt(d_attn)
    # Pre-split all attention weights per head host-side; fold the softmax scale
    # into Wq so the kernel never multiplies by 1/sqrt(dh).
    wq3 = (wq * scale).reshape(D, n_heads, d_attn).transpose(1, 0, 2).astype(bf16)
    wk3 = wk.reshape(D, n_heads, d_attn).transpose(1, 0, 2).astype(bf16)
    wv3 = wv.reshape(D, n_heads, d_attn).transpose(1, 0, 2).astype(bf16)
    wo3 = wo.reshape(n_heads, d_attn, D).astype(bf16)
    w1b, w2b = w1.astype(bf16), w2.astype(bf16)

    operands = (x, g1, be1, wq3, wk3, wv3, wo3, bo, g2, be2, w1b, b1, w2b, b2)

    kernel = partial(transformer_block_kernel, n_heads=n_heads, d_attn=d_attn,
                     q_tile=TQ, k_tile=TK)

    def run(single_buffer_weights):
        def const_spec(shape):
            nd = len(shape)
            idx = lambda n, t, _nd=nd: (0,) * _nd
            if single_buffer_weights:
                # grid-invariant operand -> single-buffer (halves weight VMEM)
                return pl.BlockSpec(shape, idx, pipeline_mode=pl.Buffered(1))
            return pl.BlockSpec(shape, idx)

        in_specs = [
            pl.BlockSpec((1, T, D), lambda n, t: (n, 0, 0)),   # x (full sequence)
            const_spec((1, D)), const_spec((1, D)),            # ln1 gamma / beta
            const_spec((n_heads, D, d_attn)),                  # Wq (scaled)
            const_spec((n_heads, D, d_attn)),                  # Wk
            const_spec((n_heads, D, d_attn)),                  # Wv
            const_spec((n_heads, d_attn, D)),                  # Wo (head-split)
            const_spec((1, D)),                                # bo
            const_spec((1, D)), const_spec((1, D)),            # ln2 gamma / beta
            const_spec((D, F)), const_spec((1, F)),            # W1, b1
            const_spec((F, D)), const_spec((1, D)),            # W2, b2
        ]

        return pl.pallas_call(
            kernel,
            out_shape=jax.ShapeDtypeStruct((N, T, D), x.dtype),
            grid_spec=pltpu.PrefetchScalarGridSpec(
                num_scalar_prefetch=0,
                grid=(N, n_qt),
                in_specs=in_specs,
                out_specs=pl.BlockSpec((1, TQ, D), lambda n, t: (n, t, 0)),
                scratch_shapes=[
                    pltpu.VMEM((T, D), bf16),                       # LN1(x) cache
                    pltpu.VMEM((n_kt, n_heads, TK, d_attn), bf16),  # K cache
                    pltpu.VMEM((n_kt, n_heads, TK, d_attn), bf16),  # V cache
                ],
            ),
            compiler_params=pltpu.CompilerParams(
                # batch axis is independent (megacore-shardable); the q-tile axis
                # MUST be "arbitrary": the K/V cache is built at program_id(1)==0
                # and reused by later q-tiles of the same batch element.
                dimension_semantics=("parallel", "arbitrary"),
                vmem_limit_bytes=vmem_limit,
            ),
        )(*operands)

    try:
        return run(True)
    except Exception:
        # pl.Buffered(1) not supported by this JAX version -> default buffering.
        return run(False)


# --------------------------------------------------------- pure-JAX reference
def reference_block(x, params, n_heads):
    (g1, be1, wq, wk, wv, wo, bo, g2, be2, w1, b1, w2, b2) = params
    N, T, D = x.shape
    dh = D // n_heads

    xn = _layernorm(x, g1[0], be1[0])
    q = (xn @ wq).reshape(N, T, n_heads, dh).transpose(0, 2, 1, 3)
    k = (xn @ wk).reshape(N, T, n_heads, dh).transpose(0, 2, 1, 3)
    v = (xn @ wv).reshape(N, T, n_heads, dh).transpose(0, 2, 1, 3)
    attn = jnp.einsum('nhtd,nhsd->nhts', q, k) / math.sqrt(dh)
    mask = jnp.triu(jnp.ones((T, T), bool), k=1)
    attn = jnp.where(mask[None, None], -jnp.inf, attn)
    attn = jax.nn.softmax(attn, axis=-1)
    out = jnp.einsum('nhts,nhsd->nhtd', attn, v)
    out = out.transpose(0, 2, 1, 3).reshape(N, T, D)
    out = out @ wo + bo[0]
    h1 = out + x

    hn = _layernorm(h1, g2[0], be2[0])
    f = _gelu_exact(hn @ w1 + b1[0]) @ w2 + b2[0]
    return h1 + f


# ------------------------------------------------------------------- main ----
if __name__ == "__main__":
    N, T, D, H = 2, 8, 32, 4
    F = 4 * D

    key = jax.random.PRNGKey(0)
    ks = jax.random.split(key, 12)
    s = 0.02  # GPT-style init scale

    x = jax.random.normal(ks[0], (N, T, D), jnp.float32)

    g1 = jnp.ones((1, D), jnp.float32)
    be1 = jnp.zeros((1, D), jnp.float32)
    wq = s * jax.random.normal(ks[1], (D, D), jnp.float32)
    wk = s * jax.random.normal(ks[2], (D, D), jnp.float32)
    wv = s * jax.random.normal(ks[3], (D, D), jnp.float32)
    wo = s * jax.random.normal(ks[4], (D, D), jnp.float32)
    bo = s * jax.random.normal(ks[5], (1, D), jnp.float32)
    g2 = jnp.ones((1, D), jnp.float32)
    be2 = jnp.zeros((1, D), jnp.float32)
    w1 = s * jax.random.normal(ks[6], (D, F), jnp.float32)
    b1 = s * jax.random.normal(ks[7], (1, F), jnp.float32)
    w2 = s * jax.random.normal(ks[8], (F, D), jnp.float32)
    b2 = s * jax.random.normal(ks[9], (1, D), jnp.float32)

    params = (g1, be1, wq, wk, wv, wo, bo, g2, be2, w1, b1, w2, b2)

    out = transformer_block(x, params, n_heads=H)
    out = jax.block_until_ready(out)

    ref = reference_block(x, params, n_heads=H)
    assert out.shape == (N, T, D)
    # bf16 MXU operands (f32 accumulation) vs. all-f32 reference -> loosened tol.
    err = float(jnp.max(jnp.abs(out - ref)))
    assert jnp.allclose(out, ref, rtol=1e-2, atol=1e-2), err

    print("KERNEL_OK")
</pallas_src>

<mosaic_0001>
module attributes {stable_mosaic.version = 11 : i64} {
  func.func @transformer_block_kernel(%arg0: i32, %arg1: i32, %arg2: memref<1x8x32xf32, #tpu.memory_space<vmem>>, %arg3: memref<1x32xf32, #tpu.memory_space<vmem>>, %arg4: memref<1x32xf32, #tpu.memory_space<vmem>>, %arg5: memref<4x32x8xbf16, #tpu.memory_space<vmem>>, %arg6: memref<4x32x8xbf16, #tpu.memory_space<vmem>>, %arg7: memref<4x32x8xbf16, #tpu.memory_space<vmem>>, %arg8: memref<4x8x32xbf16, #tpu.memory_space<vmem>>, %arg9: memref<1x32xf32, #tpu.memory_space<vmem>>, %arg10: memref<1x32xf32, #tpu.memory_space<vmem>>, %arg11: memref<1x32xf32, #tpu.memory_space<vmem>>, %arg12: memref<32x128xbf16, #tpu.memory_space<vmem>>, %arg13: memref<1x128xf32, #tpu.memory_space<vmem>>, %arg14: memref<128x32xbf16, #tpu.memory_space<vmem>>, %arg15: memref<1x32xf32, #tpu.memory_space<vmem>>, %arg16: memref<1x8x32xf32, #tpu.memory_space<vmem>>, %arg17: memref<8x32xbf16, #tpu.memory_space<vmem>>, %arg18: memref<1x4x8x8xbf16, #tpu.memory_space<vmem>>, %arg19: memref<1x4x8x8xbf16, #tpu.memory_space<vmem>>) attributes {dimension_semantics = [#tpu.dimension_semantics<parallel>, #tpu.dimension_semantics<arbitrary>], iteration_bounds = array<i64: 2, 1>, scalar_prefetch = 0 : i64, scratch_operands = 3 : i64, tpu.core_type = #tpu.core_type<tc>, window_params = [{transform_indices = @transform_0, window_bounds = array<i64: 1, 8, 32>}, {pipeline_mode = #tpu.pipeline_mode<synchronous>, transform_indices = @transform_1, window_bounds = array<i64: 1, 32>}, {pipeline_mode = #tpu.pipeline_mode<synchronous>, transform_indices = @transform_2, window_bounds = array<i64: 1, 32>}, {pipeline_mode = #tpu.pipeline_mode<synchronous>, transform_indices = @transform_3, window_bounds = array<i64: 4, 32, 8>}, {pipeline_mode = #tpu.pipeline_mode<synchronous>, transform_indices = @transform_4, window_bounds = array<i64: 4, 32, 8>}, {pipeline_mode = #tpu.pipeline_mode<synchronous>, transform_indices = @transform_5, window_bounds = array<i64: 4, 32, 8>}, {pipeline_mode = #tpu.pipeline_mode<synchronous>, transform_indices = @transform_6, window_bounds = array<i64: 4, 8, 32>}, {pipeline_mode = #tpu.pipeline_mode<synchronous>, transform_indices = @transform_7, window_bounds = array<i64: 1, 32>}, {pipeline_mode = #tpu.pipeline_mode<synchronous>, transform_indices = @transform_8, window_bounds = array<i64: 1, 32>}, {pipeline_mode = #tpu.pipeline_mode<synchronous>, transform_indices = @transform_9, window_bounds = array<i64: 1, 32>}, {pipeline_mode = #tpu.pipeline_mode<synchronous>, transform_indices = @transform_10, window_bounds = array<i64: 32, 128>}, {pipeline_mode = #tpu.pipeline_mode<synchronous>, transform_indices = @transform_11, window_bounds = array<i64: 1, 128>}, {pipeline_mode = #tpu.pipeline_mode<synchronous>, transform_indices = @transform_12, window_bounds = array<i64: 128, 32>}, {pipeline_mode = #tpu.pipeline_mode<synchronous>, transform_indices = @transform_13, window_bounds = array<i64: 1, 32>}, {transform_indices = @transform_14, window_bounds = array<i64: 1, 8, 32>}]} {
    %c0_i32 = arith.constant 0 : i32
    %0 = arith.cmpi eq, %arg1, %c0_i32 : i32
    %1 = arith.extui %0 : i1 to i32
    %c0_i32_0 = arith.constant 0 : i32
    %2 = arith.cmpi ne, %1, %c0_i32_0 : i32
    scf.if %2 {
      %c0_64 = arith.constant 0 : index
      %c0_65 = arith.constant 0 : index
      %c0_66 = arith.constant 0 : index
      %126 = vector.load %arg2[%c0_64, %c0_65, %c0_66] : memref<1x8x32xf32, #tpu.memory_space<vmem>>, vector<1x8x32xf32>
      %127 = vector.shape_cast %126 : vector<1x8x32xf32> to vector<8x32xf32>
      %c0_67 = arith.constant 0 : index
      %c0_68 = arith.constant 0 : index
      %128 = vector.load %arg3[%c0_67, %c0_68] : memref<1x32xf32, #tpu.memory_space<vmem>>, vector<1x32xf32>
      %129 = vector.shape_cast %128 : vector<1x32xf32> to vector<32xf32>
      %c0_69 = arith.constant 0 : index
      %c0_70 = arith.constant 0 : index
      %130 = vector.load %arg4[%c0_69, %c0_70] : memref<1x32xf32, #tpu.memory_space<vmem>>, vector<1x32xf32>
      %131 = vector.shape_cast %130 : vector<1x32xf32> to vector<32xf32>
      %cst_71 = arith.constant dense<0.000000e+00> : vector<8xf32>
      %132 = vector.multi_reduction <add>, %127, %cst_71 [1] : vector<8x32xf32> to vector<8xf32>
      %133 = vector.shape_cast %132 : vector<8xf32> to vector<8x1xf32>
      %cst_72 = arith.constant 3.200000e+01 : f32
      %134 = vector.broadcast %cst_72 : f32 to vector<8x1xf32>
      %135 = arith.divf %133, %134 : vector<8x1xf32>
      %136 = vector.broadcast %135 : vector<8x1xf32> to vector<8x32xf32>
      %137 = arith.subf %127, %136 : vector<8x32xf32>
      %138 = arith.mulf %137, %137 : vector<8x32xf32>
      %cst_73 = arith.constant dense<0.000000e+00> : vector<8xf32>
      %139 = vector.multi_reduction <add>, %138, %cst_73 [1] : vector<8x32xf32> to vector<8xf32>
      %140 = vector.shape_cast %139 : vector<8xf32> to vector<8x1xf32>
      %cst_74 = arith.constant 3.200000e+01 : f32
      %141 = vector.broadcast %cst_74 : f32 to vector<8x1xf32>
      %142 = arith.divf %140, %141 : vector<8x1xf32>
      %143 = vector.broadcast %135 : vector<8x1xf32> to vector<8x32xf32>
      %144 = arith.subf %127, %143 : vector<8x32xf32>
      %cst_75 = arith.constant 9.99999974E-6 : f32
      %145 = vector.broadcast %cst_75 : f32 to vector<8x1xf32>
      %146 = arith.addf %142, %145 : vector<8x1xf32>
      %147 = math.rsqrt %146 : vector<8x1xf32>
      %148 = vector.broadcast %147 : vector<8x1xf32> to vector<8x32xf32>
      %149 = arith.mulf %144, %148 : vector<8x32xf32>
      %150 = vector.shape_cast %129 : vector<32xf32> to vector<1x32xf32>
      %151 = vector.broadcast %150 : vector<1x32xf32> to vector<8x32xf32>
      %152 = arith.mulf %149, %151 : vector<8x32xf32>
      %153 = vector.shape_cast %131 : vector<32xf32> to vector<1x32xf32>
      %154 = vector.broadcast %153 : vector<1x32xf32> to vector<8x32xf32>
      %155 = arith.addf %152, %154 : vector<8x32xf32>
      %156 = arith.truncf %155 : vector<8x32xf32> to vector<8x32xbf16>
      %c0_76 = arith.constant 0 : index
      %c0_77 = arith.constant 0 : index
      %157 = vector.load %arg17[%c0_76, %c0_77] : memref<8x32xbf16, #tpu.memory_space<vmem>>, vector<8x32xbf16>
      tpu.vector_store %arg17[%c0_76, %c0_77], %156 {strides = array<i32>} : memref<8x32xbf16, #tpu.memory_space<vmem>>, vector<8x32xbf16>,
      %c0_78 = arith.constant 0 : index
      %c0_79 = arith.constant 0 : index
      %c0_80 = arith.constant 0 : index
      %158 = vector.load %arg6[%c0_78, %c0_79, %c0_80] : memref<4x32x8xbf16, #tpu.memory_space<vmem>>, vector<1x32x8xbf16>
      %159 = vector.shape_cast %158 : vector<1x32x8xbf16> to vector<32x8xbf16>
      %cst_81 = arith.constant dense<0.000000e+00> : vector<8x8xf32>
      %160 = tpu.matmul %156, %159, %cst_81 {dimension_numbers = #tpu.dot_dimension_numbers<[1], [0], [0], [1], [0, 0, 1, 1], [], []>} : vector<8x32xbf16>, vector<32x8xbf16>, vector<8x8xf32> -> vector<8x8xf32>
      %c0_82 = arith.constant 0 : index
      %c0_83 = arith.constant 0 : index
      %c0_84 = arith.constant 0 : index
      %161 = vector.load %arg7[%c0_82, %c0_83, %c0_84] : memref<4x32x8xbf16, #tpu.memory_space<vmem>>, vector<1x32x8xbf16>
      %162 = vector.shape_cast %161 : vector<1x32x8xbf16> to vector<32x8xbf16>
      %cst_85 = arith.constant dense<0.000000e+00> : vector<8x8xf32>
      %163 = tpu.matmul %156, %162, %cst_85 {dimension_numbers = #tpu.dot_dimension_numbers<[1], [0], [0], [1], [0, 0, 1, 1], [], []>} : vector<8x32xbf16>, vector<32x8xbf16>, vector<8x8xf32> -> vector<8x8xf32>
      %164 = arith.truncf %160 : vector<8x8xf32> to vector<8x8xbf16>
      %c0_86 = arith.constant 0 : index
      %c0_87 = arith.constant 0 : index
      %c0_88 = arith.constant 0 : index
      %c0_89 = arith.constant 0 : index
      %165 = vector.load %arg18[%c0_86, %c0_87, %c0_88, %c0_89] : memref<1x4x8x8xbf16, #tpu.memory_space<vmem>>, vector<1x1x8x8xbf16>
      %166 = vector.shape_cast %165 : vector<1x1x8x8xbf16> to vector<8x8xbf16>
      %167 = vector.shape_cast %164 : vector<8x8xbf16> to vector<1x1x8x8xbf16>
      tpu.vector_store %arg18[%c0_86, %c0_87, %c0_88, %c0_89], %167 {strides = array<i32>} : memref<1x4x8x8xbf16, #tpu.memory_space<vmem>>, vector<1x1x8x8xbf16>,
      %168 = arith.truncf %163 : vector<8x8xf32> to vector<8x8xbf16>
      %c0_90 = arith.constant 0 : index
      %c0_91 = arith.constant 0 : index
      %c0_92 = arith.constant 0 : index
      %c0_93 = arith.constant 0 : index
      %169 = vector.load %arg19[%c0_90, %c0_91, %c0_92, %c0_93] : memref<1x4x8x8xbf16, #tpu.memory_space<vmem>>, vector<1x1x8x8xbf16>
      %170 = vector.shape_cast %169 : vector<1x1x8x8xbf16> to vector<8x8xbf16>
      %171 = vector.shape_cast %168 : vector<8x8xbf16> to vector<1x1x8x8xbf16>
      tpu.vector_store %arg19[%c0_90, %c0_91, %c0_92, %c0_93], %171 {strides = array<i32>} : memref<1x4x8x8xbf16, #tpu.memory_space<vmem>>, vector<1x1x8x8xbf16>,
      %c1_94 = arith.constant 1 : index
      %c0_95 = arith.constant 0 : index
      %c0_96 = arith.constant 0 : index
      %172 = vector.load %arg6[%c1_94, %c0_95, %c0_96] : memref<4x32x8xbf16, #tpu.memory_space<vmem>>, vector<1x32x8xbf16>
      %173 = vector.shape_cast %172 : vector<1x32x8xbf16> to vector<32x8xbf16>
      %cst_97 = arith.constant dense<0.000000e+00> : vector<8x8xf32>
      %174 = tpu.matmul %156, %173, %cst_97 {dimension_numbers = #tpu.dot_dimension_numbers<[1], [0], [0], [1], [0, 0, 1, 1], [], []>} : vector<8x32xbf16>, vector<32x8xbf16>, vector<8x8xf32> -> vector<8x8xf32>
      %c1_98 = arith.constant 1 : index
      %c0_99 = arith.constant 0 : index
      %c0_100 = arith.constant 0 : index
      %175 = vector.load %arg7[%c1_98, %c0_99, %c0_100] : memref<4x32x8xbf16, #tpu.memory_space<vmem>>, vector<1x32x8xbf16>
      %176 = vector.shape_cast %175 : vector<1x32x8xbf16> to vector<32x8xbf16>
      %cst_101 = arith.constant dense<0.000000e+00> : vector<8x8xf32>
      %177 = tpu.matmul %156, %176, %cst_101 {dimension_numbers = #tpu.dot_dimension_numbers<[1], [0], [0], [1], [0, 0, 1, 1], [], []>} : vector<8x32xbf16>, vector<32x8xbf16>, vector<8x8xf32> -> vector<8x8xf32>
      %178 = arith.truncf %174 : vector<8x8xf32> to vector<8x8xbf16>
      %c0_102 = arith.constant 0 : index
      %c1_103 = arith.constant 1 : index
      %c0_104 = arith.constant 0 : index
      %c0_105 = arith.constant 0 : index
      %179 = vector.load %arg18[%c0_102, %c1_103, %c0_104, %c0_105] : memref<1x4x8x8xbf16, #tpu.memory_space<vmem>>, vector<1x1x8x8xbf16>
      %180 = vector.shape_cast %179 : vector<1x1x8x8xbf16> to vector<8x8xbf16>
      %181 = vector.shape_cast %178 : vector<8x8xbf16> to vector<1x1x8x8xbf16>
      tpu.vector_store %arg18[%c0_102, %c1_103, %c0_104, %c0_105], %181 {strides = array<i32>} : memref<1x4x8x8xbf16, #tpu.memory_space<vmem>>, vector<1x1x8x8xbf16>,
      %182 = arith.truncf %177 : vector<8x8xf32> to vector<8x8xbf16>
      %c0_106 = arith.constant 0 : index
      %c1_107 = arith.constant 1 : index
      %c0_108 = arith.constant 0 : index
      %c0_109 = arith.constant 0 : index
      %183 = vector.load %arg19[%c0_106, %c1_107, %c0_108, %c0_109] : memref<1x4x8x8xbf16, #tpu.memory_space<vmem>>, vector<1x1x8x8xbf16>
      %184 = vector.shape_cast %183 : vector<1x1x8x8xbf16> to vector<8x8xbf16>
      %185 = vector.shape_cast %182 : vector<8x8xbf16> to vector<1x1x8x8xbf16>
      tpu.vector_store %arg19[%c0_106, %c1_107, %c0_108, %c0_109], %185 {strides = array<i32>} : memref<1x4x8x8xbf16, #tpu.memory_space<vmem>>, vector<1x1x8x8xbf16>,
      %c2_110 = arith.constant 2 : index
      %c0_111 = arith.constant 0 : index
      %c0_112 = arith.constant 0 : index
      %186 = vector.load %arg6[%c2_110, %c0_111, %c0_112] : memref<4x32x8xbf16, #tpu.memory_space<vmem>>, vector<1x32x8xbf16>
      %187 = vector.shape_cast %186 : vector<1x32x8xbf16> to vector<32x8xbf16>
      %cst_113 = arith.constant dense<0.000000e+00> : vector<8x8xf32>
      %188 = tpu.matmul %156, %187, %cst_113 {dimension_numbers = #tpu.dot_dimension_numbers<[1], [0], [0], [1], [0, 0, 1, 1], [], []>} : vector<8x32xbf16>, vector<32x8xbf16>, vector<8x8xf32> -> vector<8x8xf32>
      %c2_114 = arith.constant 2 : index
      %c0_115 = arith.constant 0 : index
      %c0_116 = arith.constant 0 : index
      %189 = vector.load %arg7[%c2_114, %c0_115, %c0_116] : memref<4x32x8xbf16, #tpu.memory_space<vmem>>, vector<1x32x8xbf16>
      %190 = vector.shape_cast %189 : vector<1x32x8xbf16> to vector<32x8xbf16>
      %cst_117 = arith.constant dense<0.000000e+00> : vector<8x8xf32>
      %191 = tpu.matmul %156, %190, %cst_117 {dimension_numbers = #tpu.dot_dimension_numbers<[1], [0], [0], [1], [0, 0, 1, 1], [], []>} : vector<8x32xbf16>, vector<32x8xbf16>, vector<8x8xf32> -> vector<8x8xf32>
      %192 = arith.truncf %188 : vector<8x8xf32> to vector<8x8xbf16>
      %c0_118 = arith.constant 0 : index
      %c2_119 = arith.constant 2 : index
      %c0_120 = arith.constant 0 : index
      %c0_121 = arith.constant 0 : index
      %193 = vector.load %arg18[%c0_118, %c2_119, %c0_120, %c0_121] : memref<1x4x8x8xbf16, #tpu.memory_space<vmem>>, vector<1x1x8x8xbf16>
      %194 = vector.shape_cast %193 : vector<1x1x8x8xbf16> to vector<8x8xbf16>
      %195 = vector.shape_cast %192 : vector<8x8xbf16> to vector<1x1x8x8xbf16>
      tpu.vector_store %arg18[%c0_118, %c2_119, %c0_120, %c0_121], %195 {strides = array<i32>} : memref<1x4x8x8xbf16, #tpu.memory_space<vmem>>, vector<1x1x8x8xbf16>,
      %196 = arith.truncf %191 : vector<8x8xf32> to vector<8x8xbf16>
      %c0_122 = arith.constant 0 : index
      %c2_123 = arith.constant 2 : index
      %c0_124 = arith.constant 0 : index
      %c0_125 = arith.constant 0 : index
      %197 = vector.load %arg19[%c0_122, %c2_123, %c0_124, %c0_125] : memref<1x4x8x8xbf16, #tpu.memory_space<vmem>>, vector<1x1x8x8xbf16>
      %198 = vector.shape_cast %197 : vector<1x1x8x8xbf16> to vector<8x8xbf16>
      %199 = vector.shape_cast %196 : vector<8x8xbf16> to vector<1x1x8x8xbf16>
      tpu.vector_store %arg19[%c0_122, %c2_123, %c0_124, %c0_125], %199 {strides = array<i32>} : memref<1x4x8x8xbf16, #tpu.memory_space<vmem>>, vector<1x1x8x8xbf16>,
      %c3_126 = arith.constant 3 : index
      %c0_127 = arith.constant 0 : index
      %c0_128 = arith.constant 0 : index
      %200 = vector.load %arg6[%c3_126, %c0_127, %c0_128] : memref<4x32x8xbf16, #tpu.memory_space<vmem>>, vector<1x32x8xbf16>
      %201 = vector.shape_cast %200 : vector<1x32x8xbf16> to vector<32x8xbf16>
      %cst_129 = arith.constant dense<0.000000e+00> : vector<8x8xf32>
      %202 = tpu.matmul %156, %201, %cst_129 {dimension_numbers = #tpu.dot_dimension_numbers<[1], [0], [0], [1], [0, 0, 1, 1], [], []>} : vector<8x32xbf16>, vector<32x8xbf16>, vector<8x8xf32> -> vector<8x8xf32>
      %c3_130 = arith.constant 3 : index
      %c0_131 = arith.constant 0 : index
      %c0_132 = arith.constant 0 : index
      %203 = vector.load %arg7[%c3_130, %c0_131, %c0_132] : memref<4x32x8xbf16, #tpu.memory_space<vmem>>, vector<1x32x8xbf16>
      %204 = vector.shape_cast %203 : vector<1x32x8xbf16> to vector<32x8xbf16>
      %cst_133 = arith.constant dense<0.000000e+00> : vector<8x8xf32>
      %205 = tpu.matmul %156, %204, %cst_133 {dimension_numbers = #tpu.dot_dimension_numbers<[1], [0], [0], [1], [0, 0, 1, 1], [], []>} : vector<8x32xbf16>, vector<32x8xbf16>, vector<8x8xf32> -> vector<8x8xf32>
      %206 = arith.truncf %202 : vector<8x8xf32> to vector<8x8xbf16>
      %c0_134 = arith.constant 0 : index
      %c3_135 = arith.constant 3 : index
      %c0_136 = arith.constant 0 : index
      %c0_137 = arith.constant 0 : index
      %207 = vector.load %arg18[%c0_134, %c3_135, %c0_136, %c0_137] : memref<1x4x8x8xbf16, #tpu.memory_space<vmem>>, vector<1x1x8x8xbf16>
      %208 = vector.shape_cast %207 : vector<1x1x8x8xbf16> to vector<8x8xbf16>
      %209 = vector.shape_cast %206 : vector<8x8xbf16> to vector<1x1x8x8xbf16>
      tpu.vector_store %arg18[%c0_134, %c3_135, %c0_136, %c0_137], %209 {strides = array<i32>} : memref<1x4x8x8xbf16, #tpu.memory_space<vmem>>, vector<1x1x8x8xbf16>,
      %210 = arith.truncf %205 : vector<8x8xf32> to vector<8x8xbf16>
      %c0_138 = arith.constant 0 : index
      %c3_139 = arith.constant 3 : index
      %c0_140 = arith.constant 0 : index
      %c0_141 = arith.constant 0 : index
      %211 = vector.load %arg19[%c0_138, %c3_139, %c0_140, %c0_141] : memref<1x4x8x8xbf16, #tpu.memory_space<vmem>>, vector<1x1x8x8xbf16>
      %212 = vector.shape_cast %211 : vector<1x1x8x8xbf16> to vector<8x8xbf16>
      %213 = vector.shape_cast %210 : vector<8x8xbf16> to vector<1x1x8x8xbf16>
      tpu.vector_store %arg19[%c0_138, %c3_139, %c0_140, %c0_141], %213 {strides = array<i32>} : memref<1x4x8x8xbf16, #tpu.memory_space<vmem>>, vector<1x1x8x8xbf16>,
    } else {
    }
    %c8_i32 = arith.constant 8 : i32
    %3 = arith.muli %arg1, %c8_i32 : i32
    %4 = tpu.assume_multiple %3, 8 : i32
    %c0 = arith.constant 0 : index
    %5 = arith.index_cast %4 : i32 to index
    %c0_1 = arith.constant 0 : index
    %6 = vector.load %arg2[%c0, %5, %c0_1] : memref<1x8x32xf32, #tpu.memory_space<vmem>>, vector<1x8x32xf32>
    %7 = vector.shape_cast %6 : vector<1x8x32xf32> to vector<8x32xf32>
    %8 = arith.index_cast %4 : i32 to index
    %c0_2 = arith.constant 0 : index
    %9 = vector.load %arg17[%8, %c0_2] : memref<8x32xbf16, #tpu.memory_space<vmem>>, vector<8x32xbf16>
    %c0_3 = arith.constant 0 : index
    %c0_4 = arith.constant 0 : index
    %c0_5 = arith.constant 0 : index
    %10 = vector.load %arg5[%c0_3, %c0_4, %c0_5] : memref<4x32x8xbf16, #tpu.memory_space<vmem>>, vector<1x32x8xbf16>
    %11 = vector.shape_cast %10 : vector<1x32x8xbf16> to vector<32x8xbf16>
    %cst = arith.constant dense<0.000000e+00> : vector<8x8xf32>
    %12 = tpu.matmul %9, %11, %cst {dimension_numbers = #tpu.dot_dimension_numbers<[1], [0], [0], [1], [0, 0, 1, 1], [], []>} : vector<8x32xbf16>, vector<32x8xbf16>, vector<8x8xf32> -> vector<8x8xf32>
    %c1 = arith.constant 1 : index
    %c0_6 = arith.constant 0 : index
    %c0_7 = arith.constant 0 : index
    %13 = vector.load %arg5[%c1, %c0_6, %c0_7] : memref<4x32x8xbf16, #tpu.memory_space<vmem>>, vector<1x32x8xbf16>
    %14 = vector.shape_cast %13 : vector<1x32x8xbf16> to vector<32x8xbf16>
    %cst_8 = arith.constant dense<0.000000e+00> : vector<8x8xf32>
    %15 = tpu.matmul %9, %14, %cst_8 {dimension_numbers = #tpu.dot_dimension_numbers<[1], [0], [0], [1], [0, 0, 1, 1], [], []>} : vector<8x32xbf16>, vector<32x8xbf16>, vector<8x8xf32> -> vector<8x8xf32>
    %c2 = arith.constant 2 : index
    %c0_9 = arith.constant 0 : index
    %c0_10 = arith.constant 0 : index
    %16 = vector.load %arg5[%c2, %c0_9, %c0_10] : memref<4x32x8xbf16, #tpu.memory_space<vmem>>, vector<1x32x8xbf16>
    %17 = vector.shape_cast %16 : vector<1x32x8xbf16> to vector<32x8xbf16>
    %cst_11 = arith.constant dense<0.000000e+00> : vector<8x8xf32>
    %18 = tpu.matmul %9, %17, %cst_11 {dimension_numbers = #tpu.dot_dimension_numbers<[1], [0], [0], [1], [0, 0, 1, 1], [], []>} : vector<8x32xbf16>, vector<32x8xbf16>, vector<8x8xf32> -> vector<8x8xf32>
    %c3 = arith.constant 3 : index
    %c0_12 = arith.constant 0 : index
    %c0_13 = arith.constant 0 : index
    %19 = vector.load %arg5[%c3, %c0_12, %c0_13] : memref<4x32x8xbf16, #tpu.memory_space<vmem>>, vector<1x32x8xbf16>
    %20 = vector.shape_cast %19 : vector<1x32x8xbf16> to vector<32x8xbf16>
    %cst_14 = arith.constant dense<0.000000e+00> : vector<8x8xf32>
    %21 = tpu.matmul %9, %20, %cst_14 {dimension_numbers = #tpu.dot_dimension_numbers<[1], [0], [0], [1], [0, 0, 1, 1], [], []>} : vector<8x32xbf16>, vector<32x8xbf16>, vector<8x8xf32> -> vector<8x8xf32>
    %22 = vector.shape_cast %12 : vector<8x8xf32> to vector<1x8x8xf32>
    %23 = vector.shape_cast %15 : vector<8x8xf32> to vector<1x8x8xf32>
    %24 = vector.shape_cast %18 : vector<8x8xf32> to vector<1x8x8xf32>
    %25 = vector.shape_cast %21 : vector<8x8xf32> to vector<1x8x8xf32>
    %26 = tpu.concatenate %22, %23, %24, %25 in 0 : vector<1x8x8xf32>, vector<1x8x8xf32>, vector<1x8x8xf32>, vector<1x8x8xf32> -> vector<4x8x8xf32>
    %27 = arith.truncf %26 : vector<4x8x8xf32> to vector<4x8x8xbf16>
    %cst_15 = arith.constant -1.000000e+30 : f32
    %28 = vector.broadcast %cst_15 : f32 to vector<4x8x1xf32>
    %cst_16 = arith.constant 0.000000e+00 : f32
    %29 = vector.broadcast %cst_16 : f32 to vector<4x8x1xf32>
    %cst_17 = arith.constant 0.000000e+00 : f32
    %30 = vector.broadcast %cst_17 : f32 to vector<4x8x8xf32>
    %c1_i32 = arith.constant 1 : i32
    %31 = arith.addi %arg1, %c1_i32 : i32
    %c0_i32_18 = arith.constant 0 : i32
    %32 = arith.subi %31, %c0_i32_18 : i32
    %33 = arith.addi %c0_i32_18, %32 : i32
    %c1_i32_19 = arith.constant 1 : i32
    %34:3 = scf.for %arg20 = %c0_i32_18 to %33 step %c1_i32_19 iter_args(%arg21 = %28, %arg22 = %29, %arg23 = %30) -> (vector<4x8x1xf32>, vector<4x8x1xf32>, vector<4x8x8xf32>)  : i32 {
      %126 = arith.index_cast %arg20 : i32 to index
      %c0_64 = arith.constant 0 : index
      %c0_65 = arith.constant 0 : index
      %c0_66 = arith.constant 0 : index
      %127 = vector.load %arg18[%126, %c0_64, %c0_65, %c0_66] : memref<1x4x8x8xbf16, #tpu.memory_space<vmem>>, vector<1x4x8x8xbf16>
      %128 = vector.shape_cast %127 : vector<1x4x8x8xbf16> to vector<4x8x8xbf16>
      %129 = arith.index_cast %arg20 : i32 to index
      %c0_67 = arith.constant 0 : index
      %c0_68 = arith.constant 0 : index
      %c0_69 = arith.constant 0 : index
      %130 = vector.load %arg19[%129, %c0_67, %c0_68, %c0_69] : memref<1x4x8x8xbf16, #tpu.memory_space<vmem>>, vector<1x4x8x8xbf16>
      %131 = vector.shape_cast %130 : vector<1x4x8x8xbf16> to vector<4x8x8xbf16>
      "tpu.trace_start"() <{level = 10 : i32, message = "hqd,hkd->hqk"}> : () -> ()
      %cst_70 = arith.constant dense<0.000000e+00> : vector<4x8x8xf32>
      %132 = tpu.matmul %27, %128, %cst_70 {dimension_numbers = #tpu.dot_dimension_numbers<[2], [2], [1], [1], [0, 0, 0, 1, 1, 1], [0], [0]>} : vector<4x8x8xbf16>, vector<4x8x8xbf16>, vector<4x8x8xf32> -> vector<4x8x8xf32>
      "tpu.trace_stop"() : () -> ()
      %133 = tpu.iota {dimensions = array<i32: 0>} : vector<8x8xi32>
      %134 = vector.broadcast %4 : i32 to vector<8x8xi32>
      %135 = arith.addi %134, %133 : vector<8x8xi32>
      %c8_i32_71 = arith.constant 8 : i32
      %136 = arith.muli %arg20, %c8_i32_71 : i32
      %137 = tpu.iota {dimensions = array<i32: 1>} : vector<8x8xi32>
      %138 = vector.broadcast %136 : i32 to vector<8x8xi32>
      %139 = arith.addi %138, %137 : vector<8x8xi32>
      %140 = arith.cmpi sgt, %139, %135 : vector<8x8xi32>
      %cst_72 = arith.constant -1.000000e+30 : f32
      %cst_73 = arith.constant 0.000000e+00 : f32
      %141 = vector.broadcast %cst_72 : f32 to vector<8x8xf32>
      %142 = vector.broadcast %cst_73 : f32 to vector<8x8xf32>
      %143 = arith.select %140, %141, %142 : vector<8x8xi1>, vector<8x8xf32>
      %144 = vector.shape_cast %143 : vector<8x8xf32> to vector<1x8x8xf32>
      %145 = vector.broadcast %144 : vector<1x8x8xf32> to vector<4x8x8xf32>
      %146 = arith.addf %132, %145 : vector<4x8x8xf32>
      %cst_74 = arith.constant dense<0xFF800000> : vector<4x8xf32>
      %147 = vector.multi_reduction <maximumf>, %146, %cst_74 [2] : vector<4x8x8xf32> to vector<4x8xf32>
      %148 = vector.shape_cast %147 : vector<4x8xf32> to vector<4x8x1xf32>
      %149 = arith.maximumf %arg21, %148 : vector<4x8x1xf32>
      %150 = arith.subf %arg21, %149 : vector<4x8x1xf32>
      %151 = math.exp %150 : vector<4x8x1xf32>
      %152 = vector.broadcast %149 : vector<4x8x1xf32> to vector<4x8x8xf32>
      %153 = arith.subf %146, %152 : vector<4x8x8xf32>
      %154 = math.exp %153 : vector<4x8x8xf32>
      %155 = arith.mulf %151, %arg22 : vector<4x8x1xf32>
      %cst_75 = arith.constant dense<0.000000e+00> : vector<4x8xf32>
      %156 = vector.multi_reduction <add>, %154, %cst_75 [2] : vector<4x8x8xf32> to vector<4x8xf32>
      %157 = vector.shape_cast %156 : vector<4x8xf32> to vector<4x8x1xf32>
      %158 = arith.addf %155, %157 : vector<4x8x1xf32>
      %159 = vector.broadcast %151 : vector<4x8x1xf32> to vector<4x8x8xf32>
      %160 = arith.mulf %159, %arg23 : vector<4x8x8xf32>
      %161 = arith.truncf %154 : vector<4x8x8xf32> to vector<4x8x8xbf16>
      "tpu.trace_start"() <{level = 10 : i32, message = "hqk,hkd->hqd"}> : () -> ()
      %cst_76 = arith.constant dense<0.000000e+00> : vector<4x8x8xf32>
      %162 = tpu.matmul %161, %131, %cst_76 {dimension_numbers = #tpu.dot_dimension_numbers<[2], [1], [1], [2], [0, 0, 0, 1, 1, 2], [0], [0]>} : vector<4x8x8xbf16>, vector<4x8x8xbf16>, vector<4x8x8xf32> -> vector<4x8x8xf32>
      "tpu.trace_stop"() : () -> ()
      %163 = arith.addf %160, %162 : vector<4x8x8xf32>
      scf.yield %149, %158, %163 : vector<4x8x1xf32>, vector<4x8x1xf32>, vector<4x8x8xf32>
    }
    %35 = tpu.reciprocal %34#1 {approx = true} : vector<4x8x1xf32> -> vector<4x8x1xf32>
    %36 = vector.broadcast %35 : vector<4x8x1xf32> to vector<4x8x8xf32>
    %37 = arith.mulf %34#2, %36 : vector<4x8x8xf32>
    %38 = arith.truncf %37 : vector<4x8x8xf32> to vector<4x8x8xbf16>
    %cst_20 = arith.constant 0.000000e+00 : f32
    %39 = vector.broadcast %cst_20 : f32 to vector<8x32xf32>
    %40 = vector.extract_strided_slice %38 {offsets = [0, 0, 0], sizes = [1, 8, 8], strides = [1, 1, 1]} : vector<4x8x8xbf16> to vector<1x8x8xbf16>
    %41 = vector.shape_cast %40 : vector<1x8x8xbf16> to vector<8x8xbf16>
    %c0_21 = arith.constant 0 : index
    %c0_22 = arith.constant 0 : index
    %c0_23 = arith.constant 0 : index
    %42 = vector.load %arg8[%c0_21, %c0_22, %c0_23] : memref<4x8x32xbf16, #tpu.memory_space<vmem>>, vector<1x8x32xbf16>
    %43 = vector.shape_cast %42 : vector<1x8x32xbf16> to vector<8x32xbf16>
    %cst_24 = arith.constant dense<0.000000e+00> : vector<8x32xf32>
    %44 = tpu.matmul %41, %43, %cst_24 {dimension_numbers = #tpu.dot_dimension_numbers<[1], [0], [0], [1], [0, 0, 1, 1], [], []>} : vector<8x8xbf16>, vector<8x32xbf16>, vector<8x32xf32> -> vector<8x32xf32>
    %45 = arith.addf %39, %44 : vector<8x32xf32>
    %46 = vector.extract_strided_slice %38 {offsets = [1, 0, 0], sizes = [1, 8, 8], strides = [1, 1, 1]} : vector<4x8x8xbf16> to vector<1x8x8xbf16>
    %47 = vector.shape_cast %46 : vector<1x8x8xbf16> to vector<8x8xbf16>
    %c1_25 = arith.constant 1 : index
    %c0_26 = arith.constant 0 : index
    %c0_27 = arith.constant 0 : index
    %48 = vector.load %arg8[%c1_25, %c0_26, %c0_27] : memref<4x8x32xbf16, #tpu.memory_space<vmem>>, vector<1x8x32xbf16>
    %49 = vector.shape_cast %48 : vector<1x8x32xbf16> to vector<8x32xbf16>
    %cst_28 = arith.constant dense<0.000000e+00> : vector<8x32xf32>
    %50 = tpu.matmul %47, %49, %cst_28 {dimension_numbers = #tpu.dot_dimension_numbers<[1], [0], [0], [1], [0, 0, 1, 1], [], []>} : vector<8x8xbf16>, vector<8x32xbf16>, vector<8x32xf32> -> vector<8x32xf32>
    %51 = arith.addf %45, %50 : vector<8x32xf32>
    %52 = vector.extract_strided_slice %38 {offsets = [2, 0, 0], sizes = [1, 8, 8], strides = [1, 1, 1]} : vector<4x8x8xbf16> to vector<1x8x8xbf16>
    %53 = vector.shape_cast %52 : vector<1x8x8xbf16> to vector<8x8xbf16>
    %c2_29 = arith.constant 2 : index
    %c0_30 = arith.constant 0 : index
    %c0_31 = arith.constant 0 : index
    %54 = vector.load %arg8[%c2_29, %c0_30, %c0_31] : memref<4x8x32xbf16, #tpu.memory_space<vmem>>, vector<1x8x32xbf16>
    %55 = vector.shape_cast %54 : vector<1x8x32xbf16> to vector<8x32xbf16>
    %cst_32 = arith.constant dense<0.000000e+00> : vector<8x32xf32>
    %56 = tpu.matmul %53, %55, %cst_32 {dimension_numbers = #tpu.dot_dimension_numbers<[1], [0], [0], [1], [0, 0, 1, 1], [], []>} : vector<8x8xbf16>, vector<8x32xbf16>, vector<8x32xf32> -> vector<8x32xf32>
    %57 = arith.addf %51, %56 : vector<8x32xf32>
    %58 = vector.extract_strided_slice %38 {offsets = [3, 0, 0], sizes = [1, 8, 8], strides = [1, 1, 1]} : vector<4x8x8xbf16> to vector<1x8x8xbf16>
    %59 = vector.shape_cast %58 : vector<1x8x8xbf16> to vector<8x8xbf16>
    %c3_33 = arith.constant 3 : index
    %c0_34 = arith.constant 0 : index
    %c0_35 = arith.constant 0 : index
    %60 = vector.load %arg8[%c3_33, %c0_34, %c0_35] : memref<4x8x32xbf16, #tpu.memory_space<vmem>>, vector<1x8x32xbf16>
    %61 = vector.shape_cast %60 : vector<1x8x32xbf16> to vector<8x32xbf16>
    %cst_36 = arith.constant dense<0.000000e+00> : vector<8x32xf32>
    %62 = tpu.matmul %59, %61, %cst_36 {dimension_numbers = #tpu.dot_dimension_numbers<[1], [0], [0], [1], [0, 0, 1, 1], [], []>} : vector<8x8xbf16>, vector<8x32xbf16>, vector<8x32xf32> -> vector<8x32xf32>
    %63 = arith.addf %57, %62 : vector<8x32xf32>
    %c0_37 = arith.constant 0 : index
    %c0_38 = arith.constant 0 : index
    %64 = vector.load %arg9[%c0_37, %c0_38] : memref<1x32xf32, #tpu.memory_space<vmem>>, vector<1x32xf32>
    %65 = vector.shape_cast %64 : vector<1x32xf32> to vector<32xf32>
    %66 = vector.shape_cast %65 : vector<32xf32> to vector<1x32xf32>
    %67 = vector.broadcast %66 : vector<1x32xf32> to vector<8x32xf32>
    %68 = arith.addf %63, %67 : vector<8x32xf32>
    %69 = arith.addf %7, %68 : vector<8x32xf32>
    %c0_39 = arith.constant 0 : index
    %c0_40 = arith.constant 0 : index
    %70 = vector.load %arg10[%c0_39, %c0_40] : memref<1x32xf32, #tpu.memory_space<vmem>>, vector<1x32xf32>
    %71 = vector.shape_cast %70 : vector<1x32xf32> to vector<32xf32>
    %c0_41 = arith.constant 0 : index
    %c0_42 = arith.constant 0 : index
    %72 = vector.load %arg11[%c0_41, %c0_42] : memref<1x32xf32, #tpu.memory_space<vmem>>, vector<1x32xf32>
    %73 = vector.shape_cast %72 : vector<1x32xf32> to vector<32xf32>
    %cst_43 = arith.constant dense<0.000000e+00> : vector<8xf32>
    %74 = vector.multi_reduction <add>, %69, %cst_43 [1] : vector<8x32xf32> to vector<8xf32>
    %75 = vector.shape_cast %74 : vector<8xf32> to vector<8x1xf32>
    %cst_44 = arith.constant 3.200000e+01 : f32
    %76 = vector.broadcast %cst_44 : f32 to vector<8x1xf32>
    %77 = arith.divf %75, %76 : vector<8x1xf32>
    %78 = vector.broadcast %77 : vector<8x1xf32> to vector<8x32xf32>
    %79 = arith.subf %69, %78 : vector<8x32xf32>
    %80 = arith.mulf %79, %79 : vector<8x32xf32>
    %cst_45 = arith.constant dense<0.000000e+00> : vector<8xf32>
    %81 = vector.multi_reduction <add>, %80, %cst_45 [1] : vector<8x32xf32> to vector<8xf32>
    %82 = vector.shape_cast %81 : vector<8xf32> to vector<8x1xf32>
    %cst_46 = arith.constant 3.200000e+01 : f32
    %83 = vector.broadcast %cst_46 : f32 to vector<8x1xf32>
    %84 = arith.divf %82, %83 : vector<8x1xf32>
    %85 = vector.broadcast %77 : vector<8x1xf32> to vector<8x32xf32>
    %86 = arith.subf %69, %85 : vector<8x32xf32>
    %cst_47 = arith.constant 9.99999974E-6 : f32
    %87 = vector.broadcast %cst_47 : f32 to vector<8x1xf32>
    %88 = arith.addf %84, %87 : vector<8x1xf32>
    %89 = math.rsqrt %88 : vector<8x1xf32>
    %90 = vector.broadcast %89 : vector<8x1xf32> to vector<8x32xf32>
    %91 = arith.mulf %86, %90 : vector<8x32xf32>
    %92 = vector.shape_cast %71 : vector<32xf32> to vector<1x32xf32>
    %93 = vector.broadcast %92 : vector<1x32xf32> to vector<8x32xf32>
    %94 = arith.mulf %91, %93 : vector<8x32xf32>
    %95 = vector.shape_cast %73 : vector<32xf32> to vector<1x32xf32>
    %96 = vector.broadcast %95 : vector<1x32xf32> to vector<8x32xf32>
    %97 = arith.addf %94, %96 : vector<8x32xf32>
    %98 = arith.truncf %97 : vector<8x32xf32> to vector<8x32xbf16>
    %c0_48 = arith.constant 0 : index
    %c0_49 = arith.constant 0 : index
    %99 = vector.load %arg12[%c0_48, %c0_49] : memref<32x128xbf16, #tpu.memory_space<vmem>>, vector<32x128xbf16>
    %cst_50 = arith.constant dense<0.000000e+00> : vector<8x128xf32>
    %100 = tpu.matmul %98, %99, %cst_50 {dimension_numbers = #tpu.dot_dimension_numbers<[1], [0], [0], [1], [0, 0, 1, 1], [], []>} : vector<8x32xbf16>, vector<32x128xbf16>, vector<8x128xf32> -> vector<8x128xf32>
    %c0_51 = arith.constant 0 : index
    %c0_52 = arith.constant 0 : index
    %101 = vector.load %arg13[%c0_51, %c0_52] : memref<1x128xf32, #tpu.memory_space<vmem>>, vector<1x128xf32>
    %102 = vector.shape_cast %101 : vector<1x128xf32> to vector<128xf32>
    %103 = vector.shape_cast %102 : vector<128xf32> to vector<1x128xf32>
    %104 = vector.broadcast %103 : vector<1x128xf32> to vector<8x128xf32>
    %105 = arith.addf %100, %104 : vector<8x128xf32>
    %cst_53 = arith.constant 5.000000e-01 : f32
    %106 = vector.broadcast %cst_53 : f32 to vector<8x128xf32>
    %107 = arith.mulf %106, %105 : vector<8x128xf32>
    %cst_54 = arith.constant 0.707106769 : f32
    %108 = vector.broadcast %cst_54 : f32 to vector<8x128xf32>
    %109 = arith.mulf %105, %108 : vector<8x128xf32>
    %110 = math.erf %109 : vector<8x128xf32>
    %cst_55 = arith.constant 1.000000e+00 : f32
    %111 = vector.broadcast %cst_55 : f32 to vector<8x128xf32>
    %112 = arith.addf %111, %110 : vector<8x128xf32>
    %113 = arith.mulf %107, %112 : vector<8x128xf32>
    %114 = arith.truncf %113 : vector<8x128xf32> to vector<8x128xbf16>
    %c0_56 = arith.constant 0 : index
    %c0_57 = arith.constant 0 : index
    %115 = vector.load %arg14[%c0_56, %c0_57] : memref<128x32xbf16, #tpu.memory_space<vmem>>, vector<128x32xbf16>
    %cst_58 = arith.constant dense<0.000000e+00> : vector<8x32xf32>
    %116 = tpu.matmul %114, %115, %cst_58 {dimension_numbers = #tpu.dot_dimension_numbers<[1], [0], [0], [1], [0, 0, 1, 1], [], []>} : vector<8x128xbf16>, vector<128x32xbf16>, vector<8x32xf32> -> vector<8x32xf32>
    %c0_59 = arith.constant 0 : index
    %c0_60 = arith.constant 0 : index
    %117 = vector.load %arg15[%c0_59, %c0_60] : memref<1x32xf32, #tpu.memory_space<vmem>>, vector<1x32xf32>
    %118 = vector.shape_cast %117 : vector<1x32xf32> to vector<32xf32>
    %119 = vector.shape_cast %118 : vector<32xf32> to vector<1x32xf32>
    %120 = vector.broadcast %119 : vector<1x32xf32> to vector<8x32xf32>
    %121 = arith.addf %116, %120 : vector<8x32xf32>
    %122 = arith.addf %69, %121 : vector<8x32xf32>
    %c0_61 = arith.constant 0 : index
    %c0_62 = arith.constant 0 : index
    %c0_63 = arith.constant 0 : index
    %123 = vector.load %arg16[%c0_61, %c0_62, %c0_63] : memref<1x8x32xf32, #tpu.memory_space<vmem>>, vector<1x8x32xf32>
    %124 = vector.shape_cast %123 : vector<1x8x32xf32> to vector<8x32xf32>
    %125 = vector.shape_cast %122 : vector<8x32xf32> to vector<1x8x32xf32>
    tpu.vector_store %arg16[%c0_61, %c0_62, %c0_63], %125 {strides = array<i32>} : memref<1x8x32xf32, #tpu.memory_space<vmem>>, vector<1x8x32xf32>,
    return
  }
  func.func @transform_0(%arg0: i32, %arg1: i32) -> (i32, i32, i32) {
    %c0_i32 = arith.constant 0 : i32
    %c0_i32_0 = arith.constant 0 : i32
    %c0_i32_1 = arith.constant 0 : i32
    return %arg0, %c0_i32, %c0_i32_0 : i32, i32, i32
  }
  func.func @transform_1(%arg0: i32, %arg1: i32) -> (i32, i32) {
    %c0_i32 = arith.constant 0 : i32
    %c0_i32_0 = arith.constant 0 : i32
    %c0_i32_1 = arith.constant 0 : i32
    return %c0_i32, %c0_i32_0 : i32, i32
  }
  func.func @transform_2(%arg0: i32, %arg1: i32) -> (i32, i32) {
    %c0_i32 = arith.constant 0 : i32
    %c0_i32_0 = arith.constant 0 : i32
    %c0_i32_1 = arith.constant 0 : i32
    return %c0_i32, %c0_i32_0 : i32, i32
  }
  func.func @transform_3(%arg0: i32, %arg1: i32) -> (i32, i32, i32) {
    %c0_i32 = arith.constant 0 : i32
    %c0_i32_0 = arith.constant 0 : i32
    %c0_i32_1 = arith.constant 0 : i32
    %c0_i32_2 = arith.constant 0 : i32
    return %c0_i32, %c0_i32_0, %c0_i32_1 : i32, i32, i32
  }
  func.func @transform_4(%arg0: i32, %arg1: i32) -> (i32, i32, i32) {
    %c0_i32 = arith.constant 0 : i32
    %c0_i32_0 = arith.constant 0 : i32
    %c0_i32_1 = arith.constant 0 : i32
    %c0_i32_2 = arith.constant 0 : i32
    return %c0_i32, %c0_i32_0, %c0_i32_1 : i32, i32, i32
  }
  func.func @transform_5(%arg0: i32, %arg1: i32) -> (i32, i32, i32) {
    %c0_i32 = arith.constant 0 : i32
    %c0_i32_0 = arith.constant 0 : i32
    %c0_i32_1 = arith.constant 0 : i32
    %c0_i32_2 = arith.constant 0 : i32
    return %c0_i32, %c0_i32_0, %c0_i32_1 : i32, i32, i32
  }
  func.func @transform_6(%arg0: i32, %arg1: i32) -> (i32, i32, i32) {
    %c0_i32 = arith.constant 0 : i32
    %c0_i32_0 = arith.constant 0 : i32
    %c0_i32_1 = arith.constant 0 : i32
    %c0_i32_2 = arith.constant 0 : i32
    return %c0_i32, %c0_i32_0, %c0_i32_1 : i32, i32, i32
  }
  func.func @transform_7(%arg0: i32, %arg1: i32) -> (i32, i32) {
    %c0_i32 = arith.constant 0 : i32
    %c0_i32_0 = arith.constant 0 : i32
    %c0_i32_1 = arith.constant 0 : i32
    return %c0_i32, %c0_i32_0 : i32, i32
  }
  func.func @transform_8(%arg0: i32, %arg1: i32) -> (i32, i32) {
    %c0_i32 = arith.constant 0 : i32
    %c0_i32_0 = arith.constant 0 : i32
    %c0_i32_1 = arith.constant 0 : i32
    return %c0_i32, %c0_i32_0 : i32, i32
  }
  func.func @transform_9(%arg0: i32, %arg1: i32) -> (i32, i32) {
    %c0_i32 = arith.constant 0 : i32
    %c0_i32_0 = arith.constant 0 : i32
    %c0_i32_1 = arith.constant 0 : i32
    return %c0_i32, %c0_i32_0 : i32, i32
  }
  func.func @transform_10(%arg0: i32, %arg1: i32) -> (i32, i32) {
    %c0_i32 = arith.constant 0 : i32
    %c0_i32_0 = arith.constant 0 : i32
    %c0_i32_1 = arith.constant 0 : i32
    return %c0_i32, %c0_i32_0 : i32, i32
  }
  func.func @transform_11(%arg0: i32, %arg1: i32) -> (i32, i32) {
    %c0_i32 = arith.constant 0 : i32
    %c0_i32_0 = arith.constant 0 : i32
    %c0_i32_1 = arith.constant 0 : i32
    return %c0_i32, %c0_i32_0 : i32, i32
  }
  func.func @transform_12(%arg0: i32, %arg1: i32) -> (i32, i32) {
    %c0_i32 = arith.constant 0 : i32
    %c0_i32_0 = arith.constant 0 : i32
    %c0_i32_1 = arith.constant 0 : i32
    return %c0_i32, %c0_i32_0 : i32, i32
  }
  func.func @transform_13(%arg0: i32, %arg1: i32) -> (i32, i32) {
    %c0_i32 = arith.constant 0 : i32
    %c0_i32_0 = arith.constant 0 : i32
    %c0_i32_1 = arith.constant 0 : i32
    return %c0_i32, %c0_i32_0 : i32, i32
  }
  func.func @transform_14(%arg0: i32, %arg1: i32) -> (i32, i32, i32) {
    %c0_i32 = arith.constant 0 : i32
    %c0_i32_0 = arith.constant 0 : i32
    return %arg0, %arg1, %c0_i32 : i32, i32, i32
  }
}

module attributes {stable_mosaic.version = 11 : i64} {
  func.func @transformer_block_kernel(%arg0: i32, %arg1: i32, %arg2: memref<1x8x32xf32, #tpu.memory_space<vmem>>, %arg3: memref<1x32xf32, #tpu.memory_space<vmem>>, %arg4: memref<1x32xf32, #tpu.memory_space<vmem>>, %arg5: memref<4x32x8xbf16, #tpu.memory_space<vmem>>, %arg6: memref<4x32x8xbf16, #tpu.memory_space<vmem>>, %arg7: memref<4x32x8xbf16, #tpu.memory_space<vmem>>, %arg8: memref<4x8x32xbf16, #tpu.memory_space<vmem>>, %arg9: memref<1x32xf32, #tpu.memory_space<vmem>>, %arg10: memref<1x32xf32, #tpu.memory_space<vmem>>, %arg11: memref<1x32xf32, #tpu.memory_space<vmem>>, %arg12: memref<32x128xbf16, #tpu.memory_space<vmem>>, %arg13: memref<1x128xf32, #tpu.memory_space<vmem>>, %arg14: memref<128x32xbf16, #tpu.memory_space<vmem>>, %arg15: memref<1x32xf32, #tpu.memory_space<vmem>>, %arg16: memref<1x8x32xf32, #tpu.memory_space<vmem>>, %arg17: memref<8x32xbf16, #tpu.memory_space<vmem>>, %arg18: memref<1x4x8x8xbf16, #tpu.memory_space<vmem>>, %arg19: memref<1x4x8x8xbf16, #tpu.memory_space<vmem>>) attributes {dimension_semantics = [#tpu.dimension_semantics<parallel>, #tpu.dimension_semantics<arbitrary>], iteration_bounds = array<i64: 2, 1>, scalar_prefetch = 0 : i64, scratch_operands = 3 : i64, tpu.core_type = #tpu.core_type<tc>, window_params = [{transform_indices = @transform_0, window_bounds = array<i64: 1, 8, 32>}, {pipeline_mode = #tpu.pipeline_mode<synchronous>, transform_indices = @transform_1, window_bounds = array<i64: 1, 32>}, {pipeline_mode = #tpu.pipeline_mode<synchronous>, transform_indices = @transform_2, window_bounds = array<i64: 1, 32>}, {pipeline_mode = #tpu.pipeline_mode<synchronous>, transform_indices = @transform_3, window_bounds = array<i64: 4, 32, 8>}, {pipeline_mode = #tpu.pipeline_mode<synchronous>, transform_indices = @transform_4, window_bounds = array<i64: 4, 32, 8>}, {pipeline_mode = #tpu.pipeline_mode<synchronous>, transform_indices = @transform_5, window_bounds = array<i64: 4, 32, 8>}, {pipeline_mode = #tpu.pipeline_mode<synchronous>, transform_indices = @transform_6, window_bounds = array<i64: 4, 8, 32>}, {pipeline_mode = #tpu.pipeline_mode<synchronous>, transform_indices = @transform_7, window_bounds = array<i64: 1, 32>}, {pipeline_mode = #tpu.pipeline_mode<synchronous>, transform_indices = @transform_8, window_bounds = array<i64: 1, 32>}, {pipeline_mode = #tpu.pipeline_mode<synchronous>, transform_indices = @transform_9, window_bounds = array<i64: 1, 32>}, {pipeline_mode = #tpu.pipeline_mode<synchronous>, transform_indices = @transform_10, window_bounds = array<i64: 32, 128>}, {pipeline_mode = #tpu.pipeline_mode<synchronous>, transform_indices = @transform_11, window_bounds = array<i64: 1, 128>}, {pipeline_mode = #tpu.pipeline_mode<synchronous>, transform_indices = @transform_12, window_bounds = array<i64: 128, 32>}, {pipeline_mode = #tpu.pipeline_mode<synchronous>, transform_indices = @transform_13, window_bounds = array<i64: 1, 32>}, {transform_indices = @transform_14, window_bounds = array<i64: 1, 8, 32>}]} {
    %c0_i32 = arith.constant 0 : i32
    %0 = arith.cmpi eq, %arg1, %c0_i32 : i32
    %1 = arith.extui %0 : i1 to i32
    %c0_i32_0 = arith.constant 0 : i32
    %2 = arith.cmpi ne, %1, %c0_i32_0 : i32
    scf.if %2 {
      %c0_64 = arith.constant 0 : index
      %c0_65 = arith.constant 0 : index
      %c0_66 = arith.constant 0 : index
      %126 = vector.load %arg2[%c0_64, %c0_65, %c0_66] : memref<1x8x32xf32, #tpu.memory_space<vmem>>, vector<1x8x32xf32>
      %127 = vector.shape_cast %126 : vector<1x8x32xf32> to vector<8x32xf32>
      %c0_67 = arith.constant 0 : index
      %c0_68 = arith.constant 0 : index
      %128 = vector.load %arg3[%c0_67, %c0_68] : memref<1x32xf32, #tpu.memory_space<vmem>>, vector<1x32xf32>
      %129 = vector.shape_cast %128 : vector<1x32xf32> to vector<32xf32>
      %c0_69 = arith.constant 0 : index
      %c0_70 = arith.constant 0 : index
      %130 = vector.load %arg4[%c0_69, %c0_70] : memref<1x32xf32, #tpu.memory_space<vmem>>, vector<1x32xf32>
      %131 = vector.shape_cast %130 : vector<1x32xf32> to vector<32xf32>
      %cst_71 = arith.constant dense<0.000000e+00> : vector<8xf32>
      %132 = vector.multi_reduction <add>, %127, %cst_71 [1] : vector<8x32xf32> to vector<8xf32>
      %133 = vector.shape_cast %132 : vector<8xf32> to vector<8x1xf32>
      %cst_72 = arith.constant 3.200000e+01 : f32
      %134 = vector.broadcast %cst_72 : f32 to vector<8x1xf32>
      %135 = arith.divf %133, %134 : vector<8x1xf32>
      %136 = vector.broadcast %135 : vector<8x1xf32> to vector<8x32xf32>
      %137 = arith.subf %127, %136 : vector<8x32xf32>
      %138 = arith.mulf %137, %137 : vector<8x32xf32>
      %cst_73 = arith.constant dense<0.000000e+00> : vector<8xf32>
      %139 = vector.multi_reduction <add>, %138, %cst_73 [1] : vector<8x32xf32> to vector<8xf32>
      %140 = vector.shape_cast %139 : vector<8xf32> to vector<8x1xf32>
      %cst_74 = arith.constant 3.200000e+01 : f32
      %141 = vector.broadcast %cst_74 : f32 to vector<8x1xf32>
      %142 = arith.divf %140, %141 : vector<8x1xf32>
      %143 = vector.broadcast %135 : vector<8x1xf32> to vector<8x32xf32>
      %144 = arith.subf %127, %143 : vector<8x32xf32>
      %cst_75 = arith.constant 9.99999974E-6 : f32
      %145 = vector.broadcast %cst_75 : f32 to vector<8x1xf32>
      %146 = arith.addf %142, %145 : vector<8x1xf32>
      %147 = math.rsqrt %146 : vector<8x1xf32>
      %148 = vector.broadcast %147 : vector<8x1xf32> to vector<8x32xf32>
      %149 = arith.mulf %144, %148 : vector<8x32xf32>
      %150 = vector.shape_cast %129 : vector<32xf32> to vector<1x32xf32>
      %151 = vector.broadcast %150 : vector<1x32xf32> to vector<8x32xf32>
      %152 = arith.mulf %149, %151 : vector<8x32xf32>
      %153 = vector.shape_cast %131 : vector<32xf32> to vector<1x32xf32>
      %154 = vector.broadcast %153 : vector<1x32xf32> to vector<8x32xf32>
      %155 = arith.addf %152, %154 : vector<8x32xf32>
      %156 = arith.truncf %155 : vector<8x32xf32> to vector<8x32xbf16>
      %c0_76 = arith.constant 0 : index
      %c0_77 = arith.constant 0 : index
      %157 = vector.load %arg17[%c0_76, %c0_77] : memref<8x32xbf16, #tpu.memory_space<vmem>>, vector<8x32xbf16>
      tpu.vector_store %arg17[%c0_76, %c0_77], %156 {strides = array<i32>} : memref<8x32xbf16, #tpu.memory_space<vmem>>, vector<8x32xbf16>,
      %c0_78 = arith.constant 0 : index
      %c0_79 = arith.constant 0 : index
      %c0_80 = arith.constant 0 : index
      %158 = vector.load %arg6[%c0_78, %c0_79, %c0_80] : memref<4x32x8xbf16, #tpu.memory_space<vmem>>, vector<1x32x8xbf16>
      %159 = vector.shape_cast %158 : vector<1x32x8xbf16> to vector<32x8xbf16>
      %cst_81 = arith.constant dense<0.000000e+00> : vector<8x8xf32>
      %160 = tpu.matmul %156, %159, %cst_81 {dimension_numbers = #tpu.dot_dimension_numbers<[1], [0], [0], [1], [0, 0, 1, 1], [], []>} : vector<8x32xbf16>, vector<32x8xbf16>, vector<8x8xf32> -> vector<8x8xf32>
      %c0_82 = arith.constant 0 : index
      %c0_83 = arith.constant 0 : index
      %c0_84 = arith.constant 0 : index
      %161 = vector.load %arg7[%c0_82, %c0_83, %c0_84] : memref<4x32x8xbf16, #tpu.memory_space<vmem>>, vector<1x32x8xbf16>
      %162 = vector.shape_cast %161 : vector<1x32x8xbf16> to vector<32x8xbf16>
      %cst_85 = arith.constant dense<0.000000e+00> : vector<8x8xf32>
      %163 = tpu.matmul %156, %162, %cst_85 {dimension_numbers = #tpu.dot_dimension_numbers<[1], [0], [0], [1], [0, 0, 1, 1], [], []>} : vector<8x32xbf16>, vector<32x8xbf16>, vector<8x8xf32> -> vector<8x8xf32>
      %164 = arith.truncf %160 : vector<8x8xf32> to vector<8x8xbf16>
      %c0_86 = arith.constant 0 : index
      %c0_87 = arith.constant 0 : index
      %c0_88 = arith.constant 0 : index
      %c0_89 = arith.constant 0 : index
      %165 = vector.load %arg18[%c0_86, %c0_87, %c0_88, %c0_89] : memref<1x4x8x8xbf16, #tpu.memory_space<vmem>>, vector<1x1x8x8xbf16>
      %166 = vector.shape_cast %165 : vector<1x1x8x8xbf16> to vector<8x8xbf16>
      %167 = vector.shape_cast %164 : vector<8x8xbf16> to vector<1x1x8x8xbf16>
      tpu.vector_store %arg18[%c0_86, %c0_87, %c0_88, %c0_89], %167 {strides = array<i32>} : memref<1x4x8x8xbf16, #tpu.memory_space<vmem>>, vector<1x1x8x8xbf16>,
      %168 = arith.truncf %163 : vector<8x8xf32> to vector<8x8xbf16>
      %c0_90 = arith.constant 0 : index
      %c0_91 = arith.constant 0 : index
      %c0_92 = arith.constant 0 : index
      %c0_93 = arith.constant 0 : index
      %169 = vector.load %arg19[%c0_90, %c0_91, %c0_92, %c0_93] : memref<1x4x8x8xbf16, #tpu.memory_space<vmem>>, vector<1x1x8x8xbf16>
      %170 = vector.shape_cast %169 : vector<1x1x8x8xbf16> to vector<8x8xbf16>
      %171 = vector.shape_cast %168 : vector<8x8xbf16> to vector<1x1x8x8xbf16>
      tpu.vector_store %arg19[%c0_90, %c0_91, %c0_92, %c0_93], %171 {strides = array<i32>} : memref<1x4x8x8xbf16, #tpu.memory_space<vmem>>, vector<1x1x8x8xbf16>,
      %c1_94 = arith.constant 1 : index
      %c0_95 = arith.constant 0 : index
      %c0_96 = arith.constant 0 : index
      %172 = vector.load %arg6[%c1_94, %c0_95, %c0_96] : memref<4x32x8xbf16, #tpu.memory_space<vmem>>, vector<1x32x8xbf16>
      %173 = vector.shape_cast %172 : vector<1x32x8xbf16> to vector<32x8xbf16>
      %cst_97 = arith.constant dense<0.000000e+00> : vector<8x8xf32>
      %174 = tpu.matmul %156, %173, %cst_97 {dimension_numbers = #tpu.dot_dimension_numbers<[1], [0], [0], [1], [0, 0, 1, 1], [], []>} : vector<8x32xbf16>, vector<32x8xbf16>, vector<8x8xf32> -> vector<8x8xf32>
      %c1_98 = arith.constant 1 : index
      %c0_99 = arith.constant 0 : index
      %c0_100 = arith.constant 0 : index
      %175 = vector.load %arg7[%c1_98, %c0_99, %c0_100] : memref<4x32x8xbf16, #tpu.memory_space<vmem>>, vector<1x32x8xbf16>
      %176 = vector.shape_cast %175 : vector<1x32x8xbf16> to vector<32x8xbf16>
      %cst_101 = arith.constant dense<0.000000e+00> : vector<8x8xf32>
      %177 = tpu.matmul %156, %176, %cst_101 {dimension_numbers = #tpu.dot_dimension_numbers<[1], [0], [0], [1], [0, 0, 1, 1], [], []>} : vector<8x32xbf16>, vector<32x8xbf16>, vector<8x8xf32> -> vector<8x8xf32>
      %178 = arith.truncf %174 : vector<8x8xf32> to vector<8x8xbf16>
      %c0_102 = arith.constant 0 : index
      %c1_103 = arith.constant 1 : index
      %c0_104 = arith.constant 0 : index
      %c0_105 = arith.constant 0 : index
      %179 = vector.load %arg18[%c0_102, %c1_103, %c0_104, %c0_105] : memref<1x4x8x8xbf16, #tpu.memory_space<vmem>>, vector<1x1x8x8xbf16>
      %180 = vector.shape_cast %179 : vector<1x1x8x8xbf16> to vector<8x8xbf16>
      %181 = vector.shape_cast %178 : vector<8x8xbf16> to vector<1x1x8x8xbf16>
      tpu.vector_store %arg18[%c0_102, %c1_103, %c0_104, %c0_105], %181 {strides = array<i32>} : memref<1x4x8x8xbf16, #tpu.memory_space<vmem>>, vector<1x1x8x8xbf16>,
      %182 = arith.truncf %177 : vector<8x8xf32> to vector<8x8xbf16>
      %c0_106 = arith.constant 0 : index
      %c1_107 = arith.constant 1 : index
      %c0_108 = arith.constant 0 : index
      %c0_109 = arith.constant 0 : index
      %183 = vector.load %arg19[%c0_106, %c1_107, %c0_108, %c0_109] : memref<1x4x8x8xbf16, #tpu.memory_space<vmem>>, vector<1x1x8x8xbf16>
      %184 = vector.shape_cast %183 : vector<1x1x8x8xbf16> to vector<8x8xbf16>
      %185 = vector.shape_cast %182 : vector<8x8xbf16> to vector<1x1x8x8xbf16>
      tpu.vector_store %arg19[%c0_106, %c1_107, %c0_108, %c0_109], %185 {strides = array<i32>} : memref<1x4x8x8xbf16, #tpu.memory_space<vmem>>, vector<1x1x8x8xbf16>,
      %c2_110 = arith.constant 2 : index
      %c0_111 = arith.constant 0 : index
      %c0_112 = arith.constant 0 : index
      %186 = vector.load %arg6[%c2_110, %c0_111, %c0_112] : memref<4x32x8xbf16, #tpu.memory_space<vmem>>, vector<1x32x8xbf16>
      %187 = vector.shape_cast %186 : vector<1x32x8xbf16> to vector<32x8xbf16>
      %cst_113 = arith.constant dense<0.000000e+00> : vector<8x8xf32>
      %188 = tpu.matmul %156, %187, %cst_113 {dimension_numbers = #tpu.dot_dimension_numbers<[1], [0], [0], [1], [0, 0, 1, 1], [], []>} : vector<8x32xbf16>, vector<32x8xbf16>, vector<8x8xf32> -> vector<8x8xf32>
      %c2_114 = arith.constant 2 : index
      %c0_115 = arith.constant 0 : index
      %c0_116 = arith.constant 0 : index
      %189 = vector.load %arg7[%c2_114, %c0_115, %c0_116] : memref<4x32x8xbf16, #tpu.memory_space<vmem>>, vector<1x32x8xbf16>
      %190 = vector.shape_cast %189 : vector<1x32x8xbf16> to vector<32x8xbf16>
      %cst_117 = arith.constant dense<0.000000e+00> : vector<8x8xf32>
      %191 = tpu.matmul %156, %190, %cst_117 {dimension_numbers = #tpu.dot_dimension_numbers<[1], [0], [0], [1], [0, 0, 1, 1], [], []>} : vector<8x32xbf16>, vector<32x8xbf16>, vector<8x8xf32> -> vector<8x8xf32>
      %192 = arith.truncf %188 : vector<8x8xf32> to vector<8x8xbf16>
      %c0_118 = arith.constant 0 : index
      %c2_119 = arith.constant 2 : index
      %c0_120 = arith.constant 0 : index
      %c0_121 = arith.constant 0 : index
      %193 = vector.load %arg18[%c0_118, %c2_119, %c0_120, %c0_121] : memref<1x4x8x8xbf16, #tpu.memory_space<vmem>>, vector<1x1x8x8xbf16>
      %194 = vector.shape_cast %193 : vector<1x1x8x8xbf16> to vector<8x8xbf16>
      %195 = vector.shape_cast %192 : vector<8x8xbf16> to vector<1x1x8x8xbf16>
      tpu.vector_store %arg18[%c0_118, %c2_119, %c0_120, %c0_121], %195 {strides = array<i32>} : memref<1x4x8x8xbf16, #tpu.memory_space<vmem>>, vector<1x1x8x8xbf16>,
      %196 = arith.truncf %191 : vector<8x8xf32> to vector<8x8xbf16>
      %c0_122 = arith.constant 0 : index
      %c2_123 = arith.constant 2 : index
      %c0_124 = arith.constant 0 : index
      %c0_125 = arith.constant 0 : index
      %197 = vector.load %arg19[%c0_122, %c2_123, %c0_124, %c0_125] : memref<1x4x8x8xbf16, #tpu.memory_space<vmem>>, vector<1x1x8x8xbf16>
      %198 = vector.shape_cast %197 : vector<1x1x8x8xbf16> to vector<8x8xbf16>
      %199 = vector.shape_cast %196 : vector<8x8xbf16> to vector<1x1x8x8xbf16>
      tpu.vector_store %arg19[%c0_122, %c2_123, %c0_124, %c0_125], %199 {strides = array<i32>} : memref<1x4x8x8xbf16, #tpu.memory_space<vmem>>, vector<1x1x8x8xbf16>,
      %c3_126 = arith.constant 3 : index
      %c0_127 = arith.constant 0 : index
      %c0_128 = arith.constant 0 : index
      %200 = vector.load %arg6[%c3_126, %c0_127, %c0_128] : memref<4x32x8xbf16, #tpu.memory_space<vmem>>, vector<1x32x8xbf16>
      %201 = vector.shape_cast %200 : vector<1x32x8xbf16> to vector<32x8xbf16>
      %cst_129 = arith.constant dense<0.000000e+00> : vector<8x8xf32>
      %202 = tpu.matmul %156, %201, %cst_129 {dimension_numbers = #tpu.dot_dimension_numbers<[1], [0], [0], [1], [0, 0, 1, 1], [], []>} : vector<8x32xbf16>, vector<32x8xbf16>, vector<8x8xf32> -> vector<8x8xf32>
      %c3_130 = arith.constant 3 : index
      %c0_131 = arith.constant 0 : index
      %c0_132 = arith.constant 0 : index
      %203 = vector.load %arg7[%c3_130, %c0_131, %c0_132] : memref<4x32x8xbf16, #tpu.memory_space<vmem>>, vector<1x32x8xbf16>
      %204 = vector.shape_cast %203 : vector<1x32x8xbf16> to vector<32x8xbf16>
      %cst_133 = arith.constant dense<0.000000e+00> : vector<8x8xf32>
      %205 = tpu.matmul %156, %204, %cst_133 {dimension_numbers = #tpu.dot_dimension_numbers<[1], [0], [0], [1], [0, 0, 1, 1], [], []>} : vector<8x32xbf16>, vector<32x8xbf16>, vector<8x8xf32> -> vector<8x8xf32>
      %206 = arith.truncf %202 : vector<8x8xf32> to vector<8x8xbf16>
      %c0_134 = arith.constant 0 : index
      %c3_135 = arith.constant 3 : index
      %c0_136 = arith.constant 0 : index
      %c0_137 = arith.constant 0 : index
      %207 = vector.load %arg18[%c0_134, %c3_135, %c0_136, %c0_137] : memref<1x4x8x8xbf16, #tpu.memory_space<vmem>>, vector<1x1x8x8xbf16>
      %208 = vector.shape_cast %207 : vector<1x1x8x8xbf16> to vector<8x8xbf16>
      %209 = vector.shape_cast %206 : vector<8x8xbf16> to vector<1x1x8x8xbf16>
      tpu.vector_store %arg18[%c0_134, %c3_135, %c0_136, %c0_137], %209 {strides = array<i32>} : memref<1x4x8x8xbf16, #tpu.memory_space<vmem>>, vector<1x1x8x8xbf16>,
      %210 = arith.truncf %205 : vector<8x8xf32> to vector<8x8xbf16>
      %c0_138 = arith.constant 0 : index
      %c3_139 = arith.constant 3 : index
      %c0_140 = arith.constant 0 : index
      %c0_141 = arith.constant 0 : index
      %211 = vector.load %arg19[%c0_138, %c3_139, %c0_140, %c0_141] : memref<1x4x8x8xbf16, #tpu.memory_space<vmem>>, vector<1x1x8x8xbf16>
      %212 = vector.shape_cast %211 : vector<1x1x8x8xbf16> to vector<8x8xbf16>
      %213 = vector.shape_cast %210 : vector<8x8xbf16> to vector<1x1x8x8xbf16>
      tpu.vector_store %arg19[%c0_138, %c3_139, %c0_140, %c0_141], %213 {strides = array<i32>} : memref<1x4x8x8xbf16, #tpu.memory_space<vmem>>, vector<1x1x8x8xbf16>,
    } else {
    }
    %c8_i32 = arith.constant 8 : i32
    %3 = arith.muli %arg1, %c8_i32 : i32
    %4 = tpu.assume_multiple %3, 8 : i32
    %c0 = arith.constant 0 : index
    %5 = arith.index_cast %4 : i32 to index
    %c0_1 = arith.constant 0 : index
    %6 = vector.load %arg2[%c0, %5, %c0_1] : memref<1x8x32xf32, #tpu.memory_space<vmem>>, vector<1x8x32xf32>
    %7 = vector.shape_cast %6 : vector<1x8x32xf32> to vector<8x32xf32>
    %8 = arith.index_cast %4 : i32 to index
    %c0_2 = arith.constant 0 : index
    %9 = vector.load %arg17[%8, %c0_2] : memref<8x32xbf16, #tpu.memory_space<vmem>>, vector<8x32xbf16>
    %c0_3 = arith.constant 0 : index
    %c0_4 = arith.constant 0 : index
    %c0_5 = arith.constant 0 : index
    %10 = vector.load %arg5[%c0_3, %c0_4, %c0_5] : memref<4x32x8xbf16, #tpu.memory_space<vmem>>, vector<1x32x8xbf16>
    %11 = vector.shape_cast %10 : vector<1x32x8xbf16> to vector<32x8xbf16>
    %cst = arith.constant dense<0.000000e+00> : vector<8x8xf32>
    %12 = tpu.matmul %9, %11, %cst {dimension_numbers = #tpu.dot_dimension_numbers<[1], [0], [0], [1], [0, 0, 1, 1], [], []>} : vector<8x32xbf16>, vector<32x8xbf16>, vector<8x8xf32> -> vector<8x8xf32>
    %c1 = arith.constant 1 : index
    %c0_6 = arith.constant 0 : index
    %c0_7 = arith.constant 0 : index
    %13 = vector.load %arg5[%c1, %c0_6, %c0_7] : memref<4x32x8xbf16, #tpu.memory_space<vmem>>, vector<1x32x8xbf16>
    %14 = vector.shape_cast %13 : vector<1x32x8xbf16> to vector<32x8xbf16>
    %cst_8 = arith.constant dense<0.000000e+00> : vector<8x8xf32>
    %15 = tpu.matmul %9, %14, %cst_8 {dimension_numbers = #tpu.dot_dimension_numbers<[1], [0], [0], [1], [0, 0, 1, 1], [], []>} : vector<8x32xbf16>, vector<32x8xbf16>, vector<8x8xf32> -> vector<8x8xf32>
    %c2 = arith.constant 2 : index
    %c0_9 = arith.constant 0 : index
    %c0_10 = arith.constant 0 : index
    %16 = vector.load %arg5[%c2, %c0_9, %c0_10] : memref<4x32x8xbf16, #tpu.memory_space<vmem>>, vector<1x32x8xbf16>
    %17 = vector.shape_cast %16 : vector<1x32x8xbf16> to vector<32x8xbf16>
    %cst_11 = arith.constant dense<0.000000e+00> : vector<8x8xf32>
    %18 = tpu.matmul %9, %17, %cst_11 {dimension_numbers = #tpu.dot_dimension_numbers<[1], [0], [0], [1], [0, 0, 1, 1], [], []>} : vector<8x32xbf16>, vector<32x8xbf16>, vector<8x8xf32> -> vector<8x8xf32>
    %c3 = arith.constant 3 : index
    %c0_12 = arith.constant 0 : index
    %c0_13 = arith.constant 0 : index
    %19 = vector.load %arg5[%c3, %c0_12, %c0_13] : memref<4x32x8xbf16, #tpu.memory_space<vmem>>, vector<1x32x8xbf16>
    %20 = vector.shape_cast %19 : vector<1x32x8xbf16> to vector<32x8xbf16>
    %cst_14 = arith.constant dense<0.000000e+00> : vector<8x8xf32>
    %21 = tpu.matmul %9, %20, %cst_14 {dimension_numbers = #tpu.dot_dimension_numbers<[1], [0], [0], [1], [0, 0, 1, 1], [], []>} : vector<8x32xbf16>, vector<32x8xbf16>, vector<8x8xf32> -> vector<8x8xf32>
    %22 = vector.shape_cast %12 : vector<8x8xf32> to vector<1x8x8xf32>
    %23 = vector.shape_cast %15 : vector<8x8xf32> to vector<1x8x8xf32>
    %24 = vector.shape_cast %18 : vector<8x8xf32> to vector<1x8x8xf32>
    %25 = vector.shape_cast %21 : vector<8x8xf32> to vector<1x8x8xf32>
    %26 = tpu.concatenate %22, %23, %24, %25 in 0 : vector<1x8x8xf32>, vector<1x8x8xf32>, vector<1x8x8xf32>, vector<1x8x8xf32> -> vector<4x8x8xf32>
    %27 = arith.truncf %26 : vector<4x8x8xf32> to vector<4x8x8xbf16>
    %cst_15 = arith.constant -1.000000e+30 : f32
    %28 = vector.broadcast %cst_15 : f32 to vector<4x8x1xf32>
    %cst_16 = arith.constant 0.000000e+00 : f32
    %29 = vector.broadcast %cst_16 : f32 to vector<4x8x1xf32>
    %cst_17 = arith.constant 0.000000e+00 : f32
    %30 = vector.broadcast %cst_17 : f32 to vector<4x8x8xf32>
    %c1_i32 = arith.constant 1 : i32
    %31 = arith.addi %arg1, %c1_i32 : i32
    %c0_i32_18 = arith.constant 0 : i32
    %32 = arith.subi %31, %c0_i32_18 : i32
    %33 = arith.addi %c0_i32_18, %32 : i32
    %c1_i32_19 = arith.constant 1 : i32
    %34:3 = scf.for %arg20 = %c0_i32_18 to %33 step %c1_i32_19 iter_args(%arg21 = %28, %arg22 = %29, %arg23 = %30) -> (vector<4x8x1xf32>, vector<4x8x1xf32>, vector<4x8x8xf32>)  : i32 {
      %126 = arith.index_cast %arg20 : i32 to index
      %c0_64 = arith.constant 0 : index
      %c0_65 = arith.constant 0 : index
      %c0_66 = arith.constant 0 : index
      %127 = vector.load %arg18[%126, %c0_64, %c0_65, %c0_66] : memref<1x4x8x8xbf16, #tpu.memory_space<vmem>>, vector<1x4x8x8xbf16>
      %128 = vector.shape_cast %127 : vector<1x4x8x8xbf16> to vector<4x8x8xbf16>
      %129 = arith.index_cast %arg20 : i32 to index
      %c0_67 = arith.constant 0 : index
      %c0_68 = arith.constant 0 : index
      %c0_69 = arith.constant 0 : index
      %130 = vector.load %arg19[%129, %c0_67, %c0_68, %c0_69] : memref<1x4x8x8xbf16, #tpu.memory_space<vmem>>, vector<1x4x8x8xbf16>
      %131 = vector.shape_cast %130 : vector<1x4x8x8xbf16> to vector<4x8x8xbf16>
      "tpu.trace_start"() <{level = 10 : i32, message = "hqd,hkd->hqk"}> : () -> ()
      %cst_70 = arith.constant dense<0.000000e+00> : vector<4x8x8xf32>
      %132 = tpu.matmul %27, %128, %cst_70 {dimension_numbers = #tpu.dot_dimension_numbers<[2], [2], [1], [1], [0, 0, 0, 1, 1, 1], [0], [0]>} : vector<4x8x8xbf16>, vector<4x8x8xbf16>, vector<4x8x8xf32> -> vector<4x8x8xf32>
      "tpu.trace_stop"() : () -> ()
      %133 = tpu.iota {dimensions = array<i32: 0>} : vector<8x8xi32>
      %134 = vector.broadcast %4 : i32 to vector<8x8xi32>
      %135 = arith.addi %134, %133 : vector<8x8xi32>
      %c8_i32_71 = arith.constant 8 : i32
      %136 = arith.muli %arg20, %c8_i32_71 : i32
      %137 = tpu.iota {dimensions = array<i32: 1>} : vector<8x8xi32>
      %138 = vector.broadcast %136 : i32 to vector<8x8xi32>
      %139 = arith.addi %138, %137 : vector<8x8xi32>
      %140 = arith.cmpi sgt, %139, %135 : vector<8x8xi32>
      %cst_72 = arith.constant -1.000000e+30 : f32
      %cst_73 = arith.constant 0.000000e+00 : f32
      %141 = vector.broadcast %cst_72 : f32 to vector<8x8xf32>
      %142 = vector.broadcast %cst_73 : f32 to vector<8x8xf32>
      %143 = arith.select %140, %141, %142 : vector<8x8xi1>, vector<8x8xf32>
      %144 = vector.shape_cast %143 : vector<8x8xf32> to vector<1x8x8xf32>
      %145 = vector.broadcast %144 : vector<1x8x8xf32> to vector<4x8x8xf32>
      %146 = arith.addf %132, %145 : vector<4x8x8xf32>
      %cst_74 = arith.constant dense<0xFF800000> : vector<4x8xf32>
      %147 = vector.multi_reduction <maximumf>, %146, %cst_74 [2] : vector<4x8x8xf32> to vector<4x8xf32>
      %148 = vector.shape_cast %147 : vector<4x8xf32> to vector<4x8x1xf32>
      %149 = arith.maximumf %arg21, %148 : vector<4x8x1xf32>
      %150 = arith.subf %arg21, %149 : vector<4x8x1xf32>
      %151 = math.exp %150 : vector<4x8x1xf32>
      %152 = vector.broadcast %149 : vector<4x8x1xf32> to vector<4x8x8xf32>
      %153 = arith.subf %146, %152 : vector<4x8x8xf32>
      %154 = math.exp %153 : vector<4x8x8xf32>
      %155 = arith.mulf %151, %arg22 : vector<4x8x1xf32>
      %cst_75 = arith.constant dense<0.000000e+00> : vector<4x8xf32>
      %156 = vector.multi_reduction <add>, %154, %cst_75 [2] : vector<4x8x8xf32> to vector<4x8xf32>
      %157 = vector.shape_cast %156 : vector<4x8xf32> to vector<4x8x1xf32>
      %158 = arith.addf %155, %157 : vector<4x8x1xf32>
      %159 = vector.broadcast %151 : vector<4x8x1xf32> to vector<4x8x8xf32>
      %160 = arith.mulf %159, %arg23 : vector<4x8x8xf32>
      %161 = arith.truncf %154 : vector<4x8x8xf32> to vector<4x8x8xbf16>
      "tpu.trace_start"() <{level = 10 : i32, message = "hqk,hkd->hqd"}> : () -> ()
      %cst_76 = arith.constant dense<0.000000e+00> : vector<4x8x8xf32>
      %162 = tpu.matmul %161, %131, %cst_76 {dimension_numbers = #tpu.dot_dimension_numbers<[2], [1], [1], [2], [0, 0, 0, 1, 1, 2], [0], [0]>} : vector<4x8x8xbf16>, vector<4x8x8xbf16>, vector<4x8x8xf32> -> vector<4x8x8xf32>
      "tpu.trace_stop"() : () -> ()
      %163 = arith.addf %160, %162 : vector<4x8x8xf32>
      scf.yield %149, %158, %163 : vector<4x8x1xf32>, vector<4x8x1xf32>, vector<4x8x8xf32>
    }
    %35 = tpu.reciprocal %34#1 {approx = true} : vector<4x8x1xf32> -> vector<4x8x1xf32>
    %36 = vector.broadcast %35 : vector<4x8x1xf32> to vector<4x8x8xf32>
    %37 = arith.mulf %34#2, %36 : vector<4x8x8xf32>
    %38 = arith.truncf %37 : vector<4x8x8xf32> to vector<4x8x8xbf16>
    %cst_20 = arith.constant 0.000000e+00 : f32
    %39 = vector.broadcast %cst_20 : f32 to vector<8x32xf32>
    %40 = vector.extract_strided_slice %38 {offsets = [0, 0, 0], sizes = [1, 8, 8], strides = [1, 1, 1]} : vector<4x8x8xbf16> to vector<1x8x8xbf16>
    %41 = vector.shape_cast %40 : vector<1x8x8xbf16> to vector<8x8xbf16>
    %c0_21 = arith.constant 0 : index
    %c0_22 = arith.constant 0 : index
    %c0_23 = arith.constant 0 : index
    %42 = vector.load %arg8[%c0_21, %c0_22, %c0_23] : memref<4x8x32xbf16, #tpu.memory_space<vmem>>, vector<1x8x32xbf16>
    %43 = vector.shape_cast %42 : vector<1x8x32xbf16> to vector<8x32xbf16>
    %cst_24 = arith.constant dense<0.000000e+00> : vector<8x32xf32>
    %44 = tpu.matmul %41, %43, %cst_24 {dimension_numbers = #tpu.dot_dimension_numbers<[1], [0], [0], [1], [0, 0, 1, 1], [], []>} : vector<8x8xbf16>, vector<8x32xbf16>, vector<8x32xf32> -> vector<8x32xf32>
    %45 = arith.addf %39, %44 : vector<8x32xf32>
    %46 = vector.extract_strided_slice %38 {offsets = [1, 0, 0], sizes = [1, 8, 8], strides = [1, 1, 1]} : vector<4x8x8xbf16> to vector<1x8x8xbf16>
    %47 = vector.shape_cast %46 : vector<1x8x8xbf16> to vector<8x8xbf16>
    %c1_25 = arith.constant 1 : index
    %c0_26 = arith.constant 0 : index
    %c0_27 = arith.constant 0 : index
    %48 = vector.load %arg8[%c1_25, %c0_26, %c0_27] : memref<4x8x32xbf16, #tpu.memory_space<vmem>>, vector<1x8x32xbf16>
    %49 = vector.shape_cast %48 : vector<1x8x32xbf16> to vector<8x32xbf16>
    %cst_28 = arith.constant dense<0.000000e+00> : vector<8x32xf32>
    %50 = tpu.matmul %47, %49, %cst_28 {dimension_numbers = #tpu.dot_dimension_numbers<[1], [0], [0], [1], [0, 0, 1, 1], [], []>} : vector<8x8xbf16>, vector<8x32xbf16>, vector<8x32xf32> -> vector<8x32xf32>
    %51 = arith.addf %45, %50 : vector<8x32xf32>
    %52 = vector.extract_strided_slice %38 {offsets = [2, 0, 0], sizes = [1, 8, 8], strides = [1, 1, 1]} : vector<4x8x8xbf16> to vector<1x8x8xbf16>
    %53 = vector.shape_cast %52 : vector<1x8x8xbf16> to vector<8x8xbf16>
    %c2_29 = arith.constant 2 : index
    %c0_30 = arith.constant 0 : index
    %c0_31 = arith.constant 0 : index
    %54 = vector.load %arg8[%c2_29, %c0_30, %c0_31] : memref<4x8x32xbf16, #tpu.memory_space<vmem>>, vector<1x8x32xbf16>
    %55 = vector.shape_cast %54 : vector<1x8x32xbf16> to vector<8x32xbf16>
    %cst_32 = arith.constant dense<0.000000e+00> : vector<8x32xf32>
    %56 = tpu.matmul %53, %55, %cst_32 {dimension_numbers = #tpu.dot_dimension_numbers<[1], [0], [0], [1], [0, 0, 1, 1], [], []>} : vector<8x8xbf16>, vector<8x32xbf16>, vector<8x32xf32> -> vector<8x32xf32>
    %57 = arith.addf %51, %56 : vector<8x32xf32>
    %58 = vector.extract_strided_slice %38 {offsets = [3, 0, 0], sizes = [1, 8, 8], strides = [1, 1, 1]} : vector<4x8x8xbf16> to vector<1x8x8xbf16>
    %59 = vector.shape_cast %58 : vector<1x8x8xbf16> to vector<8x8xbf16>
    %c3_33 = arith.constant 3 : index
    %c0_34 = arith.constant 0 : index
    %c0_35 = arith.constant 0 : index
    %60 = vector.load %arg8[%c3_33, %c0_34, %c0_35] : memref<4x8x32xbf16, #tpu.memory_space<vmem>>, vector<1x8x32xbf16>
    %61 = vector.shape_cast %60 : vector<1x8x32xbf16> to vector<8x32xbf16>
    %cst_36 = arith.constant dense<0.000000e+00> : vector<8x32xf32>
    %62 = tpu.matmul %59, %61, %cst_36 {dimension_numbers = #tpu.dot_dimension_numbers<[1], [0], [0], [1], [0, 0, 1, 1], [], []>} : vector<8x8xbf16>, vector<8x32xbf16>, vector<8x32xf32> -> vector<8x32xf32>
    %63 = arith.addf %57, %62 : vector<8x32xf32>
    %c0_37 = arith.constant 0 : index
    %c0_38 = arith.constant 0 : index
    %64 = vector.load %arg9[%c0_37, %c0_38] : memref<1x32xf32, #tpu.memory_space<vmem>>, vector<1x32xf32>
    %65 = vector.shape_cast %64 : vector<1x32xf32> to vector<32xf32>
    %66 = vector.shape_cast %65 : vector<32xf32> to vector<1x32xf32>
    %67 = vector.broadcast %66 : vector<1x32xf32> to vector<8x32xf32>
    %68 = arith.addf %63, %67 : vector<8x32xf32>
    %69 = arith.addf %7, %68 : vector<8x32xf32>
    %c0_39 = arith.constant 0 : index
    %c0_40 = arith.constant 0 : index
    %70 = vector.load %arg10[%c0_39, %c0_40] : memref<1x32xf32, #tpu.memory_space<vmem>>, vector<1x32xf32>
    %71 = vector.shape_cast %70 : vector<1x32xf32> to vector<32xf32>
    %c0_41 = arith.constant 0 : index
    %c0_42 = arith.constant 0 : index
    %72 = vector.load %arg11[%c0_41, %c0_42] : memref<1x32xf32, #tpu.memory_space<vmem>>, vector<1x32xf32>
    %73 = vector.shape_cast %72 : vector<1x32xf32> to vector<32xf32>
    %cst_43 = arith.constant dense<0.000000e+00> : vector<8xf32>
    %74 = vector.multi_reduction <add>, %69, %cst_43 [1] : vector<8x32xf32> to vector<8xf32>
    %75 = vector.shape_cast %74 : vector<8xf32> to vector<8x1xf32>
    %cst_44 = arith.constant 3.200000e+01 : f32
    %76 = vector.broadcast %cst_44 : f32 to vector<8x1xf32>
    %77 = arith.divf %75, %76 : vector<8x1xf32>
    %78 = vector.broadcast %77 : vector<8x1xf32> to vector<8x32xf32>
    %79 = arith.subf %69, %78 : vector<8x32xf32>
    %80 = arith.mulf %79, %79 : vector<8x32xf32>
    %cst_45 = arith.constant dense<0.000000e+00> : vector<8xf32>
    %81 = vector.multi_reduction <add>, %80, %cst_45 [1] : vector<8x32xf32> to vector<8xf32>
    %82 = vector.shape_cast %81 : vector<8xf32> to vector<8x1xf32>
    %cst_46 = arith.constant 3.200000e+01 : f32
    %83 = vector.broadcast %cst_46 : f32 to vector<8x1xf32>
    %84 = arith.divf %82, %83 : vector<8x1xf32>
    %85 = vector.broadcast %77 : vector<8x1xf32> to vector<8x32xf32>
    %86 = arith.subf %69, %85 : vector<8x32xf32>
    %cst_47 = arith.constant 9.99999974E-6 : f32
    %87 = vector.broadcast %cst_47 : f32 to vector<8x1xf32>
    %88 = arith.addf %84, %87 : vector<8x1xf32>
    %89 = math.rsqrt %88 : vector<8x1xf32>
    %90 = vector.broadcast %89 : vector<8x1xf32> to vector<8x32xf32>
    %91 = arith.mulf %86, %90 : vector<8x32xf32>
    %92 = vector.shape_cast %71 : vector<32xf32> to vector<1x32xf32>
    %93 = vector.broadcast %92 : vector<1x32xf32> to vector<8x32xf32>
    %94 = arith.mulf %91, %93 : vector<8x32xf32>
    %95 = vector.shape_cast %73 : vector<32xf32> to vector<1x32xf32>
    %96 = vector.broadcast %95 : vector<1x32xf32> to vector<8x32xf32>
    %97 = arith.addf %94, %96 : vector<8x32xf32>
    %98 = arith.truncf %97 : vector<8x32xf32> to vector<8x32xbf16>
    %c0_48 = arith.constant 0 : index
    %c0_49 = arith.constant 0 : index
    %99 = vector.load %arg12[%c0_48, %c0_49] : memref<32x128xbf16, #tpu.memory_space<vmem>>, vector<32x128xbf16>
    %cst_50 = arith.constant dense<0.000000e+00> : vector<8x128xf32>
    %100 = tpu.matmul %98, %99, %cst_50 {dimension_numbers = #tpu.dot_dimension_numbers<[1], [0], [0], [1], [0, 0, 1, 1], [], []>} : vector<8x32xbf16>, vector<32x128xbf16>, vector<8x128xf32> -> vector<8x128xf32>
    %c0_51 = arith.constant 0 : index
    %c0_52 = arith.constant 0 : index
    %101 = vector.load %arg13[%c0_51, %c0_52] : memref<1x128xf32, #tpu.memory_space<vmem>>, vector<1x128xf32>
    %102 = vector.shape_cast %101 : vector<1x128xf32> to vector<128xf32>
    %103 = vector.shape_cast %102 : vector<128xf32> to vector<1x128xf32>
    %104 = vector.broadcast %103 : vector<1x128xf32> to vector<8x128xf32>
    %105 = arith.addf %100, %104 : vector<8x128xf32>
    %cst_53 = arith.constant 5.000000e-01 : f32
    %106 = vector.broadcast %cst_53 : f32 to vector<8x128xf32>
    %107 = arith.mulf %106, %105 : vector<8x128xf32>
    %cst_54 = arith.constant 0.707106769 : f32
    %108 = vector.broadcast %cst_54 : f32 to vector<8x128xf32>
    %109 = arith.mulf %105, %108 : vector<8x128xf32>
    %110 = math.erf %109 : vector<8x128xf32>
    %cst_55 = arith.constant 1.000000e+00 : f32
    %111 = vector.broadcast %cst_55 : f32 to vector<8x128xf32>
    %112 = arith.addf %111, %110 : vector<8x128xf32>
    %113 = arith.mulf %107, %112 : vector<8x128xf32>
    %114 = arith.truncf %113 : vector<8x128xf32> to vector<8x128xbf16>
    %c0_56 = arith.constant 0 : index
    %c0_57 = arith.constant 0 : index
    %115 = vector.load %arg14[%c0_56, %c0_57] : memref<128x32xbf16, #tpu.memory_space<vmem>>, vector<128x32xbf16>
    %cst_58 = arith.constant dense<0.000000e+00> : vector<8x32xf32>
    %116 = tpu.matmul %114, %115, %cst_58 {dimension_numbers = #tpu.dot_dimension_numbers<[1], [0], [0], [1], [0, 0, 1, 1], [], []>} : vector<8x128xbf16>, vector<128x32xbf16>, vector<8x32xf32> -> vector<8x32xf32>
    %c0_59 = arith.constant 0 : index
    %c0_60 = arith.constant 0 : index
    %117 = vector.load %arg15[%c0_59, %c0_60] : memref<1x32xf32, #tpu.memory_space<vmem>>, vector<1x32xf32>
    %118 = vector.shape_cast %117 : vector<1x32xf32> to vector<32xf32>
    %119 = vector.shape_cast %118 : vector<32xf32> to vector<1x32xf32>
    %120 = vector.broadcast %119 : vector<1x32xf32> to vector<8x32xf32>
    %121 = arith.addf %116, %120 : vector<8x32xf32>
    %122 = arith.addf %69, %121 : vector<8x32xf32>
    %c0_61 = arith.constant 0 : index
    %c0_62 = arith.constant 0 : index
    %c0_63 = arith.constant 0 : index
    %123 = vector.load %arg16[%c0_61, %c0_62, %c0_63] : memref<1x8x32xf32, #tpu.memory_space<vmem>>, vector<1x8x32xf32>
    %124 = vector.shape_cast %123 : vector<1x8x32xf32> to vector<8x32xf32>
    %125 = vector.shape_cast %122 : vector<8x32xf32> to vector<1x8x32xf32>
    tpu.vector_store %arg16[%c0_61, %c0_62, %c0_63], %125 {strides = array<i32>} : memref<1x8x32xf32, #tpu.memory_space<vmem>>, vector<1x8x32xf32>,
    return
  }
  func.func @transform_0(%arg0: i32, %arg1: i32) -> (i32, i32, i32) {
    %c0_i32 = arith.constant 0 : i32
    %c0_i32_0 = arith.constant 0 : i32
    %c0_i32_1 = arith.constant 0 : i32
    return %arg0, %c0_i32, %c0_i32_0 : i32, i32, i32
  }
  func.func @transform_1(%arg0: i32, %arg1: i32) -> (i32, i32) {
    %c0_i32 = arith.constant 0 : i32
    %c0_i32_0 = arith.constant 0 : i32
    %c0_i32_1 = arith.constant 0 : i32
    return %c0_i32, %c0_i32_0 : i32, i32
  }
  func.func @transform_2(%arg0: i32, %arg1: i32) -> (i32, i32) {
    %c0_i32 = arith.constant 0 : i32
    %c0_i32_0 = arith.constant 0 : i32
    %c0_i32_1 = arith.constant 0 : i32
    return %c0_i32, %c0_i32_0 : i32, i32
  }
  func.func @transform_3(%arg0: i32, %arg1: i32) -> (i32, i32, i32) {
    %c0_i32 = arith.constant 0 : i32
    %c0_i32_0 = arith.constant 0 : i32
    %c0_i32_1 = arith.constant 0 : i32
    %c0_i32_2 = arith.constant 0 : i32
    return %c0_i32, %c0_i32_0, %c0_i32_1 : i32, i32, i32
  }
  func.func @transform_4(%arg0: i32, %arg1: i32) -> (i32, i32, i32) {
    %c0_i32 = arith.constant 0 : i32
    %c0_i32_0 = arith.constant 0 : i32
    %c0_i32_1 = arith.constant 0 : i32
    %c0_i32_2 = arith.constant 0 : i32
    return %c0_i32, %c0_i32_0, %c0_i32_1 : i32, i32, i32
  }
  func.func @transform_5(%arg0: i32, %arg1: i32) -> (i32, i32, i32) {
    %c0_i32 = arith.constant 0 : i32
    %c0_i32_0 = arith.constant 0 : i32
    %c0_i32_1 = arith.constant 0 : i32
    %c0_i32_2 = arith.constant 0 : i32
    return %c0_i32, %c0_i32_0, %c0_i32_1 : i32, i32, i32
  }
  func.func @transform_6(%arg0: i32, %arg1: i32) -> (i32, i32, i32) {
    %c0_i32 = arith.constant 0 : i32
    %c0_i32_0 = arith.constant 0 : i32
    %c0_i32_1 = arith.constant 0 : i32
    %c0_i32_2 = arith.constant 0 : i32
    return %c0_i32, %c0_i32_0, %c0_i32_1 : i32, i32, i32
  }
  func.func @transform_7(%arg0: i32, %arg1: i32) -> (i32, i32) {
    %c0_i32 = arith.constant 0 : i32
    %c0_i32_0 = arith.constant 0 : i32
    %c0_i32_1 = arith.constant 0 : i32
    return %c0_i32, %c0_i32_0 : i32, i32
  }
  func.func @transform_8(%arg0: i32, %arg1: i32) -> (i32, i32) {
    %c0_i32 = arith.constant 0 : i32
    %c0_i32_0 = arith.constant 0 : i32
    %c0_i32_1 = arith.constant 0 : i32
    return %c0_i32, %c0_i32_0 : i32, i32
  }
  func.func @transform_9(%arg0: i32, %arg1: i32) -> (i32, i32) {
    %c0_i32 = arith.constant 0 : i32
    %c0_i32_0 = arith.constant 0 : i32
    %c0_i32_1 = arith.constant 0 : i32
    return %c0_i32, %c0_i32_0 : i32, i32
  }
  func.func @transform_10(%arg0: i32, %arg1: i32) -> (i32, i32) {
    %c0_i32 = arith.constant 0 : i32
    %c0_i32_0 = arith.constant 0 : i32
    %c0_i32_1 = arith.constant 0 : i32
    return %c0_i32, %c0_i32_0 : i32, i32
  }
  func.func @transform_11(%arg0: i32, %arg1: i32) -> (i32, i32) {
    %c0_i32 = arith.constant 0 : i32
    %c0_i32_0 = arith.constant 0 : i32
    %c0_i32_1 = arith.constant 0 : i32
    return %c0_i32, %c0_i32_0 : i32, i32
  }
  func.func @transform_12(%arg0: i32, %arg1: i32) -> (i32, i32) {
    %c0_i32 = arith.constant 0 : i32
    %c0_i32_0 = arith.constant 0 : i32
    %c0_i32_1 = arith.constant 0 : i32
    return %c0_i32, %c0_i32_0 : i32, i32
  }
  func.func @transform_13(%arg0: i32, %arg1: i32) -> (i32, i32) {
    %c0_i32 = arith.constant 0 : i32
    %c0_i32_0 = arith.constant 0 : i32
    %c0_i32_1 = arith.constant 0 : i32
    return %c0_i32, %c0_i32_0 : i32, i32
  }
  func.func @transform_14(%arg0: i32, %arg1: i32) -> (i32, i32, i32) {
    %c0_i32 = arith.constant 0 : i32
    %c0_i32_0 = arith.constant 0 : i32
    return %arg0, %arg1, %c0_i32 : i32, i32, i32
  }
}

</mosaic_0001>

<llo_original>
// kernel: tpu_custom_call.1
$region0: #{tpu_custom_call.1}
  #allocation0 [shape = 'u32[]', space=smem, size = 0x4, offset = 0x4, fixed_abs, tag = 'smem constant byte address 0x4 - core index']
  #allocation1 [shape = 'u32[144,128]{1,0:T(1,128)}', space=vmem, size = 0x12000, scoped, tag = 'internal scratch']
  #allocation2 [shape = 'bf16[8,32]{1,0:T(8,128)(2,1)}', space=vmem, size = 0x800, scoped, tag = 'scratch operand']
  #allocation3 [shape = 'bf16[1,4,8,8]{3,2,1,0:T(8,128)(2,1)}', space=vmem, size = 0x2000, scoped, tag = 'scratch operand']
  #allocation4 [shape = 'bf16[1,4,8,8]{3,2,1,0:T(8,128)(2,1)}', space=vmem, size = 0x2000, scoped, tag = 'scratch operand']
  %s0 = inlined_call_operand.vmem [shape: f32[2,8,32], index: 0, kind: input, shape index: {}]
  %s1 = inlined_call_operand.vmem [shape: f32[1,32], index: 1, kind: input, shape index: {}]
  %s2 = inlined_call_operand.vmem [shape: f32[1,32], index: 2, kind: input, shape index: {}]
  %s3 = inlined_call_operand.vmem [shape: bf16[4,32,8], index: 3, kind: input, shape index: {}]
  %s4 = inlined_call_operand.vmem [shape: bf16[4,32,8], index: 4, kind: input, shape index: {}]
  %s5 = inlined_call_operand.vmem [shape: bf16[4,32,8], index: 5, kind: input, shape index: {}]
  %s6 = inlined_call_operand.vmem [shape: bf16[4,8,32], index: 6, kind: input, shape index: {}]
  %s7 = inlined_call_operand.vmem [shape: f32[1,32], index: 7, kind: input, shape index: {}]
  %s8 = inlined_call_operand.vmem [shape: f32[1,32], index: 8, kind: input, shape index: {}]
  %s9 = inlined_call_operand.vmem [shape: f32[1,32], index: 9, kind: input, shape index: {}]
  %s10 = inlined_call_operand.vmem [shape: bf16[32,128], index: 10, kind: input, shape index: {}]
  %s11 = inlined_call_operand.vmem [shape: f32[1,128], index: 11, kind: input, shape index: {}]
  %s12 = inlined_call_operand.vmem [shape: bf16[128,32], index: 12, kind: input, shape index: {}]
  %s13 = inlined_call_operand.vmem [shape: f32[1,32], index: 13, kind: input, shape index: {}]
  %s14 = inlined_call_operand.hbm [shape: f32[2,8,32], index: 14, kind: output, shape index: {}]
  %s15 = sld [smem:[#allocation0]]
  $region100: #{tpu_custom_call.1} parent=0
    _
  %s17 = ssub.s32 1, %s15
  %s18 = scalar_select 0, %s17, %s15
  $region1: #{tpu_custom_call.1} parent=0
    #allocation5 [shape = 'u8[8192]{0}', space=vmem, size = 0x2000, scoped, tag = 'output window, operand 0']
    #allocation6 [shape = 's32[2]{0}', space=sflag, size = 0x8, scoped, tag = 'scoped memory for tpu_custom_call.1']
    %19 = vsyncpa [#allocation6], 0
    %s20 = scalar_lea.sflag [#allocation6], 1
    %21 = vsyncpa %s20, 0
    loop: start=0, step=1, limit=4
    $region2: #{tpu_custom_call.1} parent=1 // loop_pre_header
      _
    $region3: #{tpu_custom_call.1} parent=1 // loop_header
      %s23 = sphi 0, %s27
      %p24 = scmp.ge.s32.totalorder %s23, 4
      %s30 = sphi 0, %s42
      %s31 = sphi 0, %s38
      %s32 = sphi 0, %s30
      %s33 = sphi 0, %s31
      %s34 = sphi 0, %s32
      %s35 = sphi 0, %s33
      %s45 = sphi 0, %s47
      %s48 = sphi 0, %s45
      %s49 = sphi 0, %s48
      %s65 = sphi 0, %s49
      %s69 = sphi 0, %s69
      %s71 = sphi 0, %s69
      %s72 = sphi 0, %s71
      %s86 = sphi 0, %s72
      %s90 = sphi 0, %s90
      %s92 = sphi 0, %s90
      %s93 = sphi 0, %s92
      %s107 = sphi 0, %s93
      %s111 = sphi 0, %s111
      %s113 = sphi 0, %s111
      %s114 = sphi 0, %s113
      %s128 = sphi 0, %s114
      %s132 = sphi 0, %s132
      %s134 = sphi 0, %s132
      %s135 = sphi 0, %s134
      %s149 = sphi 0, %s135
      %s153 = sphi 0, %s153
      %s155 = sphi 0, %s153
      %s156 = sphi 0, %s155
      %s170 = sphi 0, %s156
      %s174 = sphi 0, %s174
      %s176 = sphi 0, %s174
      %s177 = sphi 0, %s176
      %s191 = sphi 0, %s177
      %s195 = sphi 0, %s195
      %s197 = sphi 0, %s195
      %s198 = sphi 0, %s197
      %s212 = sphi 0, %s198
      %s216 = sphi 0, %s216
      %s218 = sphi 0, %s216
      %s219 = sphi 0, %s218
      %s233 = sphi 0, %s219
      %s237 = sphi 0, %s237
      %s239 = sphi 0, %s237
      %s240 = sphi 0, %s239
      %s254 = sphi 0, %s240
      %s258 = sphi 0, %s258
      %s260 = sphi 0, %s258
      %s261 = sphi 0, %s260
      %s275 = sphi 0, %s261
      %s279 = sphi 0, %s279
      %s281 = sphi 0, %s279
      %s282 = sphi 0, %s281
      %s296 = sphi 0, %s282
      %s300 = sphi 0, %s300
      %s302 = sphi 0, %s300
      %s303 = sphi 0, %s302
      %s317 = sphi 0, %s303
      %s321 = sphi 0, %s321
      %s323 = sphi 0, %s321
      %s324 = sphi 0, %s323
      %s338 = sphi 0, %s324
      %s346 = sphi 0, %s348
      %s349 = sphi 0, %s346
      %s350 = sphi 0, %s349
      %s366 = sphi 0, %s350
    $region4: #{tpu_custom_call.1} parent=1 // loop_header_branch
      %26 = sbr.rel (%p24) target = $region8
    $region5: #{tpu_custom_call.1} parent=1 // loop_body
      %s28 = ssub.s32 %s23, 1
      %s29 = ssub.s32 %s23, 2
      %s36 = sadd.s32 1, %s31
      %p37 = scmp.ge.s32.totalorder %s36, 1
      %s38 = scalar_select %p37, 0, %s36
      %s39 = sadd.s32 1, %s30
      %s40 = scalar_select %p37, %s39, %s30
      %p41 = scmp.ge.s32.totalorder %s40, 2
      %s42 = scalar_select %p41, 0, %s40
      %s43 = ssub.s32 %s30, %s42
      %p44 = scmp.eq.s32.totalorder %s43, 0
      %s46 = sadd.s32 %s45, 1
      %s47 = scalar_select %p44, %s45, %s46
      %p50 = pneg %p44
      %p51 = scmp.eq.s32.totalorder %s23, 1
      %p52 = por %p50, %p51
      %p53 = scmp.ne.s32.totalorder %s45, %s48
      %p54 = scmp.eq.s32.totalorder %s23, 0
      %p55 = por %p53, %p54
      %p56 = scmp.ne.s32.totalorder %s45, %s48
      %p57 = scmp.eq.s32.totalorder %s28, 1
      %p58 = por %p56, %p57
      %p59 = scmp.ne.s32.totalorder %s48, %s49
      %p60 = scmp.eq.s32.totalorder %s28, 0
      %p61 = por %p59, %p60
      %p62 = scmp.ne.s32.totalorder %s48, %s49
      %p63 = scmp.eq.s32.totalorder %s29, 1
      %p64 = por %p62, %p63
      %p66 = scmp.ne.s32.totalorder %s49, %s65
      %p67 = scmp.eq.s32.totalorder %s29, 0
      %p68 = por %p66, %p67
      %s70 = sadd.s32 %s69, 1
      %p73 = scmp.eq.s32.totalorder %s23, 1
      %p74 = scmp.ne.s32.totalorder %s69, %s71
      %p75 = scmp.eq.s32.totalorder %s23, 0
      %p76 = por %p74, %p75
      %p77 = scmp.ne.s32.totalorder %s69, %s71
      %p78 = scmp.eq.s32.totalorder %s28, 1
      %p79 = por %p77, %p78
      %p80 = scmp.ne.s32.totalorder %s71, %s72
      %p81 = scmp.eq.s32.totalorder %s28, 0
      %p82 = por %p80, %p81
      %p83 = scmp.ne.s32.totalorder %s71, %s72
      %p84 = scmp.eq.s32.totalorder %s29, 1
      %p85 = por %p83, %p84
      %p87 = scmp.ne.s32.totalorder %s72, %s86
      %p88 = scmp.eq.s32.totalorder %s29, 0
      %p89 = por %p87, %p88
      %s91 = sadd.s32 %s90, 1
      %p94 = scmp.eq.s32.totalorder %s23, 1
      %p95 = scmp.ne.s32.totalorder %s90, %s92
      %p96 = scmp.eq.s32.totalorder %s23, 0
      %p97 = por %p95, %p96
      %p98 = scmp.ne.s32.totalorder %s90, %s92
      %p99 = scmp.eq.s32.totalorder %s28, 1
      %p100 = por %p98, %p99
      %p101 = scmp.ne.s32.totalorder %s92, %s93
      %p102 = scmp.eq.s32.totalorder %s28, 0
      %p103 = por %p101, %p102
      %p104 = scmp.ne.s32.totalorder %s92, %s93
      %p105 = scmp.eq.s32.totalorder %s29, 1
      %p106 = por %p104, %p105
      %p108 = scmp.ne.s32.totalorder %s93, %s107
      %p109 = scmp.eq.s32.totalorder %s29, 0
      %p110 = por %p108, %p109
      %s112 = sadd.s32 %s111, 1
      %p115 = scmp.eq.s32.totalorder %s23, 1
      %p116 = scmp.ne.s32.totalorder %s111, %s113
      %p117 = scmp.eq.s32.totalorder %s23, 0
      %p118 = por %p116, %p117
      %p119 = scmp.ne.s32.totalorder %s111, %s113
      %p120 = scmp.eq.s32.totalorder %s28, 1
      %p121 = por %p119, %p120
      %p122 = scmp.ne.s32.totalorder %s113, %s114
      %p123 = scmp.eq.s32.totalorder %s28, 0
      %p124 = por %p122, %p123
      %p125 = scmp.ne.s32.totalorder %s113, %s114
      %p126 = scmp.eq.s32.totalorder %s29, 1
      %p127 = por %p125, %p126
      %p129 = scmp.ne.s32.totalorder %s114, %s128
      %p130 = scmp.eq.s32.totalorder %s29, 0
      %p131 = por %p129, %p130
      %s133 = sadd.s32 %s132, 1
      %p136 = scmp.eq.s32.totalorder %s23, 1
      %p137 = scmp.ne.s32.totalorder %s132, %s134
      %p138 = scmp.eq.s32.totalorder %s23, 0
      %p139 = por %p137, %p138
      %p140 = scmp.ne.s32.totalorder %s132, %s134
      %p141 = scmp.eq.s32.totalorder %s28, 1
      %p142 = por %p140, %p141
      %p143 = scmp.ne.s32.totalorder %s134, %s135
      %p144 = scmp.eq.s32.totalorder %s28, 0
      %p145 = por %p143, %p144
      %p146 = scmp.ne.s32.totalorder %s134, %s135
      %p147 = scmp.eq.s32.totalorder %s29, 1
      %p148 = por %p146, %p147
      %p150 = scmp.ne.s32.totalorder %s135, %s149
      %p151 = scmp.eq.s32.totalorder %s29, 0
      %p152 = por %p150, %p151
      %s154 = sadd.s32 %s153, 1
      %p157 = scmp.eq.s32.totalorder %s23, 1
      %p158 = scmp.ne.s32.totalorder %s153, %s155
      %p159 = scmp.eq.s32.totalorder %s23, 0
      %p160 = por %p158, %p159
      %p161 = scmp.ne.s32.totalorder %s153, %s155
      %p162 = scmp.eq.s32.totalorder %s28, 1
      %p163 = por %p161, %p162
      %p164 = scmp.ne.s32.totalorder %s155, %s156
      %p165 = scmp.eq.s32.totalorder %s28, 0
      %p166 = por %p164, %p165
      %p167 = scmp.ne.s32.totalorder %s155, %s156
      %p168 = scmp.eq.s32.totalorder %s29, 1
      %p169 = por %p167, %p168
      %p171 = scmp.ne.s32.totalorder %s156, %s170
      %p172 = scmp.eq.s32.totalorder %s29, 0
      %p173 = por %p171, %p172
      %s175 = sadd.s32 %s174, 1
      %p178 = scmp.eq.s32.totalorder %s23, 1
      %p179 = scmp.ne.s32.totalorder %s174, %s176
      %p180 = scmp.eq.s32.totalorder %s23, 0
      %p181 = por %p179, %p180
      %p182 = scmp.ne.s32.totalorder %s174, %s176
      %p183 = scmp.eq.s32.totalorder %s28, 1
      %p184 = por %p182, %p183
      %p185 = scmp.ne.s32.totalorder %s176, %s177
      %p186 = scmp.eq.s32.totalorder %s28, 0
      %p187 = por %p185, %p186
      %p188 = scmp.ne.s32.totalorder %s176, %s177
      %p189 = scmp.eq.s32.totalorder %s29, 1
      %p190 = por %p188, %p189
      %p192 = scmp.ne.s32.totalorder %s177, %s191
      %p193 = scmp.eq.s32.totalorder %s29, 0
      %p194 = por %p192, %p193
      %s196 = sadd.s32 %s195, 1
      %p199 = scmp.eq.s32.totalorder %s23, 1
      %p200 = scmp.ne.s32.totalorder %s195, %s197
      %p201 = scmp.eq.s32.totalorder %s23, 0
      %p202 = por %p200, %p201
      %p203 = scmp.ne.s32.totalorder %s195, %s197
      %p204 = scmp.eq.s32.totalorder %s28, 1
      %p205 = por %p203, %p204
      %p206 = scmp.ne.s32.totalorder %s197, %s198
      %p207 = scmp.eq.s32.totalorder %s28, 0
      %p208 = por %p206, %p207
      %p209 = scmp.ne.s32.totalorder %s197, %s198
      %p210 = scmp.eq.s32.totalorder %s29, 1
      %p211 = por %p209, %p210
      %p213 = scmp.ne.s32.totalorder %s198, %s212
      %p214 = scmp.eq.s32.totalorder %s29, 0
      %p215 = por %p213, %p214
      %s217 = sadd.s32 %s216, 1
      %p220 = scmp.eq.s32.totalorder %s23, 1
      %p221 = scmp.ne.s32.totalorder %s216, %s218
      %p222 = scmp.eq.s32.totalorder %s23, 0
      %p223 = por %p221, %p222
      %p224 = scmp.ne.s32.totalorder %s216, %s218
      %p225 = scmp.eq.s32.totalorder %s28, 1
      %p226 = por %p224, %p225
      %p227 = scmp.ne.s32.totalorder %s218, %s219
      %p228 = scmp.eq.s32.totalorder %s28, 0
      %p229 = por %p227, %p228
      %p230 = scmp.ne.s32.totalorder %s218, %s219
      %p231 = scmp.eq.s32.totalorder %s29, 1
      %p232 = por %p230, %p231
      %p234 = scmp.ne.s32.totalorder %s219, %s233
      %p235 = scmp.eq.s32.totalorder %s29, 0
      %p236 = por %p234, %p235
      %s238 = sadd.s32 %s237, 1
      %p241 = scmp.eq.s32.totalorder %s23, 1
      %p242 = scmp.ne.s32.totalorder %s237, %s239
      %p243 = scmp.eq.s32.totalorder %s23, 0
      %p244 = por %p242, %p243
      %p245 = scmp.ne.s32.totalorder %s237, %s239
      %p246 = scmp.eq.s32.totalorder %s28, 1
      %p247 = por %p245, %p246
      %p248 = scmp.ne.s32.totalorder %s239, %s240
      %p249 = scmp.eq.s32.totalorder %s28, 0
      %p250 = por %p248, %p249
      %p251 = scmp.ne.s32.totalorder %s239, %s240
      %p252 = scmp.eq.s32.totalorder %s29, 1
      %p253 = por %p251, %p252
      %p255 = scmp.ne.s32.totalorder %s240, %s254
      %p256 = scmp.eq.s32.totalorder %s29, 0
      %p257 = por %p255, %p256
      %s259 = sadd.s32 %s258, 1
      %p262 = scmp.eq.s32.totalorder %s23, 1
      %p263 = scmp.ne.s32.totalorder %s258, %s260
      %p264 = scmp.eq.s32.totalorder %s23, 0
      %p265 = por %p263, %p264
      %p266 = scmp.ne.s32.totalorder %s258, %s260
      %p267 = scmp.eq.s32.totalorder %s28, 1
      %p268 = por %p266, %p267
      %p269 = scmp.ne.s32.totalorder %s260, %s261
      %p270 = scmp.eq.s32.totalorder %s28, 0
      %p271 = por %p269, %p270
      %p272 = scmp.ne.s32.totalorder %s260, %s261
      %p273 = scmp.eq.s32.totalorder %s29, 1
      %p274 = por %p272, %p273
      %p276 = scmp.ne.s32.totalorder %s261, %s275
      %p277 = scmp.eq.s32.totalorder %s29, 0
      %p278 = por %p276, %p277
      %s280 = sadd.s32 %s279, 1
      %p283 = scmp.eq.s32.totalorder %s23, 1
      %p284 = scmp.ne.s32.totalorder %s279, %s281
      %p285 = scmp.eq.s32.totalorder %s23, 0
      %p286 = por %p284, %p285
      %p287 = scmp.ne.s32.totalorder %s279, %s281
      %p288 = scmp.eq.s32.totalorder %s28, 1
      %p289 = por %p287, %p288
      %p290 = scmp.ne.s32.totalorder %s281, %s282
      %p291 = scmp.eq.s32.totalorder %s28, 0
      %p292 = por %p290, %p291
      %p293 = scmp.ne.s32.totalorder %s281, %s282
      %p294 = scmp.eq.s32.totalorder %s29, 1
      %p295 = por %p293, %p294
      %p297 = scmp.ne.s32.totalorder %s282, %s296
      %p298 = scmp.eq.s32.totalorder %s29, 0
      %p299 = por %p297, %p298
      %s301 = sadd.s32 %s300, 1
      %p304 = scmp.eq.s32.totalorder %s23, 1
      %p305 = scmp.ne.s32.totalorder %s300, %s302
      %p306 = scmp.eq.s32.totalorder %s23, 0
      %p307 = por %p305, %p306
      %p308 = scmp.ne.s32.totalorder %s300, %s302
      %p309 = scmp.eq.s32.totalorder %s28, 1
      %p310 = por %p308, %p309
      %p311 = scmp.ne.s32.totalorder %s302, %s303
      %p312 = scmp.eq.s32.totalorder %s28, 0
      %p313 = por %p311, %p312
      %p314 = scmp.ne.s32.totalorder %s302, %s303
      %p315 = scmp.eq.s32.totalorder %s29, 1
      %p316 = por %p314, %p315
      %p318 = scmp.ne.s32.totalorder %s303, %s317
      %p319 = scmp.eq.s32.totalorder %s29, 0
      %p320 = por %p318, %p319
      %s322 = sadd.s32 %s321, 1
      %p325 = scmp.eq.s32.totalorder %s23, 1
      %p326 = scmp.ne.s32.totalorder %s321, %s323
      %p327 = scmp.eq.s32.totalorder %s23, 0
      %p328 = por %p326, %p327
      %p329 = scmp.ne.s32.totalorder %s321, %s323
      %p330 = scmp.eq.s32.totalorder %s28, 1
      %p331 = por %p329, %p330
      %p332 = scmp.ne.s32.totalorder %s323, %s324
      %p333 = scmp.eq.s32.totalorder %s28, 0
      %p334 = por %p332, %p333
      %p335 = scmp.ne.s32.totalorder %s323, %s324
      %p336 = scmp.eq.s32.totalorder %s29, 1
      %p337 = por %p335, %p336
      %p339 = scmp.ne.s32.totalorder %s324, %s338
      %p340 = scmp.eq.s32.totalorder %s29, 0
      %p341 = por %p339, %p340
      %s342 = ssub.s32 %s30, %s42
      %s343 = ssub.s32 %s31, %s38
      %s344 = sor.u32 %s342, %s343
      %p345 = scmp.eq.s32.totalorder %s344, 0
      %s347 = sadd.s32 %s346, 1
      %s348 = scalar_select %p345, %s346, %s347
      %p351 = pneg %p345
      %p352 = scmp.eq.s32.totalorder %s23, 1
      %p353 = por %p351, %p352
      %p354 = scmp.ne.s32.totalorder %s346, %s349
      %p355 = scmp.eq.s32.totalorder %s23, 0
      %p356 = por %p354, %p355
      %p357 = scmp.ne.s32.totalorder %s346, %s349
      %p358 = scmp.eq.s32.totalorder %s28, 1
      %p359 = por %p357, %p358
      %p360 = scmp.ne.s32.totalorder %s349, %s350
      %p361 = scmp.eq.s32.totalorder %s28, 0
      %p362 = por %p360, %p361
      %p363 = scmp.ne.s32.totalorder %s349, %s350
      %p364 = scmp.eq.s32.totalorder %s29, 1
      %p365 = por %p363, %p364
      %p367 = scmp.ne.s32.totalorder %s350, %s366
      %p368 = scmp.eq.s32.totalorder %s29, 0
      %p369 = por %p367, %p368
      %p370 = scmp.le.s32.totalorder 1, %s23
      %p371 = scmp.lt.s32.totalorder %s23, 3
      %p372 = pnand %p370, %p371
      %p373 = pneg %p372
      // Predicated region
      $region9: #{tpu_custom_call.1} parent=5 // pred_check
        _
      $region10: #{tpu_custom_call.1} parent=5 // pred_check_branch
        %375 = sbr.rel (%p372) target = $region12
      $region11: #{tpu_custom_call.1} parent=5 // pred_region
        %s376 = ssub.s32 %s23, 1
        // Predicated region
        $region13: #{tpu_custom_call.1} parent=11 // pred_check
          %p377 = pneg %p82
        $region14: #{tpu_custom_call.1} parent=11 // pred_check_branch
          %379 = sbr.rel (%p377) target = $region16
        $region15: #{tpu_custom_call.1} parent=11 // pred_region
          _
        $region16: #{tpu_custom_call.1} parent=11 // pred_fallthru
          _
        // Predicated region
        $region17: #{tpu_custom_call.1} parent=11 // pred_check
          %p380 = pneg %p103
        $region18: #{tpu_custom_call.1} parent=11 // pred_check_branch
          %382 = sbr.rel (%p380) target = $region20
        $region19: #{tpu_custom_call.1} parent=11 // pred_region
          _
        $region20: #{tpu_custom_call.1} parent=11 // pred_fallthru
          _
        // Predicated region
        $region21: #{tpu_custom_call.1} parent=11 // pred_check
          %p383 = pneg %p124
        $region22: #{tpu_custom_call.1} parent=11 // pred_check_branch
          %385 = sbr.rel (%p383) target = $region24
        $region23: #{tpu_custom_call.1} parent=11 // pred_region
          _
        $region24: #{tpu_custom_call.1} parent=11 // pred_fallthru
          _
        // Predicated region
        $region25: #{tpu_custom_call.1} parent=11 // pred_check
          %p386 = pneg %p145
        $region26: #{tpu_custom_call.1} parent=11 // pred_check_branch
          %388 = sbr.rel (%p386) target = $region28
        $region27: #{tpu_custom_call.1} parent=11 // pred_region
          _
        $region28: #{tpu_custom_call.1} parent=11 // pred_fallthru
          _
        // Predicated region
        $region29: #{tpu_custom_call.1} parent=11 // pred_check
          %p389 = pneg %p166
        $region30: #{tpu_custom_call.1} parent=11 // pred_check_branch
          %391 = sbr.rel (%p389) target = $region32
        $region31: #{tpu_custom_call.1} parent=11 // pred_region
          _
        $region32: #{tpu_custom_call.1} parent=11 // pred_fallthru
          _
        // Predicated region
        $region33: #{tpu_custom_call.1} parent=11 // pred_check
          %p392 = pneg %p187
        $region34: #{tpu_custom_call.1} parent=11 // pred_check_branch
          %394 = sbr.rel (%p392) target = $region36
        $region35: #{tpu_custom_call.1} parent=11 // pred_region
          _
        $region36: #{tpu_custom_call.1} parent=11 // pred_fallthru
          _
        // Predicated region
        $region37: #{tpu_custom_call.1} parent=11 // pred_check
          %p395 = pneg %p208
        $region38: #{tpu_custom_call.1} parent=11 // pred_check_branch
          %397 = sbr.rel (%p395) target = $region40
        $region39: #{tpu_custom_call.1} parent=11 // pred_region
          _
        $region40: #{tpu_custom_call.1} parent=11 // pred_fallthru
          _
        // Predicated region
        $region41: #{tpu_custom_call.1} parent=11 // pred_check
          %p398 = pneg %p229
        $region42: #{tpu_custom_call.1} parent=11 // pred_check_branch
          %400 = sbr.rel (%p398) target = $region44
        $region43: #{tpu_custom_call.1} parent=11 // pred_region
          _
        $region44: #{tpu_custom_call.1} parent=11 // pred_fallthru
          _
        // Predicated region
        $region45: #{tpu_custom_call.1} parent=11 // pred_check
          %p401 = pneg %p250
        $region46: #{tpu_custom_call.1} parent=11 // pred_check_branch
          %403 = sbr.rel (%p401) target = $region48
        $region47: #{tpu_custom_call.1} parent=11 // pred_region
          _
        $region48: #{tpu_custom_call.1} parent=11 // pred_fallthru
          _
        // Predicated region
        $region49: #{tpu_custom_call.1} parent=11 // pred_check
          %p404 = pneg %p271
        $region50: #{tpu_custom_call.1} parent=11 // pred_check_branch
          %406 = sbr.rel (%p404) target = $region52
        $region51: #{tpu_custom_call.1} parent=11 // pred_region
          _
        $region52: #{tpu_custom_call.1} parent=11 // pred_fallthru
          _
        // Predicated region
        $region53: #{tpu_custom_call.1} parent=11 // pred_check
          %p407 = pneg %p292
        $region54: #{tpu_custom_call.1} parent=11 // pred_check_branch
          %409 = sbr.rel (%p407) target = $region56
        $region55: #{tpu_custom_call.1} parent=11 // pred_region
          _
        $region56: #{tpu_custom_call.1} parent=11 // pred_fallthru
          _
        // Predicated region
        $region57: #{tpu_custom_call.1} parent=11 // pred_check
          %p410 = pneg %p313
        $region58: #{tpu_custom_call.1} parent=11 // pred_check_branch
          %412 = sbr.rel (%p410) target = $region60
        $region59: #{tpu_custom_call.1} parent=11 // pred_region
          _
        $region60: #{tpu_custom_call.1} parent=11 // pred_fallthru
          _
        // Predicated region
        $region61: #{tpu_custom_call.1} parent=11 // pred_check
          %p413 = pneg %p334
        $region62: #{tpu_custom_call.1} parent=11 // pred_check_branch
          %415 = sbr.rel (%p413) target = $region64
        $region63: #{tpu_custom_call.1} parent=11 // pred_region
          _
        $region64: #{tpu_custom_call.1} parent=11 // pred_fallthru
          _
      $region12: #{tpu_custom_call.1} parent=5 // pred_fallthru
        _
      %p416 = scmp.lt.s32.totalorder %s23, 2
      // Predicated region
      $region65: #{tpu_custom_call.1} parent=5 // pred_check
        %p417 = pneg %p416
      $region66: #{tpu_custom_call.1} parent=5 // pred_check_branch
        %419 = sbr.rel (%p417) target = $region68
      $region67: #{tpu_custom_call.1} parent=5 // pred_region
        // Predicated region
        $region69: #{tpu_custom_call.1} parent=67 // pred_check
          %p420 = pneg %p55
        $region70: #{tpu_custom_call.1} parent=67 // pred_check_branch
          %422 = sbr.rel (%p420) target = $region72
        $region71: #{tpu_custom_call.1} parent=67 // pred_region
          %p423 = scmp.lt.s32.totalorder %s30, 1
          %s424 = scalar_select %p423, %s30, 1
          %s425 = smul.addr %s424, 8
          %s426 = scalar_lea.vmem %s0, %s425
        $region72: #{tpu_custom_call.1} parent=67 // pred_fallthru
          _
      $region68: #{tpu_custom_call.1} parent=5 // pred_fallthru
        _
      %p427 = scmp.le.s32.totalorder 1, %s23
      %p428 = scmp.lt.s32.totalorder %s23, 3
      %p429 = pnand %p427, %p428
      %p430 = pneg %p429
      // Predicated region
      $region73: #{tpu_custom_call.1} parent=5 // pred_check
        _
      $region74: #{tpu_custom_call.1} parent=5 // pred_check_branch
        %432 = sbr.rel (%p429) target = $region76
      $region75: #{tpu_custom_call.1} parent=5 // pred_region
        %s433 = ssub.s32 %s23, 1
        %p434 = scmp.lt.s32.totalorder %s32, 1
        %s435 = scalar_select %p434, %s32, 1
        %s436 = smul.addr %s435, 8
        %s437 = scalar_lea.vmem %s0, %s436
        %p438 = pneg %p61
        %p439 = pneg %p58
        %p440 = pneg %p82
        %p441 = pneg %p79
        %p442 = pneg %p103
        %p443 = pneg %p100
        %p444 = pneg %p124
        %p445 = pneg %p121
        %p446 = pneg %p145
        %p447 = pneg %p142
        %p448 = pneg %p166
        %p449 = pneg %p163
        %p450 = pneg %p187
        %p451 = pneg %p184
        %p452 = pneg %p208
        %p453 = pneg %p205
        %p454 = pneg %p229
        %p455 = pneg %p226
        %p456 = pneg %p250
        %p457 = pneg %p247
        %p458 = pneg %p271
        %p459 = pneg %p268
        %p460 = pneg %p292
        %p461 = pneg %p289
        %p462 = pneg %p313
        %p463 = pneg %p310
        %p464 = pneg %p334
        %p465 = pneg %p331
        %p466 = pneg %p362
        %p467 = pneg %p359
        %s468 = sand.u32 %s349, 1
        %s469 = scalar_lea.sflag [#allocation6], %s468
        %s470 = sand.u32 %s349, 1
        %s471 = smul.addr %s470, 8
        %s472 = scalar_lea.vmem [#allocation5], %s471
        %p473 = scmp.lt.s32.totalorder %s32, 1
        %s474 = scalar_select %p473, %s32, 1
        %s475 = smul.addr %s474, 8
        %s476 = scalar_lea.vmem %s0, %s475
        %p478 = scmp.eq.s32.totalorder %s33, 0
        // Predicated region
        $region77: #{tpu_custom_call.1} parent=75 // pred_check
          %p479 = pneg %p478
        $region78: #{tpu_custom_call.1} parent=75 // pred_check_branch
          %481 = sbr.rel (%p479) target = $region80
        $region79: #{tpu_custom_call.1} parent=75 // pred_region
          %v482 = vld [vmem:[%s476] sm:$0xff]
          %v483 = vld [vmem:[%s1] sm:$0x1]
          %v484 = vld [vmem:[%s2] sm:$0x1]
          %vm485 = vcmask 261120
          %v486 = vsel %vm485, %v482, 0.0
          %487 = vadd.xlane.f32.xlu0 %v486
          %v488 = vpop.xlane.xlu0 %487
          %v489 = vrcp.pop 32.0
          %v490 = vmul.f32 %v488, %v489
          %v491 = vsub.f32 %v482, %v490
          %v492 = vmul.f32 %v491, %v491
          %v493 = vsel %vm485, %v492, 0.0
          %494 = vadd.xlane.f32.xlu0 %v493
          %v495 = vpop.xlane.xlu0 %494
          %v496 = vmul.f32 %v495, %v489
          %v497 = vadd.f32 %v496, 1e-05
          %v498 = vrsqrt.pop %v497
          %v499 = vmul.f32 %v491, %v498
          %v501 = vlaneseq
          %v502 = vshrl.u32 %v501, 7
          %v503 = vsub.s32 0, %v502
          %v504 = vrot.slane %v483, %v503
          %v506 = vmul.f32 %v499, %v504
          %v508 = vlaneseq
          %v509 = vshrl.u32 %v508, 7
          %v510 = vsub.s32 0, %v509
          %v511 = vrot.slane %v484, %v510
          %v513 = vadd.f32 %v506, %v511
          %v514 = vpack.c.bf16 %v513, %v513
          %vm515 = vcmask 257024
          %516 = vst.msk [vmem:[#allocation2] sm:$0xf] %vm515, %v514
          %v517 = vld [vmem:[%s4] sm:$0xf]
          %v518 = vld [vmem:[%s4 + $0x4] sm:$0xf]
          %v519 = vld [vmem:[%s4 + $0x8] sm:$0xf]
          %v520 = vld [vmem:[%s4 + $0xc] sm:$0xf]
          %v525 = vunpack.c.l.b16 %v517
          %v526 = vunpack.c.l.b16 %v518
          %v527 = vunpack.c.l.b16 %v519
          %v528 = vunpack.c.l.b16 %v520
          %v529 = vpack.c.b16 %v526, %v525
          %v530 = vpack.c.b16 %v528, %v527
          %v534 = vsel %vm485, %v514, 0
          %536 = vmatprep.subr.bf16.mxu0 0
          %537 = vmatpush1.bf16.msra.mxu0 %v529
          %538 = vmatprep.subr.bf16.mxu0 0
          %539 = vmatpush1.bf16.msra.mxu0 %v530
          %540 = vmatprep.subr.bf16.mxu0 0
          %541 = vmatpush1.bf16.msra.mxu0 0
          %542 = vmatprep.subr.bf16.mxu0 0
          %543 = vmatpush1.bf16.msra.mxu0 0
          %544 = vmatprep.subr.bf16.mxu0 0
          %545 = vmatpush1.bf16.msra.mxu0 0
          %546 = vmatprep.subr.bf16.mxu0 0
          %547 = vmatpush1.bf16.msra.mxu0 0
          %548 = vmatprep.subr.bf16.mxu0 0
          %549 = vmatpush1.bf16.msra.mxu0 0
          %550 = vmatprep.subr.bf16.mxu0 0
          %551 = vmatpush1.bf16.msra.mxu0 0
          %552 = vmatprep.subr.bf16.mxu0 0
          %553 = vmatpush1.bf16.msra.mxu0 0
          %554 = vmatprep.subr.bf16.mxu0 0
          %555 = vmatpush1.bf16.msra.mxu0 0
          %556 = vmatprep.subr.bf16.mxu0 0
          %557 = vmatpush1.bf16.msra.mxu0 0
          %558 = vmatprep.subr.bf16.mxu0 0
          %559 = vmatpush1.bf16.msra.mxu0 0
          %560 = vmatprep.subr.bf16.mxu0 0
          %561 = vmatpush1.bf16.msra.mxu0 0
          %562 = vmatprep.subr.bf16.mxu0 0
          %563 = vmatpush1.bf16.msra.mxu0 0
          %564 = vmatprep.subr.bf16.mxu0 0
          %565 = vmatpush1.bf16.msra.mxu0 0
          %566 = vmatprep.subr.bf16.mxu0 0
          %567 = vmatpush1.bf16.msra.mxu0 0
          %568 = vmatprep.mubr.bf16.mxu0 0
          %569 = vmatmul.mubr.bf16.gmra.mrb[0].mxu0 %v534
          %v570 = vpop.f32.mrb[0].mxu0
          %v571 = vadd.f32 0.0, %v570
          %v572 = vpop.f32.mrb[0].mxu0
          %v573 = vpop.f32.mrb[0].mxu0
          %v574 = vpop.f32.mrb[0].mxu0
          %575 = vdwg.mxu0
          %v576 = vld [vmem:[%s5] sm:$0xf]
          %v577 = vld [vmem:[%s5 + $0x4] sm:$0xf]
          %v578 = vld [vmem:[%s5 + $0x8] sm:$0xf]
          %v579 = vld [vmem:[%s5 + $0xc] sm:$0xf]
          %v584 = vunpack.c.l.b16 %v576
          %v585 = vunpack.c.l.b16 %v577
          %v586 = vunpack.c.l.b16 %v578
          %v587 = vunpack.c.l.b16 %v579
          %v588 = vpack.c.b16 %v585, %v584
          %v589 = vpack.c.b16 %v587, %v586
          %592 = vmatprep.subr.bf16.mxu0 0
          %593 = vmatpush1.bf16.msra.mxu0 %v588
          %594 = vmatprep.subr.bf16.mxu0 0
          %595 = vmatpush1.bf16.msra.mxu0 %v589
          %596 = vmatprep.subr.bf16.mxu0 0
          %597 = vmatpush1.bf16.msra.mxu0 0
          %598 = vmatprep.subr.bf16.mxu0 0
          %599 = vmatpush1.bf16.msra.mxu0 0
          %600 = vmatprep.subr.bf16.mxu0 0
          %601 = vmatpush1.bf16.msra.mxu0 0
          %602 = vmatprep.subr.bf16.mxu0 0
          %603 = vmatpush1.bf16.msra.mxu0 0
          %604 = vmatprep.subr.bf16.mxu0 0
          %605 = vmatpush1.bf16.msra.mxu0 0
          %606 = vmatprep.subr.bf16.mxu0 0
          %607 = vmatpush1.bf16.msra.mxu0 0
          %608 = vmatprep.subr.bf16.mxu0 0
          %609 = vmatpush1.bf16.msra.mxu0 0
          %610 = vmatprep.subr.bf16.mxu0 0
          %611 = vmatpush1.bf16.msra.mxu0 0
          %612 = vmatprep.subr.bf16.mxu0 0
          %613 = vmatpush1.bf16.msra.mxu0 0
          %614 = vmatprep.subr.bf16.mxu0 0
          %615 = vmatpush1.bf16.msra.mxu0 0
          %616 = vmatprep.subr.bf16.mxu0 0
          %617 = vmatpush1.bf16.msra.mxu0 0
          %618 = vmatprep.subr.bf16.mxu0 0
          %619 = vmatpush1.bf16.msra.mxu0 0
          %620 = vmatprep.subr.bf16.mxu0 0
          %621 = vmatpush1.bf16.msra.mxu0 0
          %622 = vmatprep.subr.bf16.mxu0 0
          %623 = vmatpush1.bf16.msra.mxu0 0
          %624 = vmatprep.mubr.bf16.mxu0 0
          %625 = vmatmul.mubr.bf16.gmra.mrb[0].mxu0 %v534
          %v626 = vpop.f32.mrb[0].mxu0
          %v627 = vadd.f32 0.0, %v626
          %v628 = vpop.f32.mrb[0].mxu0
          %v629 = vpop.f32.mrb[0].mxu0
          %v630 = vpop.f32.mrb[0].mxu0
          %631 = vdwg.mxu0
          %v632 = vpack.c.bf16 %v571, %v571
          %vm633 = vcmask 60416
          %634 = vst.msk [vmem:[#allocation3] sm:$0xf] %vm633, %v632
          %v635 = vpack.c.bf16 %v627, %v627
          %636 = vst.msk [vmem:[#allocation4] sm:$0xf] %vm633, %v635
          %s637 = scalar_lea.vmem %s4, 16
          %v638 = vld [vmem:[%s637] sm:$0xf]
          %v639 = vld [vmem:[%s637 + $0x4] sm:$0xf]
          %v640 = vld [vmem:[%s637 + $0x8] sm:$0xf]
          %v641 = vld [vmem:[%s637 + $0xc] sm:$0xf]
          %v646 = vunpack.c.l.b16 %v638
          %v647 = vunpack.c.l.b16 %v639
          %v648 = vunpack.c.l.b16 %v640
          %v649 = vunpack.c.l.b16 %v641
          %v650 = vpack.c.b16 %v647, %v646
          %v651 = vpack.c.b16 %v649, %v648
          %654 = vmatprep.subr.bf16.mxu0 0
          %655 = vmatpush1.bf16.msra.mxu0 %v650
          %656 = vmatprep.subr.bf16.mxu0 0
          %657 = vmatpush1.bf16.msra.mxu0 %v651
          %658 = vmatprep.subr.bf16.mxu0 0
          %659 = vmatpush1.bf16.msra.mxu0 0
          %660 = vmatprep.subr.bf16.mxu0 0
          %661 = vmatpush1.bf16.msra.mxu0 0
          %662 = vmatprep.subr.bf16.mxu0 0
          %663 = vmatpush1.bf16.msra.mxu0 0
          %664 = vmatprep.subr.bf16.mxu0 0
          %665 = vmatpush1.bf16.msra.mxu0 0
          %666 = vmatprep.subr.bf16.mxu0 0
          %667 = vmatpush1.bf16.msra.mxu0 0
          %668 = vmatprep.subr.bf16.mxu0 0
          %669 = vmatpush1.bf16.msra.mxu0 0
          %670 = vmatprep.subr.bf16.mxu0 0
          %671 = vmatpush1.bf16.msra.mxu0 0
          %672 = vmatprep.subr.bf16.mxu0 0
          %673 = vmatpush1.bf16.msra.mxu0 0
          %674 = vmatprep.subr.bf16.mxu0 0
          %675 = vmatpush1.bf16.msra.mxu0 0
          %676 = vmatprep.subr.bf16.mxu0 0
          %677 = vmatpush1.bf16.msra.mxu0 0
          %678 = vmatprep.subr.bf16.mxu0 0
          %679 = vmatpush1.bf16.msra.mxu0 0
          %680 = vmatprep.subr.bf16.mxu0 0
          %681 = vmatpush1.bf16.msra.mxu0 0
          %682 = vmatprep.subr.bf16.mxu0 0
          %683 = vmatpush1.bf16.msra.mxu0 0
          %684 = vmatprep.subr.bf16.mxu0 0
          %685 = vmatpush1.bf16.msra.mxu0 0
          %686 = vmatprep.mubr.bf16.mxu0 0
          %687 = vmatmul.mubr.bf16.gmra.mrb[0].mxu0 %v534
          %v688 = vpop.f32.mrb[0].mxu0
          %v689 = vadd.f32 0.0, %v688
          %v690 = vpop.f32.mrb[0].mxu0
          %v691 = vpop.f32.mrb[0].mxu0
          %v692 = vpop.f32.mrb[0].mxu0
          %693 = vdwg.mxu0
          %s694 = scalar_lea.vmem %s5, 16
          %v695 = vld [vmem:[%s694] sm:$0xf]
          %v696 = vld [vmem:[%s694 + $0x4] sm:$0xf]
          %v697 = vld [vmem:[%s694 + $0x8] sm:$0xf]
          %v698 = vld [vmem:[%s694 + $0xc] sm:$0xf]
          %v703 = vunpack.c.l.b16 %v695
          %v704 = vunpack.c.l.b16 %v696
          %v705 = vunpack.c.l.b16 %v697
          %v706 = vunpack.c.l.b16 %v698
          %v707 = vpack.c.b16 %v704, %v703
          %v708 = vpack.c.b16 %v706, %v705
          %711 = vmatprep.subr.bf16.mxu0 0
          %712 = vmatpush1.bf16.msra.mxu0 %v707
          %713 = vmatprep.subr.bf16.mxu0 0
          %714 = vmatpush1.bf16.msra.mxu0 %v708
          %715 = vmatprep.subr.bf16.mxu0 0
          %716 = vmatpush1.bf16.msra.mxu0 0
          %717 = vmatprep.subr.bf16.mxu0 0
          %718 = vmatpush1.bf16.msra.mxu0 0
          %719 = vmatprep.subr.bf16.mxu0 0
          %720 = vmatpush1.bf16.msra.mxu0 0
          %721 = vmatprep.subr.bf16.mxu0 0
          %722 = vmatpush1.bf16.msra.mxu0 0
          %723 = vmatprep.subr.bf16.mxu0 0
          %724 = vmatpush1.bf16.msra.mxu0 0
          %725 = vmatprep.subr.bf16.mxu0 0
          %726 = vmatpush1.bf16.msra.mxu0 0
          %727 = vmatprep.subr.bf16.mxu0 0
          %728 = vmatpush1.bf16.msra.mxu0 0
          %729 = vmatprep.subr.bf16.mxu0 0
          %730 = vmatpush1.bf16.msra.mxu0 0
          %731 = vmatprep.subr.bf16.mxu0 0
          %732 = vmatpush1.bf16.msra.mxu0 0
          %733 = vmatprep.subr.bf16.mxu0 0
          %734 = vmatpush1.bf16.msra.mxu0 0
          %735 = vmatprep.subr.bf16.mxu0 0
          %736 = vmatpush1.bf16.msra.mxu0 0
          %737 = vmatprep.subr.bf16.mxu0 0
          %738 = vmatpush1.bf16.msra.mxu0 0
          %739 = vmatprep.subr.bf16.mxu0 0
          %740 = vmatpush1.bf16.msra.mxu0 0
          %741 = vmatprep.subr.bf16.mxu0 0
          %742 = vmatpush1.bf16.msra.mxu0 0
          %743 = vmatprep.mubr.bf16.mxu0 0
          %744 = vmatmul.mubr.bf16.gmra.mrb[0].mxu0 %v534
          %v745 = vpop.f32.mrb[0].mxu0
          %v746 = vadd.f32 0.0, %v745
          %v747 = vpop.f32.mrb[0].mxu0
          %v748 = vpop.f32.mrb[0].mxu0
          %v749 = vpop.f32.mrb[0].mxu0
          %750 = vdwg.mxu0
          %v751 = vpack.c.bf16 %v689, %v689
          %s752 = scalar_lea.vmem [#allocation3], 4
          %753 = vst.msk [vmem:[%s752] sm:$0xf] %vm633, %v751
          %v754 = vpack.c.bf16 %v746, %v746
          %s755 = scalar_lea.vmem [#allocation4], 4
          %756 = vst.msk [vmem:[%s755] sm:$0xf] %vm633, %v754
          %s757 = scalar_lea.vmem %s4, 32
          %v758 = vld [vmem:[%s757] sm:$0xf]
          %v759 = vld [vmem:[%s757 + $0x4] sm:$0xf]
          %v760 = vld [vmem:[%s757 + $0x8] sm:$0xf]
          %v761 = vld [vmem:[%s757 + $0xc] sm:$0xf]
          %v766 = vunpack.c.l.b16 %v758
          %v767 = vunpack.c.l.b16 %v759
          %v768 = vunpack.c.l.b16 %v760
          %v769 = vunpack.c.l.b16 %v761
          %v770 = vpack.c.b16 %v767, %v766
          %v771 = vpack.c.b16 %v769, %v768
          %774 = vmatprep.subr.bf16.mxu0 0
          %775 = vmatpush1.bf16.msra.mxu0 %v770
          %776 = vmatprep.subr.bf16.mxu0 0
          %777 = vmatpush1.bf16.msra.mxu0 %v771
          %778 = vmatprep.subr.bf16.mxu0 0
          %779 = vmatpush1.bf16.msra.mxu0 0
          %780 = vmatprep.subr.bf16.mxu0 0
          %781 = vmatpush1.bf16.msra.mxu0 0
          %782 = vmatprep.subr.bf16.mxu0 0
          %783 = vmatpush1.bf16.msra.mxu0 0
          %784 = vmatprep.subr.bf16.mxu0 0
          %785 = vmatpush1.bf16.msra.mxu0 0
          %786 = vmatprep.subr.bf16.mxu0 0
          %787 = vmatpush1.bf16.msra.mxu0 0
          %788 = vmatprep.subr.bf16.mxu0 0
          %789 = vmatpush1.bf16.msra.mxu0 0
          %790 = vmatprep.subr.bf16.mxu0 0
          %791 = vmatpush1.bf16.msra.mxu0 0
          %792 = vmatprep.subr.bf16.mxu0 0
          %793 = vmatpush1.bf16.msra.mxu0 0
          %794 = vmatprep.subr.bf16.mxu0 0
          %795 = vmatpush1.bf16.msra.mxu0 0
          %796 = vmatprep.subr.bf16.mxu0 0
          %797 = vmatpush1.bf16.msra.mxu0 0
          %798 = vmatprep.subr.bf16.mxu0 0
          %799 = vmatpush1.bf16.msra.mxu0 0
          %800 = vmatprep.subr.bf16.mxu0 0
          %801 = vmatpush1.bf16.msra.mxu0 0
          %802 = vmatprep.subr.bf16.mxu0 0
          %803 = vmatpush1.bf16.msra.mxu0 0
          %804 = vmatprep.subr.bf16.mxu0 0
          %805 = vmatpush1.bf16.msra.mxu0 0
          %806 = vmatprep.mubr.bf16.mxu0 0
          %807 = vmatmul.mubr.bf16.gmra.mrb[0].mxu0 %v534
          %v808 = vpop.f32.mrb[0].mxu0
          %v809 = vadd.f32 0.0, %v808
          %v810 = vpop.f32.mrb[0].mxu0
          %v811 = vpop.f32.mrb[0].mxu0
          %v812 = vpop.f32.mrb[0].mxu0
          %813 = vdwg.mxu0
          %s814 = scalar_lea.vmem %s5, 32
          %v815 = vld [vmem:[%s814] sm:$0xf]
          %v816 = vld [vmem:[%s814 + $0x4] sm:$0xf]
          %v817 = vld [vmem:[%s814 + $0x8] sm:$0xf]
          %v818 = vld [vmem:[%s814 + $0xc] sm:$0xf]
          %v823 = vunpack.c.l.b16 %v815
          %v824 = vunpack.c.l.b16 %v816
          %v825 = vunpack.c.l.b16 %v817
          %v826 = vunpack.c.l.b16 %v818
          %v827 = vpack.c.b16 %v824, %v823
          %v828 = vpack.c.b16 %v826, %v825
          %831 = vmatprep.subr.bf16.mxu0 0
          %832 = vmatpush1.bf16.msra.mxu0 %v827
          %833 = vmatprep.subr.bf16.mxu0 0
          %834 = vmatpush1.bf16.msra.mxu0 %v828
          %835 = vmatprep.subr.bf16.mxu0 0
          %836 = vmatpush1.bf16.msra.mxu0 0
          %837 = vmatprep.subr.bf16.mxu0 0
          %838 = vmatpush1.bf16.msra.mxu0 0
          %839 = vmatprep.subr.bf16.mxu0 0
          %840 = vmatpush1.bf16.msra.mxu0 0
          %841 = vmatprep.subr.bf16.mxu0 0
          %842 = vmatpush1.bf16.msra.mxu0 0
          %843 = vmatprep.subr.bf16.mxu0 0
          %844 = vmatpush1.bf16.msra.mxu0 0
          %845 = vmatprep.subr.bf16.mxu0 0
          %846 = vmatpush1.bf16.msra.mxu0 0
          %847 = vmatprep.subr.bf16.mxu0 0
          %848 = vmatpush1.bf16.msra.mxu0 0
          %849 = vmatprep.subr.bf16.mxu0 0
          %850 = vmatpush1.bf16.msra.mxu0 0
          %851 = vmatprep.subr.bf16.mxu0 0
          %852 = vmatpush1.bf16.msra.mxu0 0
          %853 = vmatprep.subr.bf16.mxu0 0
          %854 = vmatpush1.bf16.msra.mxu0 0
          %855 = vmatprep.subr.bf16.mxu0 0
          %856 = vmatpush1.bf16.msra.mxu0 0
          %857 = vmatprep.subr.bf16.mxu0 0
          %858 = vmatpush1.bf16.msra.mxu0 0
          %859 = vmatprep.subr.bf16.mxu0 0
          %860 = vmatpush1.bf16.msra.mxu0 0
          %861 = vmatprep.subr.bf16.mxu0 0
          %862 = vmatpush1.bf16.msra.mxu0 0
          %863 = vmatprep.mubr.bf16.mxu0 0
          %864 = vmatmul.mubr.bf16.gmra.mrb[0].mxu0 %v534
          %v865 = vpop.f32.mrb[0].mxu0
          %v866 = vadd.f32 0.0, %v865
          %v867 = vpop.f32.mrb[0].mxu0
          %v868 = vpop.f32.mrb[0].mxu0
          %v869 = vpop.f32.mrb[0].mxu0
          %870 = vdwg.mxu0
          %v871 = vpack.c.bf16 %v809, %v809
          %s872 = scalar_lea.vmem [#allocation3], 8
          %873 = vst.msk [vmem:[%s872] sm:$0xf] %vm633, %v871
          %v874 = vpack.c.bf16 %v866, %v866
          %s875 = scalar_lea.vmem [#allocation4], 8
          %876 = vst.msk [vmem:[%s875] sm:$0xf] %vm633, %v874
          %s877 = scalar_lea.vmem %s4, 48
          %v878 = vld [vmem:[%s877] sm:$0xf]
          %v879 = vld [vmem:[%s877 + $0x4] sm:$0xf]
          %v880 = vld [vmem:[%s877 + $0x8] sm:$0xf]
          %v881 = vld [vmem:[%s877 + $0xc] sm:$0xf]
          %v886 = vunpack.c.l.b16 %v878
          %v887 = vunpack.c.l.b16 %v879
          %v888 = vunpack.c.l.b16 %v880
          %v889 = vunpack.c.l.b16 %v881
          %v890 = vpack.c.b16 %v887, %v886
          %v891 = vpack.c.b16 %v889, %v888
          %894 = vmatprep.subr.bf16.mxu0 0
          %895 = vmatpush1.bf16.msra.mxu0 %v890
          %896 = vmatprep.subr.bf16.mxu0 0
          %897 = vmatpush1.bf16.msra.mxu0 %v891
          %898 = vmatprep.subr.bf16.mxu0 0
          %899 = vmatpush1.bf16.msra.mxu0 0
          %900 = vmatprep.subr.bf16.mxu0 0
          %901 = vmatpush1.bf16.msra.mxu0 0
          %902 = vmatprep.subr.bf16.mxu0 0
          %903 = vmatpush1.bf16.msra.mxu0 0
          %904 = vmatprep.subr.bf16.mxu0 0
          %905 = vmatpush1.bf16.msra.mxu0 0
          %906 = vmatprep.subr.bf16.mxu0 0
          %907 = vmatpush1.bf16.msra.mxu0 0
          %908 = vmatprep.subr.bf16.mxu0 0
          %909 = vmatpush1.bf16.msra.mxu0 0
          %910 = vmatprep.subr.bf16.mxu0 0
          %911 = vmatpush1.bf16.msra.mxu0 0
          %912 = vmatprep.subr.bf16.mxu0 0
          %913 = vmatpush1.bf16.msra.mxu0 0
          %914 = vmatprep.subr.bf16.mxu0 0
          %915 = vmatpush1.bf16.msra.mxu0 0
          %916 = vmatprep.subr.bf16.mxu0 0
          %917 = vmatpush1.bf16.msra.mxu0 0
          %918 = vmatprep.subr.bf16.mxu0 0
          %919 = vmatpush1.bf16.msra.mxu0 0
          %920 = vmatprep.subr.bf16.mxu0 0
          %921 = vmatpush1.bf16.msra.mxu0 0
          %922 = vmatprep.subr.bf16.mxu0 0
          %923 = vmatpush1.bf16.msra.mxu0 0
          %924 = vmatprep.subr.bf16.mxu0 0
          %925 = vmatpush1.bf16.msra.mxu0 0
          %926 = vmatprep.mubr.bf16.mxu0 0
          %927 = vmatmul.mubr.bf16.gmra.mrb[0].mxu0 %v534
          %v928 = vpop.f32.mrb[0].mxu0
          %v929 = vadd.f32 0.0, %v928
          %v930 = vpop.f32.mrb[0].mxu0
          %v931 = vpop.f32.mrb[0].mxu0
          %v932 = vpop.f32.mrb[0].mxu0
          %933 = vdwg.mxu0
          %s934 = scalar_lea.vmem %s5, 48
          %v935 = vld [vmem:[%s934] sm:$0xf]
          %v936 = vld [vmem:[%s934 + $0x4] sm:$0xf]
          %v937 = vld [vmem:[%s934 + $0x8] sm:$0xf]
          %v938 = vld [vmem:[%s934 + $0xc] sm:$0xf]
          %v943 = vunpack.c.l.b16 %v935
          %v944 = vunpack.c.l.b16 %v936
          %v945 = vunpack.c.l.b16 %v937
          %v946 = vunpack.c.l.b16 %v938
          %v947 = vpack.c.b16 %v944, %v943
          %v948 = vpack.c.b16 %v946, %v945
          %951 = vmatprep.subr.bf16.mxu0 0
          %952 = vmatpush1.bf16.msra.mxu0 %v947
          %953 = vmatprep.subr.bf16.mxu0 0
          %954 = vmatpush1.bf16.msra.mxu0 %v948
          %955 = vmatprep.subr.bf16.mxu0 0
          %956 = vmatpush1.bf16.msra.mxu0 0
          %957 = vmatprep.subr.bf16.mxu0 0
          %958 = vmatpush1.bf16.msra.mxu0 0
          %959 = vmatprep.subr.bf16.mxu0 0
          %960 = vmatpush1.bf16.msra.mxu0 0
          %961 = vmatprep.subr.bf16.mxu0 0
          %962 = vmatpush1.bf16.msra.mxu0 0
          %963 = vmatprep.subr.bf16.mxu0 0
          %964 = vmatpush1.bf16.msra.mxu0 0
          %965 = vmatprep.subr.bf16.mxu0 0
          %966 = vmatpush1.bf16.msra.mxu0 0
          %967 = vmatprep.subr.bf16.mxu0 0
          %968 = vmatpush1.bf16.msra.mxu0 0
          %969 = vmatprep.subr.bf16.mxu0 0
          %970 = vmatpush1.bf16.msra.mxu0 0
          %971 = vmatprep.subr.bf16.mxu0 0
          %972 = vmatpush1.bf16.msra.mxu0 0
          %973 = vmatprep.subr.bf16.mxu0 0
          %974 = vmatpush1.bf16.msra.mxu0 0
          %975 = vmatprep.subr.bf16.mxu0 0
          %976 = vmatpush1.bf16.msra.mxu0 0
          %977 = vmatprep.subr.bf16.mxu0 0
          %978 = vmatpush1.bf16.msra.mxu0 0
          %979 = vmatprep.subr.bf16.mxu0 0
          %980 = vmatpush1.bf16.msra.mxu0 0
          %981 = vmatprep.subr.bf16.mxu0 0
          %982 = vmatpush1.bf16.msra.mxu0 0
          %983 = vmatprep.mubr.bf16.mxu0 0
          %984 = vmatmul.mubr.bf16.gmra.mrb[0].mxu0 %v534
          %v985 = vpop.f32.mrb[0].mxu0
          %v986 = vadd.f32 0.0, %v985
          %v987 = vpop.f32.mrb[0].mxu0
          %v988 = vpop.f32.mrb[0].mxu0
          %v989 = vpop.f32.mrb[0].mxu0
          %990 = vdwg.mxu0
          %v991 = vpack.c.bf16 %v929, %v929
          %s992 = scalar_lea.vmem [#allocation3], 12
          %993 = vst.msk [vmem:[%s992] sm:$0xf] %vm633, %v991
          %v994 = vpack.c.bf16 %v986, %v986
          %s995 = scalar_lea.vmem [#allocation4], 12
          %996 = vst.msk [vmem:[%s995] sm:$0xf] %vm633, %v994
        $region80: #{tpu_custom_call.1} parent=75 // pred_fallthru
          _
        %s997 = smul.u32 %s33, 8
        %s998 = scalar_lea.vmem %s476, %s997
        %v999 = vld [vmem:[%s998] sm:$0xff]
        %s1000 = sshra.s32 %s997, 3
        %s1001 = sand.u32 %s997, 7
        %s1002 = smul.addr %s1000, 4
        %s1003 = scalar_lea.vmem [#allocation2], %s1002
        %v1004 = vld [vmem:[%s1003] sm:$0xf]
        %v1005 = vld [vmem:[%s3] sm:$0xf]
        %v1006 = vld [vmem:[%s3 + $0x4] sm:$0xf]
        %v1007 = vld [vmem:[%s3 + $0x8] sm:$0xf]
        %v1008 = vld [vmem:[%s3 + $0xc] sm:$0xf]
        %v1013 = vunpack.c.l.b16 %v1005
        %v1014 = vunpack.c.l.b16 %v1006
        %v1015 = vunpack.c.l.b16 %v1007
        %v1016 = vunpack.c.l.b16 %v1008
        %v1017 = vpack.c.b16 %v1014, %v1013
        %v1018 = vpack.c.b16 %v1016, %v1015
        %vm1021 = vcmask 261120
        %v1023 = vsel %vm1021, %v1004, 0
        %1025 = vmatprep.subr.bf16.mxu0 0
        %1026 = vmatpush1.bf16.msra.mxu0 %v1017
        %1027 = vmatprep.subr.bf16.mxu0 0
        %1028 = vmatpush1.bf16.msra.mxu0 %v1018
        %1029 = vmatprep.subr.bf16.mxu0 0
        %1030 = vmatpush1.bf16.msra.mxu0 0
        %1031 = vmatprep.subr.bf16.mxu0 0
        %1032 = vmatpush1.bf16.msra.mxu0 0
        %1033 = vmatprep.subr.bf16.mxu0 0
        %1034 = vmatpush1.bf16.msra.mxu0 0
        %1035 = vmatprep.subr.bf16.mxu0 0
        %1036 = vmatpush1.bf16.msra.mxu0 0
        %1037 = vmatprep.subr.bf16.mxu0 0
        %1038 = vmatpush1.bf16.msra.mxu0 0
        %1039 = vmatprep.subr.bf16.mxu0 0
        %1040 = vmatpush1.bf16.msra.mxu0 0
        %1041 = vmatprep.subr.bf16.mxu0 0
        %1042 = vmatpush1.bf16.msra.mxu0 0
        %1043 = vmatprep.subr.bf16.mxu0 0
        %1044 = vmatpush1.bf16.msra.mxu0 0
        %1045 = vmatprep.subr.bf16.mxu0 0
        %1046 = vmatpush1.bf16.msra.mxu0 0
        %1047 = vmatprep.subr.bf16.mxu0 0
        %1048 = vmatpush1.bf16.msra.mxu0 0
        %1049 = vmatprep.subr.bf16.mxu0 0
        %1050 = vmatpush1.bf16.msra.mxu0 0
        %1051 = vmatprep.subr.bf16.mxu0 0
        %1052 = vmatpush1.bf16.msra.mxu0 0
        %1053 = vmatprep.subr.bf16.mxu0 0
        %1054 = vmatpush1.bf16.msra.mxu0 0
        %1055 = vmatprep.subr.bf16.mxu0 0
        %1056 = vmatpush1.bf16.msra.mxu0 0
        %1057 = vmatprep.mubr.bf16.mxu0 0
        %1058 = vmatmul.mubr.bf16.gmra.mrb[0].mxu0 %v1023
        %v1059 = vpop.f32.mrb[0].mxu0
        %v1060 = vadd.f32 0.0, %v1059
        %v1061 = vpop.f32.mrb[0].mxu0
        %v1062 = vpop.f32.mrb[0].mxu0
        %v1063 = vpop.f32.mrb[0].mxu0
        %1064 = vdwg.mxu0
        %s1065 = scalar_lea.vmem %s3, 16
        %v1066 = vld [vmem:[%s1065] sm:$0xf]
        %v1067 = vld [vmem:[%s1065 + $0x4] sm:$0xf]
        %v1068 = vld [vmem:[%s1065 + $0x8] sm:$0xf]
        %v1069 = vld [vmem:[%s1065 + $0xc] sm:$0xf]
        %v1074 = vunpack.c.l.b16 %v1066
        %v1075 = vunpack.c.l.b16 %v1067
        %v1076 = vunpack.c.l.b16 %v1068
        %v1077 = vunpack.c.l.b16 %v1069
        %v1078 = vpack.c.b16 %v1075, %v1074
        %v1079 = vpack.c.b16 %v1077, %v1076
        %1082 = vmatprep.subr.bf16.mxu0 0
        %1083 = vmatpush1.bf16.msra.mxu0 %v1078
        %1084 = vmatprep.subr.bf16.mxu0 0
        %1085 = vmatpush1.bf16.msra.mxu0 %v1079
        %1086 = vmatprep.subr.bf16.mxu0 0
        %1087 = vmatpush1.bf16.msra.mxu0 0
        %1088 = vmatprep.subr.bf16.mxu0 0
        %1089 = vmatpush1.bf16.msra.mxu0 0
        %1090 = vmatprep.subr.bf16.mxu0 0
        %1091 = vmatpush1.bf16.msra.mxu0 0
        %1092 = vmatprep.subr.bf16.mxu0 0
        %1093 = vmatpush1.bf16.msra.mxu0 0
        %1094 = vmatprep.subr.bf16.mxu0 0
        %1095 = vmatpush1.bf16.msra.mxu0 0
        %1096 = vmatprep.subr.bf16.mxu0 0
        %1097 = vmatpush1.bf16.msra.mxu0 0
        %1098 = vmatprep.subr.bf16.mxu0 0
        %1099 = vmatpush1.bf16.msra.mxu0 0
        %1100 = vmatprep.subr.bf16.mxu0 0
        %1101 = vmatpush1.bf16.msra.mxu0 0
        %1102 = vmatprep.subr.bf16.mxu0 0
        %1103 = vmatpush1.bf16.msra.mxu0 0
        %1104 = vmatprep.subr.bf16.mxu0 0
        %1105 = vmatpush1.bf16.msra.mxu0 0
        %1106 = vmatprep.subr.bf16.mxu0 0
        %1107 = vmatpush1.bf16.msra.mxu0 0
        %1108 = vmatprep.subr.bf16.mxu0 0
        %1109 = vmatpush1.bf16.msra.mxu0 0
        %1110 = vmatprep.subr.bf16.mxu0 0
        %1111 = vmatpush1.bf16.msra.mxu0 0
        %1112 = vmatprep.subr.bf16.mxu0 0
        %1113 = vmatpush1.bf16.msra.mxu0 0
        %1114 = vmatprep.mubr.bf16.mxu0 0
        %1115 = vmatmul.mubr.bf16.gmra.mrb[0].mxu0 %v1023
        %v1116 = vpop.f32.mrb[0].mxu0
        %v1117 = vadd.f32 0.0, %v1116
        %v1118 = vpop.f32.mrb[0].mxu0
        %v1119 = vpop.f32.mrb[0].mxu0
        %v1120 = vpop.f32.mrb[0].mxu0
        %1121 = vdwg.mxu0
        %s1122 = scalar_lea.vmem %s3, 32
        %v1123 = vld [vmem:[%s1122] sm:$0xf]
        %v1124 = vld [vmem:[%s1122 + $0x4] sm:$0xf]
        %v1125 = vld [vmem:[%s1122 + $0x8] sm:$0xf]
        %v1126 = vld [vmem:[%s1122 + $0xc] sm:$0xf]
        %v1131 = vunpack.c.l.b16 %v1123
        %v1132 = vunpack.c.l.b16 %v1124
        %v1133 = vunpack.c.l.b16 %v1125
        %v1134 = vunpack.c.l.b16 %v1126
        %v1135 = vpack.c.b16 %v1132, %v1131
        %v1136 = vpack.c.b16 %v1134, %v1133
        %1139 = vmatprep.subr.bf16.mxu0 0
        %1140 = vmatpush1.bf16.msra.mxu0 %v1135
        %1141 = vmatprep.subr.bf16.mxu0 0
        %1142 = vmatpush1.bf16.msra.mxu0 %v1136
        %1143 = vmatprep.subr.bf16.mxu0 0
        %1144 = vmatpush1.bf16.msra.mxu0 0
        %1145 = vmatprep.subr.bf16.mxu0 0
        %1146 = vmatpush1.bf16.msra.mxu0 0
        %1147 = vmatprep.subr.bf16.mxu0 0
        %1148 = vmatpush1.bf16.msra.mxu0 0
        %1149 = vmatprep.subr.bf16.mxu0 0
        %1150 = vmatpush1.bf16.msra.mxu0 0
        %1151 = vmatprep.subr.bf16.mxu0 0
        %1152 = vmatpush1.bf16.msra.mxu0 0
        %1153 = vmatprep.subr.bf16.mxu0 0
        %1154 = vmatpush1.bf16.msra.mxu0 0
        %1155 = vmatprep.subr.bf16.mxu0 0
        %1156 = vmatpush1.bf16.msra.mxu0 0
        %1157 = vmatprep.subr.bf16.mxu0 0
        %1158 = vmatpush1.bf16.msra.mxu0 0
        %1159 = vmatprep.subr.bf16.mxu0 0
        %1160 = vmatpush1.bf16.msra.mxu0 0
        %1161 = vmatprep.subr.bf16.mxu0 0
        %1162 = vmatpush1.bf16.msra.mxu0 0
        %1163 = vmatprep.subr.bf16.mxu0 0
        %1164 = vmatpush1.bf16.msra.mxu0 0
        %1165 = vmatprep.subr.bf16.mxu0 0
        %1166 = vmatpush1.bf16.msra.mxu0 0
        %1167 = vmatprep.subr.bf16.mxu0 0
        %1168 = vmatpush1.bf16.msra.mxu0 0
        %1169 = vmatprep.subr.bf16.mxu0 0
        %1170 = vmatpush1.bf16.msra.mxu0 0
        %1171 = vmatprep.mubr.bf16.mxu0 0
        %1172 = vmatmul.mubr.bf16.gmra.mrb[0].mxu0 %v1023
        %v1173 = vpop.f32.mrb[0].mxu0
        %v1174 = vadd.f32 0.0, %v1173
        %v1175 = vpop.f32.mrb[0].mxu0
        %v1176 = vpop.f32.mrb[0].mxu0
        %v1177 = vpop.f32.mrb[0].mxu0
        %1178 = vdwg.mxu0
        %s1179 = scalar_lea.vmem %s3, 48
        %v1180 = vld [vmem:[%s1179] sm:$0xf]
        %v1181 = vld [vmem:[%s1179 + $0x4] sm:$0xf]
        %v1182 = vld [vmem:[%s1179 + $0x8] sm:$0xf]
        %v1183 = vld [vmem:[%s1179 + $0xc] sm:$0xf]
        %v1188 = vunpack.c.l.b16 %v1180
        %v1189 = vunpack.c.l.b16 %v1181
        %v1190 = vunpack.c.l.b16 %v1182
        %v1191 = vunpack.c.l.b16 %v1183
        %v1192 = vpack.c.b16 %v1189, %v1188
        %v1193 = vpack.c.b16 %v1191, %v1190
        %1196 = vmatprep.subr.bf16.mxu0 0
        %1197 = vmatpush1.bf16.msra.mxu0 %v1192
        %1198 = vmatprep.subr.bf16.mxu0 0
        %1199 = vmatpush1.bf16.msra.mxu0 %v1193
        %1200 = vmatprep.subr.bf16.mxu0 0
        %1201 = vmatpush1.bf16.msra.mxu0 0
        %1202 = vmatprep.subr.bf16.mxu0 0
        %1203 = vmatpush1.bf16.msra.mxu0 0
        %1204 = vmatprep.subr.bf16.mxu0 0
        %1205 = vmatpush1.bf16.msra.mxu0 0
        %1206 = vmatprep.subr.bf16.mxu0 0
        %1207 = vmatpush1.bf16.msra.mxu0 0
        %1208 = vmatprep.subr.bf16.mxu0 0
        %1209 = vmatpush1.bf16.msra.mxu0 0
        %1210 = vmatprep.subr.bf16.mxu0 0
        %1211 = vmatpush1.bf16.msra.mxu0 0
        %1212 = vmatprep.subr.bf16.mxu0 0
        %1213 = vmatpush1.bf16.msra.mxu0 0
        %1214 = vmatprep.subr.bf16.mxu0 0
        %1215 = vmatpush1.bf16.msra.mxu0 0
        %1216 = vmatprep.subr.bf16.mxu0 0
        %1217 = vmatpush1.bf16.msra.mxu0 0
        %1218 = vmatprep.subr.bf16.mxu0 0
        %1219 = vmatpush1.bf16.msra.mxu0 0
        %1220 = vmatprep.subr.bf16.mxu0 0
        %1221 = vmatpush1.bf16.msra.mxu0 0
        %1222 = vmatprep.subr.bf16.mxu0 0
        %1223 = vmatpush1.bf16.msra.mxu0 0
        %1224 = vmatprep.subr.bf16.mxu0 0
        %1225 = vmatpush1.bf16.msra.mxu0 0
        %1226 = vmatprep.subr.bf16.mxu0 0
        %1227 = vmatpush1.bf16.msra.mxu0 0
        %1228 = vmatprep.mubr.bf16.mxu0 0
        %1229 = vmatmul.mubr.bf16.gmra.mrb[0].mxu0 %v1023
        %v1230 = vpop.f32.mrb[0].mxu0
        %v1231 = vadd.f32 0.0, %v1230
        %v1232 = vpop.f32.mrb[0].mxu0
        %v1233 = vpop.f32.mrb[0].mxu0
        %v1234 = vpop.f32.mrb[0].mxu0
        %1235 = vdwg.mxu0
        %v1236 = vpack.c.bf16 %v1060, %v1060
        %v1237 = vpack.c.bf16 %v1117, %v1117
        %v1238 = vpack.c.bf16 %v1174, %v1174
        %v1239 = vpack.c.bf16 %v1231, %v1231
        %s1240 = sadd.s32 %s33, 1
        // While loop
        $region81: #{tpu_custom_call.1} parent=75 // loop_pre_header
          _
        $region82: #{tpu_custom_call.1} parent=75 // loop_header
          %s1242 = sphi 0, %s1244
          %p1243 = scmp.ge.s32.totalorder %s1242, %s1240
          %v1247 = vphi -1e+30, %v1480
          %v1248 = vphi -1e+30, %v1481
          %v1249 = vphi -1e+30, %v1482
          %v1250 = vphi -1e+30, %v1483
          %v1251 = vphi 0.0, %v1524
          %v1252 = vphi 0.0, %v1525
          %v1253 = vphi 0.0, %v1526
          %v1254 = vphi 0.0, %v1527
          %v1255 = vphi 0.0, %v1721
          %v1256 = vphi 0.0, %v1722
          %v1257 = vphi 0.0, %v1723
          %v1258 = vphi 0.0, %v1724
        $region83: #{tpu_custom_call.1} parent=75 // loop_header_branch
          %1246 = sbr.rel (%p1243) target = $region87
        $region84: #{tpu_custom_call.1} parent=75 // loop_body
          %s1259 = smul.u32 %s1242, 4
          %s1260 = smul.addr %s1259, 4
          %s1261 = scalar_lea.vmem [#allocation3], %s1260
          %v1262 = vld [vmem:[%s1261] sm:$0xf]
          %v1263 = vld [vmem:[%s1261 + $0x4] sm:$0xf]
          %v1264 = vld [vmem:[%s1261 + $0x8] sm:$0xf]
          %v1265 = vld [vmem:[%s1261 + $0xc] sm:$0xf]
          %s1266 = smul.addr %s1259, 4
          %s1267 = scalar_lea.vmem [#allocation4], %s1266
          %v1268 = vld [vmem:[%s1267] sm:$0xf]
          %v1269 = vld [vmem:[%s1267 + $0x4] sm:$0xf]
          %v1270 = vld [vmem:[%s1267 + $0x8] sm:$0xf]
          %v1271 = vld [vmem:[%s1267 + $0xc] sm:$0xf]
          %v1272 = vlaneseq
          %v1273 = vshrl.u32 %v1272, 7
          %v1274 = vstv %s997
          %v1275 = vadd.s32 %v1274, %v1273
          %s1276 = smul.u32 %s1242, 8
          %v1277 = vlaneseq
          %v1278 = vand.u32 %v1277, 127
          %v1279 = vstv %s1276
          %v1280 = vadd.s32 %v1279, %v1278
          %vm1281 = vcmp.gt.s32.totalorder %v1280, %v1275
          %v1282 = vsel %vm1281, -1e+30, 0.0
          %vm1283 = vcmask 64512
          %v1285 = vsel %vm1283, %v1236, 0
          %v1288 = vsel %vm1283, %v1262, 0
          %1290 = vmatprep.subr.bf16.mxu0 0
          %1291 = vmatpush1.bf16.xpose.msra.mxu0 %v1288
          %1292 = vmatprep.subr.bf16.mxu0 0
          %1293 = vmatpush1.bf16.xpose.msra.mxu0 0
          %1294 = vmatprep.subr.bf16.mxu0 0
          %1295 = vmatpush1.bf16.xpose.msra.mxu0 0
          %1296 = vmatprep.subr.bf16.mxu0 0
          %1297 = vmatpush1.bf16.xpose.msra.mxu0 0
          %1298 = vmatprep.subr.bf16.mxu0 0
          %1299 = vmatpush1.bf16.xpose.msra.mxu0 0
          %1300 = vmatprep.subr.bf16.mxu0 0
          %1301 = vmatpush1.bf16.xpose.msra.mxu0 0
          %1302 = vmatprep.subr.bf16.mxu0 0
          %1303 = vmatpush1.bf16.xpose.msra.mxu0 0
          %1304 = vmatprep.subr.bf16.mxu0 0
          %1305 = vmatpush1.bf16.xpose.msra.mxu0 0
          %1306 = vmatprep.subr.bf16.mxu0 0
          %1307 = vmatpush1.bf16.xpose.msra.mxu0 0
          %1308 = vmatprep.subr.bf16.mxu0 0
          %1309 = vmatpush1.bf16.xpose.msra.mxu0 0
          %1310 = vmatprep.subr.bf16.mxu0 0
          %1311 = vmatpush1.bf16.xpose.msra.mxu0 0
          %1312 = vmatprep.subr.bf16.mxu0 0
          %1313 = vmatpush1.bf16.xpose.msra.mxu0 0
          %1314 = vmatprep.subr.bf16.mxu0 0
          %1315 = vmatpush1.bf16.xpose.msra.mxu0 0
          %1316 = vmatprep.subr.bf16.mxu0 0
          %1317 = vmatpush1.bf16.xpose.msra.mxu0 0
          %1318 = vmatprep.subr.bf16.mxu0 0
          %1319 = vmatpush1.bf16.xpose.msra.mxu0 0
          %1320 = vmatprep.subr.bf16.mxu0 0
          %1321 = vmatpush1.bf16.xpose.msra.mxu0 0
          %1322 = vmatprep.mubr.bf16.mxu0 0
          %1323 = vmatmul.mubr.bf16.gmra.mrb[0].mxu0 %v1285
          %v1324 = vpop.f32.mrb[0].mxu0
          %v1325 = vadd.f32 %v1282, %v1324
          %v1326 = vpop.f32.mrb[0].mxu0
          %v1327 = vpop.f32.mrb[0].mxu0
          %v1328 = vpop.f32.mrb[0].mxu0
          %1329 = vdwg.mxu0
          %v1331 = vsel %vm1283, %v1237, 0
          %v1334 = vsel %vm1283, %v1263, 0
          %1336 = vmatprep.subr.bf16.mxu0 0
          %1337 = vmatpush1.bf16.xpose.msra.mxu0 %v1334
          %1338 = vmatprep.subr.bf16.mxu0 0
          %1339 = vmatpush1.bf16.xpose.msra.mxu0 0
          %1340 = vmatprep.subr.bf16.mxu0 0
          %1341 = vmatpush1.bf16.xpose.msra.mxu0 0
          %1342 = vmatprep.subr.bf16.mxu0 0
          %1343 = vmatpush1.bf16.xpose.msra.mxu0 0
          %1344 = vmatprep.subr.bf16.mxu0 0
          %1345 = vmatpush1.bf16.xpose.msra.mxu0 0
          %1346 = vmatprep.subr.bf16.mxu0 0
          %1347 = vmatpush1.bf16.xpose.msra.mxu0 0
          %1348 = vmatprep.subr.bf16.mxu0 0
          %1349 = vmatpush1.bf16.xpose.msra.mxu0 0
          %1350 = vmatprep.subr.bf16.mxu0 0
          %1351 = vmatpush1.bf16.xpose.msra.mxu0 0
          %1352 = vmatprep.subr.bf16.mxu0 0
          %1353 = vmatpush1.bf16.xpose.msra.mxu0 0
          %1354 = vmatprep.subr.bf16.mxu0 0
          %1355 = vmatpush1.bf16.xpose.msra.mxu0 0
          %1356 = vmatprep.subr.bf16.mxu0 0
          %1357 = vmatpush1.bf16.xpose.msra.mxu0 0
          %1358 = vmatprep.subr.bf16.mxu0 0
          %1359 = vmatpush1.bf16.xpose.msra.mxu0 0
          %1360 = vmatprep.subr.bf16.mxu0 0
          %1361 = vmatpush1.bf16.xpose.msra.mxu0 0
          %1362 = vmatprep.subr.bf16.mxu0 0
          %1363 = vmatpush1.bf16.xpose.msra.mxu0 0
          %1364 = vmatprep.subr.bf16.mxu0 0
          %1365 = vmatpush1.bf16.xpose.msra.mxu0 0
          %1366 = vmatprep.subr.bf16.mxu0 0
          %1367 = vmatpush1.bf16.xpose.msra.mxu0 0
          %1368 = vmatprep.mubr.bf16.mxu0 0
          %1369 = vmatmul.mubr.bf16.gmra.mrb[0].mxu0 %v1331
          %v1370 = vpop.f32.mrb[0].mxu0
          %v1371 = vadd.f32 %v1282, %v1370
          %v1372 = vpop.f32.mrb[0].mxu0
          %v1373 = vpop.f32.mrb[0].mxu0
          %v1374 = vpop.f32.mrb[0].mxu0
          %1375 = vdwg.mxu0
          %v1377 = vsel %vm1283, %v1238, 0
          %v1380 = vsel %vm1283, %v1264, 0
          %1382 = vmatprep.subr.bf16.mxu0 0
          %1383 = vmatpush1.bf16.xpose.msra.mxu0 %v1380
          %1384 = vmatprep.subr.bf16.mxu0 0
          %1385 = vmatpush1.bf16.xpose.msra.mxu0 0
          %1386 = vmatprep.subr.bf16.mxu0 0
          %1387 = vmatpush1.bf16.xpose.msra.mxu0 0
          %1388 = vmatprep.subr.bf16.mxu0 0
          %1389 = vmatpush1.bf16.xpose.msra.mxu0 0
          %1390 = vmatprep.subr.bf16.mxu0 0
          %1391 = vmatpush1.bf16.xpose.msra.mxu0 0
          %1392 = vmatprep.subr.bf16.mxu0 0
          %1393 = vmatpush1.bf16.xpose.msra.mxu0 0
          %1394 = vmatprep.subr.bf16.mxu0 0
          %1395 = vmatpush1.bf16.xpose.msra.mxu0 0
          %1396 = vmatprep.subr.bf16.mxu0 0
          %1397 = vmatpush1.bf16.xpose.msra.mxu0 0
          %1398 = vmatprep.subr.bf16.mxu0 0
          %1399 = vmatpush1.bf16.xpose.msra.mxu0 0
          %1400 = vmatprep.subr.bf16.mxu0 0
          %1401 = vmatpush1.bf16.xpose.msra.mxu0 0
          %1402 = vmatprep.subr.bf16.mxu0 0
          %1403 = vmatpush1.bf16.xpose.msra.mxu0 0
          %1404 = vmatprep.subr.bf16.mxu0 0
          %1405 = vmatpush1.bf16.xpose.msra.mxu0 0
          %1406 = vmatprep.subr.bf16.mxu0 0
          %1407 = vmatpush1.bf16.xpose.msra.mxu0 0
          %1408 = vmatprep.subr.bf16.mxu0 0
          %1409 = vmatpush1.bf16.xpose.msra.mxu0 0
          %1410 = vmatprep.subr.bf16.mxu0 0
          %1411 = vmatpush1.bf16.xpose.msra.mxu0 0
          %1412 = vmatprep.subr.bf16.mxu0 0
          %1413 = vmatpush1.bf16.xpose.msra.mxu0 0
          %1414 = vmatprep.mubr.bf16.mxu0 0
          %1415 = vmatmul.mubr.bf16.gmra.mrb[0].mxu0 %v1377
          %v1416 = vpop.f32.mrb[0].mxu0
          %v1417 = vadd.f32 %v1282, %v1416
          %v1418 = vpop.f32.mrb[0].mxu0
          %v1419 = vpop.f32.mrb[0].mxu0
          %v1420 = vpop.f32.mrb[0].mxu0
          %1421 = vdwg.mxu0
          %v1423 = vsel %vm1283, %v1239, 0
          %v1426 = vsel %vm1283, %v1265, 0
          %1428 = vmatprep.subr.bf16.mxu0 0
          %1429 = vmatpush1.bf16.xpose.msra.mxu0 %v1426
          %1430 = vmatprep.subr.bf16.mxu0 0
          %1431 = vmatpush1.bf16.xpose.msra.mxu0 0
          %1432 = vmatprep.subr.bf16.mxu0 0
          %1433 = vmatpush1.bf16.xpose.msra.mxu0 0
          %1434 = vmatprep.subr.bf16.mxu0 0
          %1435 = vmatpush1.bf16.xpose.msra.mxu0 0
          %1436 = vmatprep.subr.bf16.mxu0 0
          %1437 = vmatpush1.bf16.xpose.msra.mxu0 0
          %1438 = vmatprep.subr.bf16.mxu0 0
          %1439 = vmatpush1.bf16.xpose.msra.mxu0 0
          %1440 = vmatprep.subr.bf16.mxu0 0
          %1441 = vmatpush1.bf16.xpose.msra.mxu0 0
          %1442 = vmatprep.subr.bf16.mxu0 0
          %1443 = vmatpush1.bf16.xpose.msra.mxu0 0
          %1444 = vmatprep.subr.bf16.mxu0 0
          %1445 = vmatpush1.bf16.xpose.msra.mxu0 0
          %1446 = vmatprep.subr.bf16.mxu0 0
          %1447 = vmatpush1.bf16.xpose.msra.mxu0 0
          %1448 = vmatprep.subr.bf16.mxu0 0
          %1449 = vmatpush1.bf16.xpose.msra.mxu0 0
          %1450 = vmatprep.subr.bf16.mxu0 0
          %1451 = vmatpush1.bf16.xpose.msra.mxu0 0
          %1452 = vmatprep.subr.bf16.mxu0 0
          %1453 = vmatpush1.bf16.xpose.msra.mxu0 0
          %1454 = vmatprep.subr.bf16.mxu0 0
          %1455 = vmatpush1.bf16.xpose.msra.mxu0 0
          %1456 = vmatprep.subr.bf16.mxu0 0
          %1457 = vmatpush1.bf16.xpose.msra.mxu0 0
          %1458 = vmatprep.subr.bf16.mxu0 0
          %1459 = vmatpush1.bf16.xpose.msra.mxu0 0
          %1460 = vmatprep.mubr.bf16.mxu0 0
          %1461 = vmatmul.mubr.bf16.gmra.mrb[0].mxu0 %v1423
          %v1462 = vpop.f32.mrb[0].mxu0
          %v1463 = vadd.f32 %v1282, %v1462
          %v1464 = vpop.f32.mrb[0].mxu0
          %v1465 = vpop.f32.mrb[0].mxu0
          %v1466 = vpop.f32.mrb[0].mxu0
          %1467 = vdwg.mxu0
          %v1468 = vsel %vm1283, %v1325, -inf
          %1469 = vmax.xlane.f32.xlu0 %v1468
          %v1470 = vpop.xlane.xlu0 %1469
          %v1471 = vsel %vm1283, %v1371, -inf
          %1472 = vmax.xlane.f32.xlu0 %v1471
          %v1473 = vpop.xlane.xlu0 %1472
          %v1474 = vsel %vm1283, %v1417, -inf
          %1475 = vmax.xlane.f32.xlu0 %v1474
          %v1476 = vpop.xlane.xlu0 %1475
          %v1477 = vsel %vm1283, %v1463, -inf
          %1478 = vmax.xlane.f32.xlu0 %v1477
          %v1479 = vpop.xlane.xlu0 %1478
          %v1480 = vmax.f32 %v1247, %v1470
          %v1481 = vmax.f32 %v1248, %v1473
          %v1482 = vmax.f32 %v1249, %v1476
          %v1483 = vmax.f32 %v1250, %v1479
          %v1484 = vsub.f32 %v1247, %v1480
          %v1485 = vsub.f32 %v1248, %v1481
          %v1486 = vsub.f32 %v1249, %v1482
          %v1487 = vsub.f32 %v1250, %v1483
          %v1488 = vmul.f32 %v1484, 1.442695
          %v1489 = vpow.pop %v1488
          %v1490 = vmul.f32 %v1485, 1.442695
          %v1491 = vpow.pop %v1490
          %v1492 = vmul.f32 %v1486, 1.442695
          %v1493 = vpow.pop %v1492
          %v1494 = vmul.f32 %v1487, 1.442695
          %v1495 = vpow.pop %v1494
          %v1496 = vsub.f32 %v1325, %v1480
          %v1497 = vsub.f32 %v1371, %v1481
          %v1498 = vsub.f32 %v1417, %v1482
          %v1499 = vsub.f32 %v1463, %v1483
          %v1500 = vmul.f32 %v1496, 1.442695
          %v1501 = vpow.pop %v1500
          %v1502 = vmul.f32 %v1497, 1.442695
          %v1503 = vpow.pop %v1502
          %v1504 = vmul.f32 %v1498, 1.442695
          %v1505 = vpow.pop %v1504
          %v1506 = vmul.f32 %v1499, 1.442695
          %v1507 = vpow.pop %v1506
          %v1508 = vmul.f32 %v1489, %v1251
          %v1509 = vmul.f32 %v1491, %v1252
          %v1510 = vmul.f32 %v1493, %v1253
          %v1511 = vmul.f32 %v1495, %v1254
          %v1512 = vsel %vm1283, %v1501, 0.0
          %1513 = vadd.xlane.f32.xlu0 %v1512
          %v1514 = vpop.xlane.xlu0 %1513
          %v1515 = vsel %vm1283, %v1503, 0.0
          %1516 = vadd.xlane.f32.xlu0 %v1515
          %v1517 = vpop.xlane.xlu0 %1516
          %v1518 = vsel %vm1283, %v1505, 0.0
          %1519 = vadd.xlane.f32.xlu0 %v1518
          %v1520 = vpop.xlane.xlu0 %1519
          %v1521 = vsel %vm1283, %v1507, 0.0
          %1522 = vadd.xlane.f32.xlu0 %v1521
          %v1523 = vpop.xlane.xlu0 %1522
          %v1524 = vadd.f32 %v1508, %v1514
          %v1525 = vadd.f32 %v1509, %v1517
          %v1526 = vadd.f32 %v1510, %v1520
          %v1527 = vadd.f32 %v1511, %v1523
          %v1528 = vmul.f32 %v1489, %v1255
          %v1529 = vmul.f32 %v1491, %v1256
          %v1530 = vmul.f32 %v1493, %v1257
          %v1531 = vmul.f32 %v1495, %v1258
          %v1532 = vpack.c.bf16 %v1501, %v1501
          %v1533 = vpack.c.bf16 %v1503, %v1503
          %v1534 = vpack.c.bf16 %v1505, %v1505
          %v1535 = vpack.c.bf16 %v1507, %v1507
          %v1537 = vsel %vm1283, %v1532, 0
          %vm1539 = vcmask 1043456
          %v1541 = vsel %vm1539, %v1268, 0
          %1543 = vmatprep.subr.bf16.mxu0 0
          %1544 = vmatpush1.bf16.msra.mxu0 %v1541
          %1545 = vmatprep.subr.bf16.mxu0 0
          %1546 = vmatpush1.bf16.msra.mxu0 0
          %1547 = vmatprep.subr.bf16.mxu0 0
          %1548 = vmatpush1.bf16.msra.mxu0 0
          %1549 = vmatprep.subr.bf16.mxu0 0
          %1550 = vmatpush1.bf16.msra.mxu0 0
          %1551 = vmatprep.subr.bf16.mxu0 0
          %1552 = vmatpush1.bf16.msra.mxu0 0
          %1553 = vmatprep.subr.bf16.mxu0 0
          %1554 = vmatpush1.bf16.msra.mxu0 0
          %1555 = vmatprep.subr.bf16.mxu0 0
          %1556 = vmatpush1.bf16.msra.mxu0 0
          %1557 = vmatprep.subr.bf16.mxu0 0
          %1558 = vmatpush1.bf16.msra.mxu0 0
          %1559 = vmatprep.subr.bf16.mxu0 0
          %1560 = vmatpush1.bf16.msra.mxu0 0
          %1561 = vmatprep.subr.bf16.mxu0 0
          %1562 = vmatpush1.bf16.msra.mxu0 0
          %1563 = vmatprep.subr.bf16.mxu0 0
          %1564 = vmatpush1.bf16.msra.mxu0 0
          %1565 = vmatprep.subr.bf16.mxu0 0
          %1566 = vmatpush1.bf16.msra.mxu0 0
          %1567 = vmatprep.subr.bf16.mxu0 0
          %1568 = vmatpush1.bf16.msra.mxu0 0
          %1569 = vmatprep.subr.bf16.mxu0 0
          %1570 = vmatpush1.bf16.msra.mxu0 0
          %1571 = vmatprep.subr.bf16.mxu0 0
          %1572 = vmatpush1.bf16.msra.mxu0 0
          %1573 = vmatprep.subr.bf16.mxu0 0
          %1574 = vmatpush1.bf16.msra.mxu0 0
          %1575 = vmatprep.mubr.bf16.mxu0 0
          %1576 = vmatmul.mubr.bf16.gmra.mrb[0].mxu0 %v1537
          %v1577 = vpop.f32.mrb[0].mxu0
          %v1578 = vadd.f32 0.0, %v1577
          %v1579 = vpop.f32.mrb[0].mxu0
          %v1580 = vpop.f32.mrb[0].mxu0
          %v1581 = vpop.f32.mrb[0].mxu0
          %1582 = vdwg.mxu0
          %v1584 = vsel %vm1283, %v1533, 0
          %v1587 = vsel %vm1539, %v1269, 0
          %1589 = vmatprep.subr.bf16.mxu0 0
          %1590 = vmatpush1.bf16.msra.mxu0 %v1587
          %1591 = vmatprep.subr.bf16.mxu0 0
          %1592 = vmatpush1.bf16.msra.mxu0 0
          %1593 = vmatprep.subr.bf16.mxu0 0
          %1594 = vmatpush1.bf16.msra.mxu0 0
          %1595 = vmatprep.subr.bf16.mxu0 0
          %1596 = vmatpush1.bf16.msra.mxu0 0
          %1597 = vmatprep.subr.bf16.mxu0 0
          %1598 = vmatpush1.bf16.msra.mxu0 0
          %1599 = vmatprep.subr.bf16.mxu0 0
          %1600 = vmatpush1.bf16.msra.mxu0 0
          %1601 = vmatprep.subr.bf16.mxu0 0
          %1602 = vmatpush1.bf16.msra.mxu0 0
          %1603 = vmatprep.subr.bf16.mxu0 0
          %1604 = vmatpush1.bf16.msra.mxu0 0
          %1605 = vmatprep.subr.bf16.mxu0 0
          %1606 = vmatpush1.bf16.msra.mxu0 0
          %1607 = vmatprep.subr.bf16.mxu0 0
          %1608 = vmatpush1.bf16.msra.mxu0 0
          %1609 = vmatprep.subr.bf16.mxu0 0
          %1610 = vmatpush1.bf16.msra.mxu0 0
          %1611 = vmatprep.subr.bf16.mxu0 0
          %1612 = vmatpush1.bf16.msra.mxu0 0
          %1613 = vmatprep.subr.bf16.mxu0 0
          %1614 = vmatpush1.bf16.msra.mxu0 0
          %1615 = vmatprep.subr.bf16.mxu0 0
          %1616 = vmatpush1.bf16.msra.mxu0 0
          %1617 = vmatprep.subr.bf16.mxu0 0
          %1618 = vmatpush1.bf16.msra.mxu0 0
          %1619 = vmatprep.subr.bf16.mxu0 0
          %1620 = vmatpush1.bf16.msra.mxu0 0
          %1621 = vmatprep.mubr.bf16.mxu0 0
          %1622 = vmatmul.mubr.bf16.gmra.mrb[0].mxu0 %v1584
          %v1623 = vpop.f32.mrb[0].mxu0
          %v1624 = vadd.f32 0.0, %v1623
          %v1625 = vpop.f32.mrb[0].mxu0
          %v1626 = vpop.f32.mrb[0].mxu0
          %v1627 = vpop.f32.mrb[0].mxu0
          %1628 = vdwg.mxu0
          %v1630 = vsel %vm1283, %v1534, 0
          %v1633 = vsel %vm1539, %v1270, 0
          %1635 = vmatprep.subr.bf16.mxu0 0
          %1636 = vmatpush1.bf16.msra.mxu0 %v1633
          %1637 = vmatprep.subr.bf16.mxu0 0
          %1638 = vmatpush1.bf16.msra.mxu0 0
          %1639 = vmatprep.subr.bf16.mxu0 0
          %1640 = vmatpush1.bf16.msra.mxu0 0
          %1641 = vmatprep.subr.bf16.mxu0 0
          %1642 = vmatpush1.bf16.msra.mxu0 0
          %1643 = vmatprep.subr.bf16.mxu0 0
          %1644 = vmatpush1.bf16.msra.mxu0 0
          %1645 = vmatprep.subr.bf16.mxu0 0
          %1646 = vmatpush1.bf16.msra.mxu0 0
          %1647 = vmatprep.subr.bf16.mxu0 0
          %1648 = vmatpush1.bf16.msra.mxu0 0
          %1649 = vmatprep.subr.bf16.mxu0 0
          %1650 = vmatpush1.bf16.msra.mxu0 0
          %1651 = vmatprep.subr.bf16.mxu0 0
          %1652 = vmatpush1.bf16.msra.mxu0 0
          %1653 = vmatprep.subr.bf16.mxu0 0
          %1654 = vmatpush1.bf16.msra.mxu0 0
          %1655 = vmatprep.subr.bf16.mxu0 0
          %1656 = vmatpush1.bf16.msra.mxu0 0
          %1657 = vmatprep.subr.bf16.mxu0 0
          %1658 = vmatpush1.bf16.msra.mxu0 0
          %1659 = vmatprep.subr.bf16.mxu0 0
          %1660 = vmatpush1.bf16.msra.mxu0 0
          %1661 = vmatprep.subr.bf16.mxu0 0
          %1662 = vmatpush1.bf16.msra.mxu0 0
          %1663 = vmatprep.subr.bf16.mxu0 0
          %1664 = vmatpush1.bf16.msra.mxu0 0
          %1665 = vmatprep.subr.bf16.mxu0 0
          %1666 = vmatpush1.bf16.msra.mxu0 0
          %1667 = vmatprep.mubr.bf16.mxu0 0
          %1668 = vmatmul.mubr.bf16.gmra.mrb[0].mxu0 %v1630
          %v1669 = vpop.f32.mrb[0].mxu0
          %v1670 = vadd.f32 0.0, %v1669
          %v1671 = vpop.f32.mrb[0].mxu0
          %v1672 = vpop.f32.mrb[0].mxu0
          %v1673 = vpop.f32.mrb[0].mxu0
          %1674 = vdwg.mxu0
          %v1676 = vsel %vm1283, %v1535, 0
          %v1679 = vsel %vm1539, %v1271, 0
          %1681 = vmatprep.subr.bf16.mxu0 0
          %1682 = vmatpush1.bf16.msra.mxu0 %v1679
          %1683 = vmatprep.subr.bf16.mxu0 0
          %1684 = vmatpush1.bf16.msra.mxu0 0
          %1685 = vmatprep.subr.bf16.mxu0 0
          %1686 = vmatpush1.bf16.msra.mxu0 0
          %1687 = vmatprep.subr.bf16.mxu0 0
          %1688 = vmatpush1.bf16.msra.mxu0 0
          %1689 = vmatprep.subr.bf16.mxu0 0
          %1690 = vmatpush1.bf16.msra.mxu0 0
          %1691 = vmatprep.subr.bf16.mxu0 0
          %1692 = vmatpush1.bf16.msra.mxu0 0
          %1693 = vmatprep.subr.bf16.mxu0 0
          %1694 = vmatpush1.bf16.msra.mxu0 0
          %1695 = vmatprep.subr.bf16.mxu0 0
          %1696 = vmatpush1.bf16.msra.mxu0 0
          %1697 = vmatprep.subr.bf16.mxu0 0
          %1698 = vmatpush1.bf16.msra.mxu0 0
          %1699 = vmatprep.subr.bf16.mxu0 0
          %1700 = vmatpush1.bf16.msra.mxu0 0
          %1701 = vmatprep.subr.bf16.mxu0 0
          %1702 = vmatpush1.bf16.msra.mxu0 0
          %1703 = vmatprep.subr.bf16.mxu0 0
          %1704 = vmatpush1.bf16.msra.mxu0 0
          %1705 = vmatprep.subr.bf16.mxu0 0
          %1706 = vmatpush1.bf16.msra.mxu0 0
          %1707 = vmatprep.subr.bf16.mxu0 0
          %1708 = vmatpush1.bf16.msra.mxu0 0
          %1709 = vmatprep.subr.bf16.mxu0 0
          %1710 = vmatpush1.bf16.msra.mxu0 0
          %1711 = vmatprep.subr.bf16.mxu0 0
          %1712 = vmatpush1.bf16.msra.mxu0 0
          %1713 = vmatprep.mubr.bf16.mxu0 0
          %1714 = vmatmul.mubr.bf16.gmra.mrb[0].mxu0 %v1676
          %v1715 = vpop.f32.mrb[0].mxu0
          %v1716 = vadd.f32 0.0, %v1715
          %v1717 = vpop.f32.mrb[0].mxu0
          %v1718 = vpop.f32.mrb[0].mxu0
          %v1719 = vpop.f32.mrb[0].mxu0
          %1720 = vdwg.mxu0
          %v1721 = vadd.f32 %v1528, %v1578
          %v1722 = vadd.f32 %v1529, %v1624
          %v1723 = vadd.f32 %v1530, %v1670
          %v1724 = vadd.f32 %v1531, %v1716
        $region85: #{tpu_custom_call.1} parent=75 // loop_footer
          %s1244 = sadd.s32 %s1242, 1
        $region86: #{tpu_custom_call.1} parent=75 // loop_footer_branch
          %1241 = sbr.rel target = $region82
        $region87: #{tpu_custom_call.1} parent=75 // loop_exit
          _
        %v1725 = vrcp.pop %v1251
        %v1726 = vrcp.pop %v1252
        %v1727 = vrcp.pop %v1253
        %v1728 = vrcp.pop %v1254
        %v1729 = vmul.f32 %v1255, %v1725
        %v1730 = vmul.f32 %v1256, %v1726
        %v1731 = vmul.f32 %v1257, %v1727
        %v1732 = vmul.f32 %v1258, %v1728
        %v1733 = vpack.c.bf16 %v1729, %v1729
        %v1734 = vpack.c.bf16 %v1730, %v1730
        %v1735 = vpack.c.bf16 %v1731, %v1731
        %v1736 = vpack.c.bf16 %v1732, %v1732
        %v1737 = vld [vmem:[%s6] sm:$0xf]
        %s1738 = scalar_lea.vmem %s6, 4
        %v1739 = vld [vmem:[%s1738] sm:$0xf]
        %vm1740 = vcmask 64512
        %v1742 = vsel %vm1740, %v1734, 0
        %vm1744 = vcmask 1043456
        %v1746 = vsel %vm1744, %v1739, 0
        %1748 = vmatprep.subr.bf16.mxu0 0
        %1749 = vmatpush1.bf16.msra.mxu0 %v1746
        %1750 = vmatprep.subr.bf16.mxu0 0
        %1751 = vmatpush1.bf16.msra.mxu0 0
        %1752 = vmatprep.subr.bf16.mxu0 0
        %1753 = vmatpush1.bf16.msra.mxu0 0
        %1754 = vmatprep.subr.bf16.mxu0 0
        %1755 = vmatpush1.bf16.msra.mxu0 0
        %1756 = vmatprep.subr.bf16.mxu0 0
        %1757 = vmatpush1.bf16.msra.mxu0 0
        %1758 = vmatprep.subr.bf16.mxu0 0
        %1759 = vmatpush1.bf16.msra.mxu0 0
        %1760 = vmatprep.subr.bf16.mxu0 0
        %1761 = vmatpush1.bf16.msra.mxu0 0
        %1762 = vmatprep.subr.bf16.mxu0 0
        %1763 = vmatpush1.bf16.msra.mxu0 0
        %1764 = vmatprep.subr.bf16.mxu0 0
        %1765 = vmatpush1.bf16.msra.mxu0 0
        %1766 = vmatprep.subr.bf16.mxu0 0
        %1767 = vmatpush1.bf16.msra.mxu0 0
        %1768 = vmatprep.subr.bf16.mxu0 0
        %1769 = vmatpush1.bf16.msra.mxu0 0
        %1770 = vmatprep.subr.bf16.mxu0 0
        %1771 = vmatpush1.bf16.msra.mxu0 0
        %1772 = vmatprep.subr.bf16.mxu0 0
        %1773 = vmatpush1.bf16.msra.mxu0 0
        %1774 = vmatprep.subr.bf16.mxu0 0
        %1775 = vmatpush1.bf16.msra.mxu0 0
        %1776 = vmatprep.subr.bf16.mxu0 0
        %1777 = vmatpush1.bf16.msra.mxu0 0
        %1778 = vmatprep.subr.bf16.mxu0 0
        %1779 = vmatpush1.bf16.msra.mxu0 0
        %1780 = vmatprep.mubr.bf16.mxu0 0
        %1781 = vmatmul.mubr.bf16.gmra.mrb[0].mxu0 %v1742
        %v1782 = vpop.f32.mrb[0].mxu0
        %v1783 = vadd.f32 0.0, %v1782
        %v1784 = vpop.f32.mrb[0].mxu0
        %v1785 = vpop.f32.mrb[0].mxu0
        %v1786 = vpop.f32.mrb[0].mxu0
        %1787 = vdwg.mxu0
        %v1789 = vsel %vm1740, %v1733, 0
        %v1792 = vsel %vm1744, %v1737, 0
        %1794 = vmatprep.subr.bf16.mxu0 0
        %1795 = vmatpush1.bf16.msra.mxu0 %v1792
        %1796 = vmatprep.subr.bf16.mxu0 0
        %1797 = vmatpush1.bf16.msra.mxu0 0
        %1798 = vmatprep.subr.bf16.mxu0 0
        %1799 = vmatpush1.bf16.msra.mxu0 0
        %1800 = vmatprep.subr.bf16.mxu0 0
        %1801 = vmatpush1.bf16.msra.mxu0 0
        %1802 = vmatprep.subr.bf16.mxu0 0
        %1803 = vmatpush1.bf16.msra.mxu0 0
        %1804 = vmatprep.subr.bf16.mxu0 0
        %1805 = vmatpush1.bf16.msra.mxu0 0
        %1806 = vmatprep.subr.bf16.mxu0 0
        %1807 = vmatpush1.bf16.msra.mxu0 0
        %1808 = vmatprep.subr.bf16.mxu0 0
        %1809 = vmatpush1.bf16.msra.mxu0 0
        %1810 = vmatprep.subr.bf16.mxu0 0
        %1811 = vmatpush1.bf16.msra.mxu0 0
        %1812 = vmatprep.subr.bf16.mxu0 0
        %1813 = vmatpush1.bf16.msra.mxu0 0
        %1814 = vmatprep.subr.bf16.mxu0 0
        %1815 = vmatpush1.bf16.msra.mxu0 0
        %1816 = vmatprep.subr.bf16.mxu0 0
        %1817 = vmatpush1.bf16.msra.mxu0 0
        %1818 = vmatprep.subr.bf16.mxu0 0
        %1819 = vmatpush1.bf16.msra.mxu0 0
        %1820 = vmatprep.subr.bf16.mxu0 0
        %1821 = vmatpush1.bf16.msra.mxu0 0
        %1822 = vmatprep.subr.bf16.mxu0 0
        %1823 = vmatpush1.bf16.msra.mxu0 0
        %1824 = vmatprep.subr.bf16.mxu0 0
        %1825 = vmatpush1.bf16.msra.mxu0 0
        %1826 = vmatprep.mubr.bf16.mxu0 0
        %1827 = vmatmul.mubr.bf16.gmra.mrb[0].mxu0 %v1789
        %v1828 = vpop.f32.mrb[0].mxu0
        %v1829 = vadd.f32 %v1783, %v1828
        %v1830 = vpop.f32.mrb[0].mxu0
        %v1831 = vpop.f32.mrb[0].mxu0
        %v1832 = vpop.f32.mrb[0].mxu0
        %1833 = vdwg.mxu0
        %s1834 = scalar_lea.vmem %s6, 8
        %v1835 = vld [vmem:[%s1834] sm:$0xf]
        %v1837 = vsel %vm1740, %v1735, 0
        %v1840 = vsel %vm1744, %v1835, 0
        %1842 = vmatprep.subr.bf16.mxu0 0
        %1843 = vmatpush1.bf16.msra.mxu0 %v1840
        %1844 = vmatprep.subr.bf16.mxu0 0
        %1845 = vmatpush1.bf16.msra.mxu0 0
        %1846 = vmatprep.subr.bf16.mxu0 0
        %1847 = vmatpush1.bf16.msra.mxu0 0
        %1848 = vmatprep.subr.bf16.mxu0 0
        %1849 = vmatpush1.bf16.msra.mxu0 0
        %1850 = vmatprep.subr.bf16.mxu0 0
        %1851 = vmatpush1.bf16.msra.mxu0 0
        %1852 = vmatprep.subr.bf16.mxu0 0
        %1853 = vmatpush1.bf16.msra.mxu0 0
        %1854 = vmatprep.subr.bf16.mxu0 0
        %1855 = vmatpush1.bf16.msra.mxu0 0
        %1856 = vmatprep.subr.bf16.mxu0 0
        %1857 = vmatpush1.bf16.msra.mxu0 0
        %1858 = vmatprep.subr.bf16.mxu0 0
        %1859 = vmatpush1.bf16.msra.mxu0 0
        %1860 = vmatprep.subr.bf16.mxu0 0
        %1861 = vmatpush1.bf16.msra.mxu0 0
        %1862 = vmatprep.subr.bf16.mxu0 0
        %1863 = vmatpush1.bf16.msra.mxu0 0
        %1864 = vmatprep.subr.bf16.mxu0 0
        %1865 = vmatpush1.bf16.msra.mxu0 0
        %1866 = vmatprep.subr.bf16.mxu0 0
        %1867 = vmatpush1.bf16.msra.mxu0 0
        %1868 = vmatprep.subr.bf16.mxu0 0
        %1869 = vmatpush1.bf16.msra.mxu0 0
        %1870 = vmatprep.subr.bf16.mxu0 0
        %1871 = vmatpush1.bf16.msra.mxu0 0
        %1872 = vmatprep.subr.bf16.mxu0 0
        %1873 = vmatpush1.bf16.msra.mxu0 0
        %1874 = vmatprep.mubr.bf16.mxu0 0
        %1875 = vmatmul.mubr.bf16.gmra.mrb[0].mxu0 %v1837
        %v1876 = vpop.f32.mrb[0].mxu0
        %v1877 = vadd.f32 0.0, %v1876
        %v1878 = vpop.f32.mrb[0].mxu0
        %v1879 = vpop.f32.mrb[0].mxu0
        %v1880 = vpop.f32.mrb[0].mxu0
        %1881 = vdwg.mxu0
        %v1882 = vadd.f32 %v1829, %v1877
        %s1883 = scalar_lea.vmem %s6, 12
        %v1884 = vld [vmem:[%s1883] sm:$0xf]
        %v1886 = vsel %vm1740, %v1736, 0
        %v1889 = vsel %vm1744, %v1884, 0
        %1891 = vmatprep.subr.bf16.mxu0 0
        %1892 = vmatpush1.bf16.msra.mxu0 %v1889
        %1893 = vmatprep.subr.bf16.mxu0 0
        %1894 = vmatpush1.bf16.msra.mxu0 0
        %1895 = vmatprep.subr.bf16.mxu0 0
        %1896 = vmatpush1.bf16.msra.mxu0 0
        %1897 = vmatprep.subr.bf16.mxu0 0
        %1898 = vmatpush1.bf16.msra.mxu0 0
        %1899 = vmatprep.subr.bf16.mxu0 0
        %1900 = vmatpush1.bf16.msra.mxu0 0
        %1901 = vmatprep.subr.bf16.mxu0 0
        %1902 = vmatpush1.bf16.msra.mxu0 0
        %1903 = vmatprep.subr.bf16.mxu0 0
        %1904 = vmatpush1.bf16.msra.mxu0 0
        %1905 = vmatprep.subr.bf16.mxu0 0
        %1906 = vmatpush1.bf16.msra.mxu0 0
        %1907 = vmatprep.subr.bf16.mxu0 0
        %1908 = vmatpush1.bf16.msra.mxu0 0
        %1909 = vmatprep.subr.bf16.mxu0 0
        %1910 = vmatpush1.bf16.msra.mxu0 0
        %1911 = vmatprep.subr.bf16.mxu0 0
        %1912 = vmatpush1.bf16.msra.mxu0 0
        %1913 = vmatprep.subr.bf16.mxu0 0
        %1914 = vmatpush1.bf16.msra.mxu0 0
        %1915 = vmatprep.subr.bf16.mxu0 0
        %1916 = vmatpush1.bf16.msra.mxu0 0
        %1917 = vmatprep.subr.bf16.mxu0 0
        %1918 = vmatpush1.bf16.msra.mxu0 0
        %1919 = vmatprep.subr.bf16.mxu0 0
        %1920 = vmatpush1.bf16.msra.mxu0 0
        %1921 = vmatprep.subr.bf16.mxu0 0
        %1922 = vmatpush1.bf16.msra.mxu0 0
        %1923 = vmatprep.mubr.bf16.mxu0 0
        %1924 = vmatmul.mubr.bf16.gmra.mrb[0].mxu0 %v1886
        %v1925 = vpop.f32.mrb[0].mxu0
        %v1926 = vadd.f32 0.0, %v1925
        %v1927 = vpop.f32.mrb[0].mxu0
        %v1928 = vpop.f32.mrb[0].mxu0
        %v1929 = vpop.f32.mrb[0].mxu0
        %1930 = vdwg.mxu0
        %v1931 = vadd.f32 %v1882, %v1926
        %v1932 = vld [vmem:[%s7] sm:$0x1]
        %v1934 = vlaneseq
        %v1935 = vshrl.u32 %v1934, 7
        %v1936 = vsub.s32 0, %v1935
        %v1937 = vrot.slane %v1932, %v1936
        %v1939 = vadd.f32 %v1931, %v1937
        %v1940 = vadd.f32 %v999, %v1939
        %v1941 = vld [vmem:[%s8] sm:$0x1]
        %v1942 = vld [vmem:[%s9] sm:$0x1]
        %v1943 = vsel %vm1021, %v1940, 0.0
        %1944 = vadd.xlane.f32.xlu0 %v1943
        %v1945 = vpop.xlane.xlu0 %1944
        %v1946 = vrcp.pop 32.0
        %v1947 = vmul.f32 %v1945, %v1946
        %v1948 = vsub.f32 %v1940, %v1947
        %v1949 = vmul.f32 %v1948, %v1948
        %v1950 = vsel %vm1021, %v1949, 0.0
        %1951 = vadd.xlane.f32.xlu0 %v1950
        %v1952 = vpop.xlane.xlu0 %1951
        %v1953 = vmul.f32 %v1952, %v1946
        %v1954 = vadd.f32 %v1953, 1e-05
        %v1955 = vrsqrt.pop %v1954
        %v1956 = vmul.f32 %v1948, %v1955
        %v1958 = vlaneseq
        %v1959 = vshrl.u32 %v1958, 7
        %v1960 = vsub.s32 0, %v1959
        %v1961 = vrot.slane %v1941, %v1960
        %v1963 = vmul.f32 %v1956, %v1961
        %v1965 = vlaneseq
        %v1966 = vshrl.u32 %v1965, 7
        %v1967 = vsub.s32 0, %v1966
        %v1968 = vrot.slane %v1942, %v1967
        %v1970 = vadd.f32 %v1963, %v1968
        %v1971 = vpack.c.bf16 %v1970, %v1970
        %v1972 = vld [vmem:[%s10] sm:$0xf]
        %v1973 = vld [vmem:[%s10 + $0x4] sm:$0xf]
        %v1974 = vld [vmem:[%s10 + $0x8] sm:$0xf]
        %v1975 = vld [vmem:[%s10 + $0xc] sm:$0xf]
        %v1976 = vld [vmem:[%s11] sm:$0x1]
        %v1978 = vlaneseq
        %v1979 = vshrl.u32 %v1978, 7
        %v1980 = vsub.s32 0, %v1979
        %v1981 = vrot.slane %v1976, %v1980
        %v1987 = vunpack.c.l.b16 %v1972
        %v1988 = vunpack.c.l.b16 %v1973
        %v1989 = vunpack.c.l.b16 %v1974
        %v1990 = vunpack.c.l.b16 %v1975
        %v1991 = vpack.c.b16 %v1988, %v1987
        %v1992 = vpack.c.b16 %v1990, %v1989
        %v1996 = vsel %vm1021, %v1971, 0
        %1998 = vmatprep.subr.bf16.mxu0 0
        %1999 = vmatpush1.bf16.msra.mxu0 %v1991
        %2000 = vmatprep.subr.bf16.mxu0 0
        %2001 = vmatpush1.bf16.msra.mxu0 %v1992
        %2002 = vmatprep.subr.bf16.mxu0 0
        %2003 = vmatpush1.bf16.msra.mxu0 0
        %2004 = vmatprep.subr.bf16.mxu0 0
        %2005 = vmatpush1.bf16.msra.mxu0 0
        %2006 = vmatprep.subr.bf16.mxu0 0
        %2007 = vmatpush1.bf16.msra.mxu0 0
        %2008 = vmatprep.subr.bf16.mxu0 0
        %2009 = vmatpush1.bf16.msra.mxu0 0
        %2010 = vmatprep.subr.bf16.mxu0 0
        %2011 = vmatpush1.bf16.msra.mxu0 0
        %2012 = vmatprep.subr.bf16.mxu0 0
        %2013 = vmatpush1.bf16.msra.mxu0 0
        %2014 = vmatprep.subr.bf16.mxu0 0
        %2015 = vmatpush1.bf16.msra.mxu0 0
        %2016 = vmatprep.subr.bf16.mxu0 0
        %2017 = vmatpush1.bf16.msra.mxu0 0
        %2018 = vmatprep.subr.bf16.mxu0 0
        %2019 = vmatpush1.bf16.msra.mxu0 0
        %2020 = vmatprep.subr.bf16.mxu0 0
        %2021 = vmatpush1.bf16.msra.mxu0 0
        %2022 = vmatprep.subr.bf16.mxu0 0
        %2023 = vmatpush1.bf16.msra.mxu0 0
        %2024 = vmatprep.subr.bf16.mxu0 0
        %2025 = vmatpush1.bf16.msra.mxu0 0
        %2026 = vmatprep.subr.bf16.mxu0 0
        %2027 = vmatpush1.bf16.msra.mxu0 0
        %2028 = vmatprep.subr.bf16.mxu0 0
        %2029 = vmatpush1.bf16.msra.mxu0 0
        %2030 = vmatprep.mubr.bf16.mxu0 0
        %2031 = vmatmul.mubr.bf16.gmra.mrb[0].mxu0 %v1996
        %v2032 = vpop.f32.mrb[0].mxu0
        %v2033 = vadd.f32 %v1981, %v2032
        %v2034 = vpop.f32.mrb[0].mxu0
        %v2035 = vpop.f32.mrb[0].mxu0
        %v2036 = vpop.f32.mrb[0].mxu0
        %2037 = vdwg.mxu0
        %v2038 = vmul.f32 %v2033, 0.5
        %v2039 = vmul.f32 %v2033, 0.70710677
        %v2040 = verf.f32.pop %v2039
        %v2041 = vadd.f32 %v2040, 1.0
        %v2042 = vmul.f32 %v2038, %v2041
        %v2043 = vpack.c.bf16 %v2042, %v2042
        %v2044 = vld [vmem:[%s12] sm:$0xf]
        %v2045 = vld [vmem:[%s12 + $0x4] sm:$0xf]
        %v2046 = vld [vmem:[%s12 + $0x8] sm:$0xf]
        %v2047 = vld [vmem:[%s12 + $0xc] sm:$0xf]
        %v2048 = vld [vmem:[%s12 + $0x10] sm:$0xf]
        %v2049 = vld [vmem:[%s12 + $0x14] sm:$0xf]
        %v2050 = vld [vmem:[%s12 + $0x18] sm:$0xf]
        %v2051 = vld [vmem:[%s12 + $0x1c] sm:$0xf]
        %v2052 = vld [vmem:[%s12 + $0x20] sm:$0xf]
        %v2053 = vld [vmem:[%s12 + $0x24] sm:$0xf]
        %v2054 = vld [vmem:[%s12 + $0x28] sm:$0xf]
        %v2055 = vld [vmem:[%s12 + $0x2c] sm:$0xf]
        %v2056 = vld [vmem:[%s12 + $0x30] sm:$0xf]
        %v2057 = vld [vmem:[%s12 + $0x34] sm:$0xf]
        %v2058 = vld [vmem:[%s12 + $0x38] sm:$0xf]
        %v2059 = vld [vmem:[%s12 + $0x3c] sm:$0xf]
        %v2060 = vld [vmem:[%s13] sm:$0x1]
        %v2062 = vlaneseq
        %v2063 = vshrl.u32 %v2062, 7
        %v2064 = vsub.s32 0, %v2063
        %v2065 = vrot.slane %v2060, %v2064
        %v2083 = vunpack.c.l.b16 %v2044
        %v2084 = vunpack.c.l.b16 %v2045
        %v2085 = vunpack.c.l.b16 %v2046
        %v2086 = vunpack.c.l.b16 %v2047
        %v2087 = vunpack.c.l.b16 %v2048
        %v2088 = vunpack.c.l.b16 %v2049
        %v2089 = vunpack.c.l.b16 %v2050
        %v2090 = vunpack.c.l.b16 %v2051
        %v2091 = vunpack.c.l.b16 %v2052
        %v2092 = vunpack.c.l.b16 %v2053
        %v2093 = vunpack.c.l.b16 %v2054
        %v2094 = vunpack.c.l.b16 %v2055
        %v2095 = vunpack.c.l.b16 %v2056
        %v2096 = vunpack.c.l.b16 %v2057
        %v2097 = vunpack.c.l.b16 %v2058
        %v2098 = vunpack.c.l.b16 %v2059
        %v2099 = vpack.c.b16 %v2084, %v2083
        %v2100 = vpack.c.b16 %v2086, %v2085
        %v2101 = vpack.c.b16 %v2088, %v2087
        %v2102 = vpack.c.b16 %v2090, %v2089
        %v2103 = vpack.c.b16 %v2092, %v2091
        %v2104 = vpack.c.b16 %v2094, %v2093
        %v2105 = vpack.c.b16 %v2096, %v2095
        %v2106 = vpack.c.b16 %v2098, %v2097
        %2115 = vmatprep.subr.bf16.mxu0 0
        %2116 = vmatpush1.bf16.msra.mxu0 %v2099
        %2117 = vmatprep.subr.bf16.mxu0 0
        %2118 = vmatpush1.bf16.msra.mxu0 %v2100
        %2119 = vmatprep.subr.bf16.mxu0 0
        %2120 = vmatpush1.bf16.msra.mxu0 %v2101
        %2121 = vmatprep.subr.bf16.mxu0 0
        %2122 = vmatpush1.bf16.msra.mxu0 %v2102
        %2123 = vmatprep.subr.bf16.mxu0 0
        %2124 = vmatpush1.bf16.msra.mxu0 %v2103
        %2125 = vmatprep.subr.bf16.mxu0 0
        %2126 = vmatpush1.bf16.msra.mxu0 %v2104
        %2127 = vmatprep.subr.bf16.mxu0 0
        %2128 = vmatpush1.bf16.msra.mxu0 %v2105
        %2129 = vmatprep.subr.bf16.mxu0 0
        %2130 = vmatpush1.bf16.msra.mxu0 %v2106
        %2131 = vmatprep.subr.bf16.mxu0 0
        %2132 = vmatpush1.bf16.msra.mxu0 0
        %2133 = vmatprep.subr.bf16.mxu0 0
        %2134 = vmatpush1.bf16.msra.mxu0 0
        %2135 = vmatprep.subr.bf16.mxu0 0
        %2136 = vmatpush1.bf16.msra.mxu0 0
        %2137 = vmatprep.subr.bf16.mxu0 0
        %2138 = vmatpush1.bf16.msra.mxu0 0
        %2139 = vmatprep.subr.bf16.mxu0 0
        %2140 = vmatpush1.bf16.msra.mxu0 0
        %2141 = vmatprep.subr.bf16.mxu0 0
        %2142 = vmatpush1.bf16.msra.mxu0 0
        %2143 = vmatprep.subr.bf16.mxu0 0
        %2144 = vmatpush1.bf16.msra.mxu0 0
        %2145 = vmatprep.subr.bf16.mxu0 0
        %2146 = vmatpush1.bf16.msra.mxu0 0
        %2147 = vmatprep.mubr.bf16.mxu0 0
        %2148 = vmatmul.mubr.bf16.gmra.mrb[0].mxu0 %v2043
        %v2149 = vpop.f32.mrb[0].mxu0
        %v2150 = vadd.f32 %v2065, %v2149
        %v2151 = vpop.f32.mrb[0].mxu0
        %v2152 = vpop.f32.mrb[0].mxu0
        %v2153 = vpop.f32.mrb[0].mxu0
        %2154 = vdwg.mxu0
        %v2155 = vadd.f32 %v1940, %v2150
        %2156 = vst.msk [vmem:[%s472] sm:$0xff] %vm1021, %v2155
        %s2157 = sand.u32 %s349, 1
        %s2158 = scalar_lea.sflag [#allocation6], %s2157
        %s2159 = sand.u32 %s349, 1
        %s2160 = smul.addr %s2159, 8
        %s2161 = scalar_lea.vmem [#allocation5], %s2160
        // Predicated region
        $region88: #{tpu_custom_call.1} parent=75 // pred_check
          %p2162 = pneg %p359
        $region89: #{tpu_custom_call.1} parent=75 // pred_check_branch
          %2164 = sbr.rel (%p2162) target = $region91
        $region90: #{tpu_custom_call.1} parent=75 // pred_region
          %s2166 = ssub.s32 128, 128
          %2167 = vsyncadd %s2158, %s2166
          %s2168 = sadd.s32 %s33, %s32
          %s2169 = smul.addr %s2168, 128
          %s2170 = scalar_lea.hbm %s14, %s2169
          %s2172 = sshll.u32 %s2161, 4
          %s2173 = int_to_ptr.vmem [resolvable:$true] %s2172
          %2175 = dma.vmem_to_hbm [thread:$0]  %s2173, 128, %s2170, %s2158
        $region91: #{tpu_custom_call.1} parent=75 // pred_fallthru
          _
      $region76: #{tpu_custom_call.1} parent=5 // pred_fallthru
        _
      %p2176 = scmp.le.s32.totalorder 2, %s23
      // Predicated region
      $region92: #{tpu_custom_call.1} parent=5 // pred_check
        %p2177 = pneg %p2176
      $region93: #{tpu_custom_call.1} parent=5 // pred_check_branch
        %2179 = sbr.rel (%p2177) target = $region95
      $region94: #{tpu_custom_call.1} parent=5 // pred_region
        %s2180 = ssub.s32 %s23, 2
        // Predicated region
        $region96: #{tpu_custom_call.1} parent=94 // pred_check
          %p2181 = pneg %p365
        $region97: #{tpu_custom_call.1} parent=94 // pred_check_branch
          %2183 = sbr.rel (%p2181) target = $region99
        $region98: #{tpu_custom_call.1} parent=94 // pred_region
          %s2184 = sand.u32 %s350, 1
          %s2185 = scalar_lea.sflag [#allocation6], %s2184
          %s2186 = sand.u32 %s350, 1
          %s2187 = smul.addr %s2186, 8
          %s2188 = scalar_lea.vmem [#allocation5], %s2187
          %2189 = dma.done %s2185, 128
        $region99: #{tpu_custom_call.1} parent=94 // pred_fallthru
          _
      $region95: #{tpu_custom_call.1} parent=5 // pred_fallthru
        _
    $region6: #{tpu_custom_call.1} parent=1 // loop_footer
      %s27 = sadd.s32 1, %s23
    $region7: #{tpu_custom_call.1} parent=1 // loop_footer_branch
      %22 = sbr.rel target = $region3
    $region8: #{tpu_custom_call.1} parent=1 // loop_exit
      _
    %2190 = vsyncpa [#allocation6], 1
    %s2191 = scalar_lea.sflag [#allocation6], 1
    %2192 = vsyncpa %s2191, 1

// kernel: tpu_custom_call.1
$region0: #{tpu_custom_call.1}
  #allocation0 [shape = 'u32[]', space=smem, size = 0x4, offset = 0x4, fixed_abs, tag = 'smem constant byte address 0x4 - core index']
  #allocation1 [shape = 'u32[144,128]{1,0:T(1,128)}', space=vmem, size = 0x12000, scoped, tag = 'internal scratch']
  #allocation2 [shape = 'bf16[8,32]{1,0:T(8,128)(2,1)}', space=vmem, size = 0x800, scoped, tag = 'scratch operand']
  #allocation3 [shape = 'bf16[1,4,8,8]{3,2,1,0:T(8,128)(2,1)}', space=vmem, size = 0x2000, scoped, tag = 'scratch operand']
  #allocation4 [shape = 'bf16[1,4,8,8]{3,2,1,0:T(8,128)(2,1)}', space=vmem, size = 0x2000, scoped, tag = 'scratch operand']
  %s0 = inlined_call_operand.vmem [shape: f32[2,8,32], index: 0, kind: input, shape index: {}]
  %s1 = inlined_call_operand.vmem [shape: f32[1,32], index: 1, kind: input, shape index: {}]
  %s2 = inlined_call_operand.vmem [shape: f32[1,32], index: 2, kind: input, shape index: {}]
  %s3 = inlined_call_operand.vmem [shape: bf16[4,32,8], index: 3, kind: input, shape index: {}]
  %s4 = inlined_call_operand.vmem [shape: bf16[4,32,8], index: 4, kind: input, shape index: {}]
  %s5 = inlined_call_operand.vmem [shape: bf16[4,32,8], index: 5, kind: input, shape index: {}]
  %s6 = inlined_call_operand.vmem [shape: bf16[4,8,32], index: 6, kind: input, shape index: {}]
  %s7 = inlined_call_operand.vmem [shape: f32[1,32], index: 7, kind: input, shape index: {}]
  %s8 = inlined_call_operand.vmem [shape: f32[1,32], index: 8, kind: input, shape index: {}]
  %s9 = inlined_call_operand.vmem [shape: f32[1,32], index: 9, kind: input, shape index: {}]
  %s10 = inlined_call_operand.vmem [shape: bf16[32,128], index: 10, kind: input, shape index: {}]
  %s11 = inlined_call_operand.vmem [shape: f32[1,128], index: 11, kind: input, shape index: {}]
  %s12 = inlined_call_operand.vmem [shape: bf16[128,32], index: 12, kind: input, shape index: {}]
  %s13 = inlined_call_operand.vmem [shape: f32[1,32], index: 13, kind: input, shape index: {}]
  %s14 = inlined_call_operand.hbm [shape: f32[2,8,32], index: 14, kind: output, shape index: {}]
  %s15 = sld [smem:[#allocation0]]
  $region100: #{tpu_custom_call.1} parent=0
    _
  %s17 = ssub.s32 1, %s15
  %s18 = scalar_select 0, %s17, %s15
  $region1: #{tpu_custom_call.1} parent=0
    #allocation5 [shape = 'u8[8192]{0}', space=vmem, size = 0x2000, scoped, tag = 'output window, operand 0']
    #allocation6 [shape = 's32[2]{0}', space=sflag, size = 0x8, scoped, tag = 'scoped memory for tpu_custom_call.1']
    %19 = vsyncpa [#allocation6], 0
    %s20 = scalar_lea.sflag [#allocation6], 1
    %21 = vsyncpa %s20, 0
    loop: start=0, step=1, limit=4
    $region2: #{tpu_custom_call.1} parent=1 // loop_pre_header
      _
    $region3: #{tpu_custom_call.1} parent=1 // loop_header
      %s23 = sphi 0, %s27
      %p24 = scmp.ge.s32.totalorder %s23, 4
      %s30 = sphi 0, %s42
      %s31 = sphi 0, %s38
      %s32 = sphi 0, %s30
      %s33 = sphi 0, %s31
      %s34 = sphi 0, %s32
      %s35 = sphi 0, %s33
      %s45 = sphi 0, %s47
      %s48 = sphi 0, %s45
      %s49 = sphi 0, %s48
      %s65 = sphi 0, %s49
      %s69 = sphi 0, %s69
      %s71 = sphi 0, %s69
      %s72 = sphi 0, %s71
      %s86 = sphi 0, %s72
      %s90 = sphi 0, %s90
      %s92 = sphi 0, %s90
      %s93 = sphi 0, %s92
      %s107 = sphi 0, %s93
      %s111 = sphi 0, %s111
      %s113 = sphi 0, %s111
      %s114 = sphi 0, %s113
      %s128 = sphi 0, %s114
      %s132 = sphi 0, %s132
      %s134 = sphi 0, %s132
      %s135 = sphi 0, %s134
      %s149 = sphi 0, %s135
      %s153 = sphi 0, %s153
      %s155 = sphi 0, %s153
      %s156 = sphi 0, %s155
      %s170 = sphi 0, %s156
      %s174 = sphi 0, %s174
      %s176 = sphi 0, %s174
      %s177 = sphi 0, %s176
      %s191 = sphi 0, %s177
      %s195 = sphi 0, %s195
      %s197 = sphi 0, %s195
      %s198 = sphi 0, %s197
      %s212 = sphi 0, %s198
      %s216 = sphi 0, %s216
      %s218 = sphi 0, %s216
      %s219 = sphi 0, %s218
      %s233 = sphi 0, %s219
      %s237 = sphi 0, %s237
      %s239 = sphi 0, %s237
      %s240 = sphi 0, %s239
      %s254 = sphi 0, %s240
      %s258 = sphi 0, %s258
      %s260 = sphi 0, %s258
      %s261 = sphi 0, %s260
      %s275 = sphi 0, %s261
      %s279 = sphi 0, %s279
      %s281 = sphi 0, %s279
      %s282 = sphi 0, %s281
      %s296 = sphi 0, %s282
      %s300 = sphi 0, %s300
      %s302 = sphi 0, %s300
      %s303 = sphi 0, %s302
      %s317 = sphi 0, %s303
      %s321 = sphi 0, %s321
      %s323 = sphi 0, %s321
      %s324 = sphi 0, %s323
      %s338 = sphi 0, %s324
      %s346 = sphi 0, %s348
      %s349 = sphi 0, %s346
      %s350 = sphi 0, %s349
      %s366 = sphi 0, %s350
    $region4: #{tpu_custom_call.1} parent=1 // loop_header_branch
      %26 = sbr.rel (%p24) target = $region8
    $region5: #{tpu_custom_call.1} parent=1 // loop_body
      %s28 = ssub.s32 %s23, 1
      %s29 = ssub.s32 %s23, 2
      %s36 = sadd.s32 1, %s31
      %p37 = scmp.ge.s32.totalorder %s36, 1
      %s38 = scalar_select %p37, 0, %s36
      %s39 = sadd.s32 1, %s30
      %s40 = scalar_select %p37, %s39, %s30
      %p41 = scmp.ge.s32.totalorder %s40, 2
      %s42 = scalar_select %p41, 0, %s40
      %s43 = ssub.s32 %s30, %s42
      %p44 = scmp.eq.s32.totalorder %s43, 0
      %s46 = sadd.s32 %s45, 1
      %s47 = scalar_select %p44, %s45, %s46
      %p50 = pneg %p44
      %p51 = scmp.eq.s32.totalorder %s23, 1
      %p52 = por %p50, %p51
      %p53 = scmp.ne.s32.totalorder %s45, %s48
      %p54 = scmp.eq.s32.totalorder %s23, 0
      %p55 = por %p53, %p54
      %p56 = scmp.ne.s32.totalorder %s45, %s48
      %p57 = scmp.eq.s32.totalorder %s28, 1
      %p58 = por %p56, %p57
      %p59 = scmp.ne.s32.totalorder %s48, %s49
      %p60 = scmp.eq.s32.totalorder %s28, 0
      %p61 = por %p59, %p60
      %p62 = scmp.ne.s32.totalorder %s48, %s49
      %p63 = scmp.eq.s32.totalorder %s29, 1
      %p64 = por %p62, %p63
      %p66 = scmp.ne.s32.totalorder %s49, %s65
      %p67 = scmp.eq.s32.totalorder %s29, 0
      %p68 = por %p66, %p67
      %s70 = sadd.s32 %s69, 1
      %p73 = scmp.eq.s32.totalorder %s23, 1
      %p74 = scmp.ne.s32.totalorder %s69, %s71
      %p75 = scmp.eq.s32.totalorder %s23, 0
      %p76 = por %p74, %p75
      %p77 = scmp.ne.s32.totalorder %s69, %s71
      %p78 = scmp.eq.s32.totalorder %s28, 1
      %p79 = por %p77, %p78
      %p80 = scmp.ne.s32.totalorder %s71, %s72
      %p81 = scmp.eq.s32.totalorder %s28, 0
      %p82 = por %p80, %p81
      %p83 = scmp.ne.s32.totalorder %s71, %s72
      %p84 = scmp.eq.s32.totalorder %s29, 1
      %p85 = por %p83, %p84
      %p87 = scmp.ne.s32.totalorder %s72, %s86
      %p88 = scmp.eq.s32.totalorder %s29, 0
      %p89 = por %p87, %p88
      %s91 = sadd.s32 %s90, 1
      %p94 = scmp.eq.s32.totalorder %s23, 1
      %p95 = scmp.ne.s32.totalorder %s90, %s92
      %p96 = scmp.eq.s32.totalorder %s23, 0
      %p97 = por %p95, %p96
      %p98 = scmp.ne.s32.totalorder %s90, %s92
      %p99 = scmp.eq.s32.totalorder %s28, 1
      %p100 = por %p98, %p99
      %p101 = scmp.ne.s32.totalorder %s92, %s93
      %p102 = scmp.eq.s32.totalorder %s28, 0
      %p103 = por %p101, %p102
      %p104 = scmp.ne.s32.totalorder %s92, %s93
      %p105 = scmp.eq.s32.totalorder %s29, 1
      %p106 = por %p104, %p105
      %p108 = scmp.ne.s32.totalorder %s93, %s107
      %p109 = scmp.eq.s32.totalorder %s29, 0
      %p110 = por %p108, %p109
      %s112 = sadd.s32 %s111, 1
      %p115 = scmp.eq.s32.totalorder %s23, 1
      %p116 = scmp.ne.s32.totalorder %s111, %s113
      %p117 = scmp.eq.s32.totalorder %s23, 0
      %p118 = por %p116, %p117
      %p119 = scmp.ne.s32.totalorder %s111, %s113
      %p120 = scmp.eq.s32.totalorder %s28, 1
      %p121 = por %p119, %p120
      %p122 = scmp.ne.s32.totalorder %s113, %s114
      %p123 = scmp.eq.s32.totalorder %s28, 0
      %p124 = por %p122, %p123
      %p125 = scmp.ne.s32.totalorder %s113, %s114
      %p126 = scmp.eq.s32.totalorder %s29, 1
      %p127 = por %p125, %p126
      %p129 = scmp.ne.s32.totalorder %s114, %s128
      %p130 = scmp.eq.s32.totalorder %s29, 0
      %p131 = por %p129, %p130
      %s133 = sadd.s32 %s132, 1
      %p136 = scmp.eq.s32.totalorder %s23, 1
      %p137 = scmp.ne.s32.totalorder %s132, %s134
      %p138 = scmp.eq.s32.totalorder %s23, 0
      %p139 = por %p137, %p138
      %p140 = scmp.ne.s32.totalorder %s132, %s134
      %p141 = scmp.eq.s32.totalorder %s28, 1
      %p142 = por %p140, %p141
      %p143 = scmp.ne.s32.totalorder %s134, %s135
      %p144 = scmp.eq.s32.totalorder %s28, 0
      %p145 = por %p143, %p144
      %p146 = scmp.ne.s32.totalorder %s134, %s135
      %p147 = scmp.eq.s32.totalorder %s29, 1
      %p148 = por %p146, %p147
      %p150 = scmp.ne.s32.totalorder %s135, %s149
      %p151 = scmp.eq.s32.totalorder %s29, 0
      %p152 = por %p150, %p151
      %s154 = sadd.s32 %s153, 1
      %p157 = scmp.eq.s32.totalorder %s23, 1
      %p158 = scmp.ne.s32.totalorder %s153, %s155
      %p159 = scmp.eq.s32.totalorder %s23, 0
      %p160 = por %p158, %p159
      %p161 = scmp.ne.s32.totalorder %s153, %s155
      %p162 = scmp.eq.s32.totalorder %s28, 1
      %p163 = por %p161, %p162
      %p164 = scmp.ne.s32.totalorder %s155, %s156
      %p165 = scmp.eq.s32.totalorder %s28, 0
      %p166 = por %p164, %p165
      %p167 = scmp.ne.s32.totalorder %s155, %s156
      %p168 = scmp.eq.s32.totalorder %s29, 1
      %p169 = por %p167, %p168
      %p171 = scmp.ne.s32.totalorder %s156, %s170
      %p172 = scmp.eq.s32.totalorder %s29, 0
      %p173 = por %p171, %p172
      %s175 = sadd.s32 %s174, 1
      %p178 = scmp.eq.s32.totalorder %s23, 1
      %p179 = scmp.ne.s32.totalorder %s174, %s176
      %p180 = scmp.eq.s32.totalorder %s23, 0
      %p181 = por %p179, %p180
      %p182 = scmp.ne.s32.totalorder %s174, %s176
      %p183 = scmp.eq.s32.totalorder %s28, 1
      %p184 = por %p182, %p183
      %p185 = scmp.ne.s32.totalorder %s176, %s177
      %p186 = scmp.eq.s32.totalorder %s28, 0
      %p187 = por %p185, %p186
      %p188 = scmp.ne.s32.totalorder %s176, %s177
      %p189 = scmp.eq.s32.totalorder %s29, 1
      %p190 = por %p188, %p189
      %p192 = scmp.ne.s32.totalorder %s177, %s191
      %p193 = scmp.eq.s32.totalorder %s29, 0
      %p194 = por %p192, %p193
      %s196 = sadd.s32 %s195, 1
      %p199 = scmp.eq.s32.totalorder %s23, 1
      %p200 = scmp.ne.s32.totalorder %s195, %s197
      %p201 = scmp.eq.s32.totalorder %s23, 0
      %p202 = por %p200, %p201
      %p203 = scmp.ne.s32.totalorder %s195, %s197
      %p204 = scmp.eq.s32.totalorder %s28, 1
      %p205 = por %p203, %p204
      %p206 = scmp.ne.s32.totalorder %s197, %s198
      %p207 = scmp.eq.s32.totalorder %s28, 0
      %p208 = por %p206, %p207
      %p209 = scmp.ne.s32.totalorder %s197, %s198
      %p210 = scmp.eq.s32.totalorder %s29, 1
      %p211 = por %p209, %p210
      %p213 = scmp.ne.s32.totalorder %s198, %s212
      %p214 = scmp.eq.s32.totalorder %s29, 0
      %p215 = por %p213, %p214
      %s217 = sadd.s32 %s216, 1
      %p220 = scmp.eq.s32.totalorder %s23, 1
      %p221 = scmp.ne.s32.totalorder %s216, %s218
      %p222 = scmp.eq.s32.totalorder %s23, 0
      %p223 = por %p221, %p222
      %p224 = scmp.ne.s32.totalorder %s216, %s218
      %p225 = scmp.eq.s32.totalorder %s28, 1
      %p226 = por %p224, %p225
      %p227 = scmp.ne.s32.totalorder %s218, %s219
      %p228 = scmp.eq.s32.totalorder %s28, 0
      %p229 = por %p227, %p228
      %p230 = scmp.ne.s32.totalorder %s218, %s219
      %p231 = scmp.eq.s32.totalorder %s29, 1
      %p232 = por %p230, %p231
      %p234 = scmp.ne.s32.totalorder %s219, %s233
      %p235 = scmp.eq.s32.totalorder %s29, 0
      %p236 = por %p234, %p235
      %s238 = sadd.s32 %s237, 1
      %p241 = scmp.eq.s32.totalorder %s23, 1
      %p242 = scmp.ne.s32.totalorder %s237, %s239
      %p243 = scmp.eq.s32.totalorder %s23, 0
      %p244 = por %p242, %p243
      %p245 = scmp.ne.s32.totalorder %s237, %s239
      %p246 = scmp.eq.s32.totalorder %s28, 1
      %p247 = por %p245, %p246
      %p248 = scmp.ne.s32.totalorder %s239, %s240
      %p249 = scmp.eq.s32.totalorder %s28, 0
      %p250 = por %p248, %p249
      %p251 = scmp.ne.s32.totalorder %s239, %s240
      %p252 = scmp.eq.s32.totalorder %s29, 1
      %p253 = por %p251, %p252
      %p255 = scmp.ne.s32.totalorder %s240, %s254
      %p256 = scmp.eq.s32.totalorder %s29, 0
      %p257 = por %p255, %p256
      %s259 = sadd.s32 %s258, 1
      %p262 = scmp.eq.s32.totalorder %s23, 1
      %p263 = scmp.ne.s32.totalorder %s258, %s260
      %p264 = scmp.eq.s32.totalorder %s23, 0
      %p265 = por %p263, %p264
      %p266 = scmp.ne.s32.totalorder %s258, %s260
      %p267 = scmp.eq.s32.totalorder %s28, 1
      %p268 = por %p266, %p267
      %p269 = scmp.ne.s32.totalorder %s260, %s261
      %p270 = scmp.eq.s32.totalorder %s28, 0
      %p271 = por %p269, %p270
      %p272 = scmp.ne.s32.totalorder %s260, %s261
      %p273 = scmp.eq.s32.totalorder %s29, 1
      %p274 = por %p272, %p273
      %p276 = scmp.ne.s32.totalorder %s261, %s275
      %p277 = scmp.eq.s32.totalorder %s29, 0
      %p278 = por %p276, %p277
      %s280 = sadd.s32 %s279, 1
      %p283 = scmp.eq.s32.totalorder %s23, 1
      %p284 = scmp.ne.s32.totalorder %s279, %s281
      %p285 = scmp.eq.s32.totalorder %s23, 0
      %p286 = por %p284, %p285
      %p287 = scmp.ne.s32.totalorder %s279, %s281
      %p288 = scmp.eq.s32.totalorder %s28, 1
      %p289 = por %p287, %p288
      %p290 = scmp.ne.s32.totalorder %s281, %s282
      %p291 = scmp.eq.s32.totalorder %s28, 0
      %p292 = por %p290, %p291
      %p293 = scmp.ne.s32.totalorder %s281, %s282
      %p294 = scmp.eq.s32.totalorder %s29, 1
      %p295 = por %p293, %p294
      %p297 = scmp.ne.s32.totalorder %s282, %s296
      %p298 = scmp.eq.s32.totalorder %s29, 0
      %p299 = por %p297, %p298
      %s301 = sadd.s32 %s300, 1
      %p304 = scmp.eq.s32.totalorder %s23, 1
      %p305 = scmp.ne.s32.totalorder %s300, %s302
      %p306 = scmp.eq.s32.totalorder %s23, 0
      %p307 = por %p305, %p306
      %p308 = scmp.ne.s32.totalorder %s300, %s302
      %p309 = scmp.eq.s32.totalorder %s28, 1
      %p310 = por %p308, %p309
      %p311 = scmp.ne.s32.totalorder %s302, %s303
      %p312 = scmp.eq.s32.totalorder %s28, 0
      %p313 = por %p311, %p312
      %p314 = scmp.ne.s32.totalorder %s302, %s303
      %p315 = scmp.eq.s32.totalorder %s29, 1
      %p316 = por %p314, %p315
      %p318 = scmp.ne.s32.totalorder %s303, %s317
      %p319 = scmp.eq.s32.totalorder %s29, 0
      %p320 = por %p318, %p319
      %s322 = sadd.s32 %s321, 1
      %p325 = scmp.eq.s32.totalorder %s23, 1
      %p326 = scmp.ne.s32.totalorder %s321, %s323
      %p327 = scmp.eq.s32.totalorder %s23, 0
      %p328 = por %p326, %p327
      %p329 = scmp.ne.s32.totalorder %s321, %s323
      %p330 = scmp.eq.s32.totalorder %s28, 1
      %p331 = por %p329, %p330
      %p332 = scmp.ne.s32.totalorder %s323, %s324
      %p333 = scmp.eq.s32.totalorder %s28, 0
      %p334 = por %p332, %p333
      %p335 = scmp.ne.s32.totalorder %s323, %s324
      %p336 = scmp.eq.s32.totalorder %s29, 1
      %p337 = por %p335, %p336
      %p339 = scmp.ne.s32.totalorder %s324, %s338
      %p340 = scmp.eq.s32.totalorder %s29, 0
      %p341 = por %p339, %p340
      %s342 = ssub.s32 %s30, %s42
      %s343 = ssub.s32 %s31, %s38
      %s344 = sor.u32 %s342, %s343
      %p345 = scmp.eq.s32.totalorder %s344, 0
      %s347 = sadd.s32 %s346, 1
      %s348 = scalar_select %p345, %s346, %s347
      %p351 = pneg %p345
      %p352 = scmp.eq.s32.totalorder %s23, 1
      %p353 = por %p351, %p352
      %p354 = scmp.ne.s32.totalorder %s346, %s349
      %p355 = scmp.eq.s32.totalorder %s23, 0
      %p356 = por %p354, %p355
      %p357 = scmp.ne.s32.totalorder %s346, %s349
      %p358 = scmp.eq.s32.totalorder %s28, 1
      %p359 = por %p357, %p358
      %p360 = scmp.ne.s32.totalorder %s349, %s350
      %p361 = scmp.eq.s32.totalorder %s28, 0
      %p362 = por %p360, %p361
      %p363 = scmp.ne.s32.totalorder %s349, %s350
      %p364 = scmp.eq.s32.totalorder %s29, 1
      %p365 = por %p363, %p364
      %p367 = scmp.ne.s32.totalorder %s350, %s366
      %p368 = scmp.eq.s32.totalorder %s29, 0
      %p369 = por %p367, %p368
      %p370 = scmp.le.s32.totalorder 1, %s23
      %p371 = scmp.lt.s32.totalorder %s23, 3
      %p372 = pnand %p370, %p371
      %p373 = pneg %p372
      // Predicated region
      $region9: #{tpu_custom_call.1} parent=5 // pred_check
        _
      $region10: #{tpu_custom_call.1} parent=5 // pred_check_branch
        %375 = sbr.rel (%p372) target = $region12
      $region11: #{tpu_custom_call.1} parent=5 // pred_region
        %s376 = ssub.s32 %s23, 1
        // Predicated region
        $region13: #{tpu_custom_call.1} parent=11 // pred_check
          %p377 = pneg %p82
        $region14: #{tpu_custom_call.1} parent=11 // pred_check_branch
          %379 = sbr.rel (%p377) target = $region16
        $region15: #{tpu_custom_call.1} parent=11 // pred_region
          _
        $region16: #{tpu_custom_call.1} parent=11 // pred_fallthru
          _
        // Predicated region
        $region17: #{tpu_custom_call.1} parent=11 // pred_check
          %p380 = pneg %p103
        $region18: #{tpu_custom_call.1} parent=11 // pred_check_branch
          %382 = sbr.rel (%p380) target = $region20
        $region19: #{tpu_custom_call.1} parent=11 // pred_region
          _
        $region20: #{tpu_custom_call.1} parent=11 // pred_fallthru
          _
        // Predicated region
        $region21: #{tpu_custom_call.1} parent=11 // pred_check
          %p383 = pneg %p124
        $region22: #{tpu_custom_call.1} parent=11 // pred_check_branch
          %385 = sbr.rel (%p383) target = $region24
        $region23: #{tpu_custom_call.1} parent=11 // pred_region
          _
        $region24: #{tpu_custom_call.1} parent=11 // pred_fallthru
          _
        // Predicated region
        $region25: #{tpu_custom_call.1} parent=11 // pred_check
          %p386 = pneg %p145
        $region26: #{tpu_custom_call.1} parent=11 // pred_check_branch
          %388 = sbr.rel (%p386) target = $region28
        $region27: #{tpu_custom_call.1} parent=11 // pred_region
          _
        $region28: #{tpu_custom_call.1} parent=11 // pred_fallthru
          _
        // Predicated region
        $region29: #{tpu_custom_call.1} parent=11 // pred_check
          %p389 = pneg %p166
        $region30: #{tpu_custom_call.1} parent=11 // pred_check_branch
          %391 = sbr.rel (%p389) target = $region32
        $region31: #{tpu_custom_call.1} parent=11 // pred_region
          _
        $region32: #{tpu_custom_call.1} parent=11 // pred_fallthru
          _
        // Predicated region
        $region33: #{tpu_custom_call.1} parent=11 // pred_check
          %p392 = pneg %p187
        $region34: #{tpu_custom_call.1} parent=11 // pred_check_branch
          %394 = sbr.rel (%p392) target = $region36
        $region35: #{tpu_custom_call.1} parent=11 // pred_region
          _
        $region36: #{tpu_custom_call.1} parent=11 // pred_fallthru
          _
        // Predicated region
        $region37: #{tpu_custom_call.1} parent=11 // pred_check
          %p395 = pneg %p208
        $region38: #{tpu_custom_call.1} parent=11 // pred_check_branch
          %397 = sbr.rel (%p395) target = $region40
        $region39: #{tpu_custom_call.1} parent=11 // pred_region
          _
        $region40: #{tpu_custom_call.1} parent=11 // pred_fallthru
          _
        // Predicated region
        $region41: #{tpu_custom_call.1} parent=11 // pred_check
          %p398 = pneg %p229
        $region42: #{tpu_custom_call.1} parent=11 // pred_check_branch
          %400 = sbr.rel (%p398) target = $region44
        $region43: #{tpu_custom_call.1} parent=11 // pred_region
          _
        $region44: #{tpu_custom_call.1} parent=11 // pred_fallthru
          _
        // Predicated region
        $region45: #{tpu_custom_call.1} parent=11 // pred_check
          %p401 = pneg %p250
        $region46: #{tpu_custom_call.1} parent=11 // pred_check_branch
          %403 = sbr.rel (%p401) target = $region48
        $region47: #{tpu_custom_call.1} parent=11 // pred_region
          _
        $region48: #{tpu_custom_call.1} parent=11 // pred_fallthru
          _
        // Predicated region
        $region49: #{tpu_custom_call.1} parent=11 // pred_check
          %p404 = pneg %p271
        $region50: #{tpu_custom_call.1} parent=11 // pred_check_branch
          %406 = sbr.rel (%p404) target = $region52
        $region51: #{tpu_custom_call.1} parent=11 // pred_region
          _
        $region52: #{tpu_custom_call.1} parent=11 // pred_fallthru
          _
        // Predicated region
        $region53: #{tpu_custom_call.1} parent=11 // pred_check
          %p407 = pneg %p292
        $region54: #{tpu_custom_call.1} parent=11 // pred_check_branch
          %409 = sbr.rel (%p407) target = $region56
        $region55: #{tpu_custom_call.1} parent=11 // pred_region
          _
        $region56: #{tpu_custom_call.1} parent=11 // pred_fallthru
          _
        // Predicated region
        $region57: #{tpu_custom_call.1} parent=11 // pred_check
          %p410 = pneg %p313
        $region58: #{tpu_custom_call.1} parent=11 // pred_check_branch
          %412 = sbr.rel (%p410) target = $region60
        $region59: #{tpu_custom_call.1} parent=11 // pred_region
          _
        $region60: #{tpu_custom_call.1} parent=11 // pred_fallthru
          _
        // Predicated region
        $region61: #{tpu_custom_call.1} parent=11 // pred_check
          %p413 = pneg %p334
        $region62: #{tpu_custom_call.1} parent=11 // pred_check_branch
          %415 = sbr.rel (%p413) target = $region64
        $region63: #{tpu_custom_call.1} parent=11 // pred_region
          _
        $region64: #{tpu_custom_call.1} parent=11 // pred_fallthru
          _
      $region12: #{tpu_custom_call.1} parent=5 // pred_fallthru
        _
      %p416 = scmp.lt.s32.totalorder %s23, 2
      // Predicated region
      $region65: #{tpu_custom_call.1} parent=5 // pred_check
        %p417 = pneg %p416
      $region66: #{tpu_custom_call.1} parent=5 // pred_check_branch
        %419 = sbr.rel (%p417) target = $region68
      $region67: #{tpu_custom_call.1} parent=5 // pred_region
        // Predicated region
        $region69: #{tpu_custom_call.1} parent=67 // pred_check
          %p420 = pneg %p55
        $region70: #{tpu_custom_call.1} parent=67 // pred_check_branch
          %422 = sbr.rel (%p420) target = $region72
        $region71: #{tpu_custom_call.1} parent=67 // pred_region
          %p423 = scmp.lt.s32.totalorder %s30, 1
          %s424 = scalar_select %p423, %s30, 1
          %s425 = smul.addr %s424, 8
          %s426 = scalar_lea.vmem %s0, %s425
        $region72: #{tpu_custom_call.1} parent=67 // pred_fallthru
          _
      $region68: #{tpu_custom_call.1} parent=5 // pred_fallthru
        _
      %p427 = scmp.le.s32.totalorder 1, %s23
      %p428 = scmp.lt.s32.totalorder %s23, 3
      %p429 = pnand %p427, %p428
      %p430 = pneg %p429
      // Predicated region
      $region73: #{tpu_custom_call.1} parent=5 // pred_check
        _
      $region74: #{tpu_custom_call.1} parent=5 // pred_check_branch
        %432 = sbr.rel (%p429) target = $region76
      $region75: #{tpu_custom_call.1} parent=5 // pred_region
        %s433 = ssub.s32 %s23, 1
        %p434 = scmp.lt.s32.totalorder %s32, 1
        %s435 = scalar_select %p434, %s32, 1
        %s436 = smul.addr %s435, 8
        %s437 = scalar_lea.vmem %s0, %s436
        %p438 = pneg %p61
        %p439 = pneg %p58
        %p440 = pneg %p82
        %p441 = pneg %p79
        %p442 = pneg %p103
        %p443 = pneg %p100
        %p444 = pneg %p124
        %p445 = pneg %p121
        %p446 = pneg %p145
        %p447 = pneg %p142
        %p448 = pneg %p166
        %p449 = pneg %p163
        %p450 = pneg %p187
        %p451 = pneg %p184
        %p452 = pneg %p208
        %p453 = pneg %p205
        %p454 = pneg %p229
        %p455 = pneg %p226
        %p456 = pneg %p250
        %p457 = pneg %p247
        %p458 = pneg %p271
        %p459 = pneg %p268
        %p460 = pneg %p292
        %p461 = pneg %p289
        %p462 = pneg %p313
        %p463 = pneg %p310
        %p464 = pneg %p334
        %p465 = pneg %p331
        %p466 = pneg %p362
        %p467 = pneg %p359
        %s468 = sand.u32 %s349, 1
        %s469 = scalar_lea.sflag [#allocation6], %s468
        %s470 = sand.u32 %s349, 1
        %s471 = smul.addr %s470, 8
        %s472 = scalar_lea.vmem [#allocation5], %s471
        %p473 = scmp.lt.s32.totalorder %s32, 1
        %s474 = scalar_select %p473, %s32, 1
        %s475 = smul.addr %s474, 8
        %s476 = scalar_lea.vmem %s0, %s475
        %p478 = scmp.eq.s32.totalorder %s33, 0
        // Predicated region
        $region77: #{tpu_custom_call.1} parent=75 // pred_check
          %p479 = pneg %p478
        $region78: #{tpu_custom_call.1} parent=75 // pred_check_branch
          %481 = sbr.rel (%p479) target = $region80
        $region79: #{tpu_custom_call.1} parent=75 // pred_region
          %v482 = vld [vmem:[%s476] sm:$0xff]
          %v483 = vld [vmem:[%s1] sm:$0x1]
          %v484 = vld [vmem:[%s2] sm:$0x1]
          %vm485 = vcmask 261120
          %v486 = vsel %vm485, %v482, 0.0
          %487 = vadd.xlane.f32.xlu0 %v486
          %v488 = vpop.xlane.xlu0 %487
          %v489 = vrcp.pop 32.0
          %v490 = vmul.f32 %v488, %v489
          %v491 = vsub.f32 %v482, %v490
          %v492 = vmul.f32 %v491, %v491
          %v493 = vsel %vm485, %v492, 0.0
          %494 = vadd.xlane.f32.xlu0 %v493
          %v495 = vpop.xlane.xlu0 %494
          %v496 = vmul.f32 %v495, %v489
          %v497 = vadd.f32 %v496, 1e-05
          %v498 = vrsqrt.pop %v497
          %v499 = vmul.f32 %v491, %v498
          %v501 = vlaneseq
          %v502 = vshrl.u32 %v501, 7
          %v503 = vsub.s32 0, %v502
          %v504 = vrot.slane %v483, %v503
          %v506 = vmul.f32 %v499, %v504
          %v508 = vlaneseq
          %v509 = vshrl.u32 %v508, 7
          %v510 = vsub.s32 0, %v509
          %v511 = vrot.slane %v484, %v510
          %v513 = vadd.f32 %v506, %v511
          %v514 = vpack.c.bf16 %v513, %v513
          %vm515 = vcmask 257024
          %516 = vst.msk [vmem:[#allocation2] sm:$0xf] %vm515, %v514
          %v517 = vld [vmem:[%s4] sm:$0xf]
          %v518 = vld [vmem:[%s4 + $0x4] sm:$0xf]
          %v519 = vld [vmem:[%s4 + $0x8] sm:$0xf]
          %v520 = vld [vmem:[%s4 + $0xc] sm:$0xf]
          %v525 = vunpack.c.l.b16 %v517
          %v526 = vunpack.c.l.b16 %v518
          %v527 = vunpack.c.l.b16 %v519
          %v528 = vunpack.c.l.b16 %v520
          %v529 = vpack.c.b16 %v526, %v525
          %v530 = vpack.c.b16 %v528, %v527
          %v534 = vsel %vm485, %v514, 0
          %536 = vmatprep.subr.bf16.mxu0 0
          %537 = vmatpush1.bf16.msra.mxu0 %v529
          %538 = vmatprep.subr.bf16.mxu0 0
          %539 = vmatpush1.bf16.msra.mxu0 %v530
          %540 = vmatprep.subr.bf16.mxu0 0
          %541 = vmatpush1.bf16.msra.mxu0 0
          %542 = vmatprep.subr.bf16.mxu0 0
          %543 = vmatpush1.bf16.msra.mxu0 0
          %544 = vmatprep.subr.bf16.mxu0 0
          %545 = vmatpush1.bf16.msra.mxu0 0
          %546 = vmatprep.subr.bf16.mxu0 0
          %547 = vmatpush1.bf16.msra.mxu0 0
          %548 = vmatprep.subr.bf16.mxu0 0
          %549 = vmatpush1.bf16.msra.mxu0 0
          %550 = vmatprep.subr.bf16.mxu0 0
          %551 = vmatpush1.bf16.msra.mxu0 0
          %552 = vmatprep.subr.bf16.mxu0 0
          %553 = vmatpush1.bf16.msra.mxu0 0
          %554 = vmatprep.subr.bf16.mxu0 0
          %555 = vmatpush1.bf16.msra.mxu0 0
          %556 = vmatprep.subr.bf16.mxu0 0
          %557 = vmatpush1.bf16.msra.mxu0 0
          %558 = vmatprep.subr.bf16.mxu0 0
          %559 = vmatpush1.bf16.msra.mxu0 0
          %560 = vmatprep.subr.bf16.mxu0 0
          %561 = vmatpush1.bf16.msra.mxu0 0
          %562 = vmatprep.subr.bf16.mxu0 0
          %563 = vmatpush1.bf16.msra.mxu0 0
          %564 = vmatprep.subr.bf16.mxu0 0
          %565 = vmatpush1.bf16.msra.mxu0 0
          %566 = vmatprep.subr.bf16.mxu0 0
          %567 = vmatpush1.bf16.msra.mxu0 0
          %568 = vmatprep.mubr.bf16.mxu0 0
          %569 = vmatmul.mubr.bf16.gmra.mrb[0].mxu0 %v534
          %v570 = vpop.f32.mrb[0].mxu0
          %v571 = vadd.f32 0.0, %v570
          %v572 = vpop.f32.mrb[0].mxu0
          %v573 = vpop.f32.mrb[0].mxu0
          %v574 = vpop.f32.mrb[0].mxu0
          %575 = vdwg.mxu0
          %v576 = vld [vmem:[%s5] sm:$0xf]
          %v577 = vld [vmem:[%s5 + $0x4] sm:$0xf]
          %v578 = vld [vmem:[%s5 + $0x8] sm:$0xf]
          %v579 = vld [vmem:[%s5 + $0xc] sm:$0xf]
          %v584 = vunpack.c.l.b16 %v576
          %v585 = vunpack.c.l.b16 %v577
          %v586 = vunpack.c.l.b16 %v578
          %v587 = vunpack.c.l.b16 %v579
          %v588 = vpack.c.b16 %v585, %v584
          %v589 = vpack.c.b16 %v587, %v586
          %592 = vmatprep.subr.bf16.mxu0 0
          %593 = vmatpush1.bf16.msra.mxu0 %v588
          %594 = vmatprep.subr.bf16.mxu0 0
          %595 = vmatpush1.bf16.msra.mxu0 %v589
          %596 = vmatprep.subr.bf16.mxu0 0
          %597 = vmatpush1.bf16.msra.mxu0 0
          %598 = vmatprep.subr.bf16.mxu0 0
          %599 = vmatpush1.bf16.msra.mxu0 0
          %600 = vmatprep.subr.bf16.mxu0 0
          %601 = vmatpush1.bf16.msra.mxu0 0
          %602 = vmatprep.subr.bf16.mxu0 0
          %603 = vmatpush1.bf16.msra.mxu0 0
          %604 = vmatprep.subr.bf16.mxu0 0
          %605 = vmatpush1.bf16.msra.mxu0 0
          %606 = vmatprep.subr.bf16.mxu0 0
          %607 = vmatpush1.bf16.msra.mxu0 0
          %608 = vmatprep.subr.bf16.mxu0 0
          %609 = vmatpush1.bf16.msra.mxu0 0
          %610 = vmatprep.subr.bf16.mxu0 0
          %611 = vmatpush1.bf16.msra.mxu0 0
          %612 = vmatprep.subr.bf16.mxu0 0
          %613 = vmatpush1.bf16.msra.mxu0 0
          %614 = vmatprep.subr.bf16.mxu0 0
          %615 = vmatpush1.bf16.msra.mxu0 0
          %616 = vmatprep.subr.bf16.mxu0 0
          %617 = vmatpush1.bf16.msra.mxu0 0
          %618 = vmatprep.subr.bf16.mxu0 0
          %619 = vmatpush1.bf16.msra.mxu0 0
          %620 = vmatprep.subr.bf16.mxu0 0
          %621 = vmatpush1.bf16.msra.mxu0 0
          %622 = vmatprep.subr.bf16.mxu0 0
          %623 = vmatpush1.bf16.msra.mxu0 0
          %624 = vmatprep.mubr.bf16.mxu0 0
          %625 = vmatmul.mubr.bf16.gmra.mrb[0].mxu0 %v534
          %v626 = vpop.f32.mrb[0].mxu0
          %v627 = vadd.f32 0.0, %v626
          %v628 = vpop.f32.mrb[0].mxu0
          %v629 = vpop.f32.mrb[0].mxu0
          %v630 = vpop.f32.mrb[0].mxu0
          %631 = vdwg.mxu0
          %v632 = vpack.c.bf16 %v571, %v571
          %vm633 = vcmask 60416
          %634 = vst.msk [vmem:[#allocation3] sm:$0xf] %vm633, %v632
          %v635 = vpack.c.bf16 %v627, %v627
          %636 = vst.msk [vmem:[#allocation4] sm:$0xf] %vm633, %v635
          %s637 = scalar_lea.vmem %s4, 16
          %v638 = vld [vmem:[%s637] sm:$0xf]
          %v639 = vld [vmem:[%s637 + $0x4] sm:$0xf]
          %v640 = vld [vmem:[%s637 + $0x8] sm:$0xf]
          %v641 = vld [vmem:[%s637 + $0xc] sm:$0xf]
          %v646 = vunpack.c.l.b16 %v638
          %v647 = vunpack.c.l.b16 %v639
          %v648 = vunpack.c.l.b16 %v640
          %v649 = vunpack.c.l.b16 %v641
          %v650 = vpack.c.b16 %v647, %v646
          %v651 = vpack.c.b16 %v649, %v648
          %654 = vmatprep.subr.bf16.mxu0 0
          %655 = vmatpush1.bf16.msra.mxu0 %v650
          %656 = vmatprep.subr.bf16.mxu0 0
          %657 = vmatpush1.bf16.msra.mxu0 %v651
          %658 = vmatprep.subr.bf16.mxu0 0
          %659 = vmatpush1.bf16.msra.mxu0 0
          %660 = vmatprep.subr.bf16.mxu0 0
          %661 = vmatpush1.bf16.msra.mxu0 0
          %662 = vmatprep.subr.bf16.mxu0 0
          %663 = vmatpush1.bf16.msra.mxu0 0
          %664 = vmatprep.subr.bf16.mxu0 0
          %665 = vmatpush1.bf16.msra.mxu0 0
          %666 = vmatprep.subr.bf16.mxu0 0
          %667 = vmatpush1.bf16.msra.mxu0 0
          %668 = vmatprep.subr.bf16.mxu0 0
          %669 = vmatpush1.bf16.msra.mxu0 0
          %670 = vmatprep.subr.bf16.mxu0 0
          %671 = vmatpush1.bf16.msra.mxu0 0
          %672 = vmatprep.subr.bf16.mxu0 0
          %673 = vmatpush1.bf16.msra.mxu0 0
          %674 = vmatprep.subr.bf16.mxu0 0
          %675 = vmatpush1.bf16.msra.mxu0 0
          %676 = vmatprep.subr.bf16.mxu0 0
          %677 = vmatpush1.bf16.msra.mxu0 0
          %678 = vmatprep.subr.bf16.mxu0 0
          %679 = vmatpush1.bf16.msra.mxu0 0
          %680 = vmatprep.subr.bf16.mxu0 0
          %681 = vmatpush1.bf16.msra.mxu0 0
          %682 = vmatprep.subr.bf16.mxu0 0
          %683 = vmatpush1.bf16.msra.mxu0 0
          %684 = vmatprep.subr.bf16.mxu0 0
          %685 = vmatpush1.bf16.msra.mxu0 0
          %686 = vmatprep.mubr.bf16.mxu0 0
          %687 = vmatmul.mubr.bf16.gmra.mrb[0].mxu0 %v534
          %v688 = vpop.f32.mrb[0].mxu0
          %v689 = vadd.f32 0.0, %v688
          %v690 = vpop.f32.mrb[0].mxu0
          %v691 = vpop.f32.mrb[0].mxu0
          %v692 = vpop.f32.mrb[0].mxu0
          %693 = vdwg.mxu0
          %s694 = scalar_lea.vmem %s5, 16
          %v695 = vld [vmem:[%s694] sm:$0xf]
          %v696 = vld [vmem:[%s694 + $0x4] sm:$0xf]
          %v697 = vld [vmem:[%s694 + $0x8] sm:$0xf]
          %v698 = vld [vmem:[%s694 + $0xc] sm:$0xf]
          %v703 = vunpack.c.l.b16 %v695
          %v704 = vunpack.c.l.b16 %v696
          %v705 = vunpack.c.l.b16 %v697
          %v706 = vunpack.c.l.b16 %v698
          %v707 = vpack.c.b16 %v704, %v703
          %v708 = vpack.c.b16 %v706, %v705
          %711 = vmatprep.subr.bf16.mxu0 0
          %712 = vmatpush1.bf16.msra.mxu0 %v707
          %713 = vmatprep.subr.bf16.mxu0 0
          %714 = vmatpush1.bf16.msra.mxu0 %v708
          %715 = vmatprep.subr.bf16.mxu0 0
          %716 = vmatpush1.bf16.msra.mxu0 0
          %717 = vmatprep.subr.bf16.mxu0 0
          %718 = vmatpush1.bf16.msra.mxu0 0
          %719 = vmatprep.subr.bf16.mxu0 0
          %720 = vmatpush1.bf16.msra.mxu0 0
          %721 = vmatprep.subr.bf16.mxu0 0
          %722 = vmatpush1.bf16.msra.mxu0 0
          %723 = vmatprep.subr.bf16.mxu0 0
          %724 = vmatpush1.bf16.msra.mxu0 0
          %725 = vmatprep.subr.bf16.mxu0 0
          %726 = vmatpush1.bf16.msra.mxu0 0
          %727 = vmatprep.subr.bf16.mxu0 0
          %728 = vmatpush1.bf16.msra.mxu0 0
          %729 = vmatprep.subr.bf16.mxu0 0
          %730 = vmatpush1.bf16.msra.mxu0 0
          %731 = vmatprep.subr.bf16.mxu0 0
          %732 = vmatpush1.bf16.msra.mxu0 0
          %733 = vmatprep.subr.bf16.mxu0 0
          %734 = vmatpush1.bf16.msra.mxu0 0
          %735 = vmatprep.subr.bf16.mxu0 0
          %736 = vmatpush1.bf16.msra.mxu0 0
          %737 = vmatprep.subr.bf16.mxu0 0
          %738 = vmatpush1.bf16.msra.mxu0 0
          %739 = vmatprep.subr.bf16.mxu0 0
          %740 = vmatpush1.bf16.msra.mxu0 0
          %741 = vmatprep.subr.bf16.mxu0 0
          %742 = vmatpush1.bf16.msra.mxu0 0
          %743 = vmatprep.mubr.bf16.mxu0 0
          %744 = vmatmul.mubr.bf16.gmra.mrb[0].mxu0 %v534
          %v745 = vpop.f32.mrb[0].mxu0
          %v746 = vadd.f32 0.0, %v745
          %v747 = vpop.f32.mrb[0].mxu0
          %v748 = vpop.f32.mrb[0].mxu0
          %v749 = vpop.f32.mrb[0].mxu0
          %750 = vdwg.mxu0
          %v751 = vpack.c.bf16 %v689, %v689
          %s752 = scalar_lea.vmem [#allocation3], 4
          %753 = vst.msk [vmem:[%s752] sm:$0xf] %vm633, %v751
          %v754 = vpack.c.bf16 %v746, %v746
          %s755 = scalar_lea.vmem [#allocation4], 4
          %756 = vst.msk [vmem:[%s755] sm:$0xf] %vm633, %v754
          %s757 = scalar_lea.vmem %s4, 32
          %v758 = vld [vmem:[%s757] sm:$0xf]
          %v759 = vld [vmem:[%s757 + $0x4] sm:$0xf]
          %v760 = vld [vmem:[%s757 + $0x8] sm:$0xf]
          %v761 = vld [vmem:[%s757 + $0xc] sm:$0xf]
          %v766 = vunpack.c.l.b16 %v758
          %v767 = vunpack.c.l.b16 %v759
          %v768 = vunpack.c.l.b16 %v760
          %v769 = vunpack.c.l.b16 %v761
          %v770 = vpack.c.b16 %v767, %v766
          %v771 = vpack.c.b16 %v769, %v768
          %774 = vmatprep.subr.bf16.mxu0 0
          %775 = vmatpush1.bf16.msra.mxu0 %v770
          %776 = vmatprep.subr.bf16.mxu0 0
          %777 = vmatpush1.bf16.msra.mxu0 %v771
          %778 = vmatprep.subr.bf16.mxu0 0
          %779 = vmatpush1.bf16.msra.mxu0 0
          %780 = vmatprep.subr.bf16.mxu0 0
          %781 = vmatpush1.bf16.msra.mxu0 0
          %782 = vmatprep.subr.bf16.mxu0 0
          %783 = vmatpush1.bf16.msra.mxu0 0
          %784 = vmatprep.subr.bf16.mxu0 0
          %785 = vmatpush1.bf16.msra.mxu0 0
          %786 = vmatprep.subr.bf16.mxu0 0
          %787 = vmatpush1.bf16.msra.mxu0 0
          %788 = vmatprep.subr.bf16.mxu0 0
          %789 = vmatpush1.bf16.msra.mxu0 0
          %790 = vmatprep.subr.bf16.mxu0 0
          %791 = vmatpush1.bf16.msra.mxu0 0
          %792 = vmatprep.subr.bf16.mxu0 0
          %793 = vmatpush1.bf16.msra.mxu0 0
          %794 = vmatprep.subr.bf16.mxu0 0
          %795 = vmatpush1.bf16.msra.mxu0 0
          %796 = vmatprep.subr.bf16.mxu0 0
          %797 = vmatpush1.bf16.msra.mxu0 0
          %798 = vmatprep.subr.bf16.mxu0 0
          %799 = vmatpush1.bf16.msra.mxu0 0
          %800 = vmatprep.subr.bf16.mxu0 0
          %801 = vmatpush1.bf16.msra.mxu0 0
          %802 = vmatprep.subr.bf16.mxu0 0
          %803 = vmatpush1.bf16.msra.mxu0 0
          %804 = vmatprep.subr.bf16.mxu0 0
          %805 = vmatpush1.bf16.msra.mxu0 0
          %806 = vmatprep.mubr.bf16.mxu0 0
          %807 = vmatmul.mubr.bf16.gmra.mrb[0].mxu0 %v534
          %v808 = vpop.f32.mrb[0].mxu0
          %v809 = vadd.f32 0.0, %v808
          %v810 = vpop.f32.mrb[0].mxu0
          %v811 = vpop.f32.mrb[0].mxu0
          %v812 = vpop.f32.mrb[0].mxu0
          %813 = vdwg.mxu0
          %s814 = scalar_lea.vmem %s5, 32
          %v815 = vld [vmem:[%s814] sm:$0xf]
          %v816 = vld [vmem:[%s814 + $0x4] sm:$0xf]
          %v817 = vld [vmem:[%s814 + $0x8] sm:$0xf]
          %v818 = vld [vmem:[%s814 + $0xc] sm:$0xf]
          %v823 = vunpack.c.l.b16 %v815
          %v824 = vunpack.c.l.b16 %v816
          %v825 = vunpack.c.l.b16 %v817
          %v826 = vunpack.c.l.b16 %v818
          %v827 = vpack.c.b16 %v824, %v823
          %v828 = vpack.c.b16 %v826, %v825
          %831 = vmatprep.subr.bf16.mxu0 0
          %832 = vmatpush1.bf16.msra.mxu0 %v827
          %833 = vmatprep.subr.bf16.mxu0 0
          %834 = vmatpush1.bf16.msra.mxu0 %v828
          %835 = vmatprep.subr.bf16.mxu0 0
          %836 = vmatpush1.bf16.msra.mxu0 0
          %837 = vmatprep.subr.bf16.mxu0 0
          %838 = vmatpush1.bf16.msra.mxu0 0
          %839 = vmatprep.subr.bf16.mxu0 0
          %840 = vmatpush1.bf16.msra.mxu0 0
          %841 = vmatprep.subr.bf16.mxu0 0
          %842 = vmatpush1.bf16.msra.mxu0 0
          %843 = vmatprep.subr.bf16.mxu0 0
          %844 = vmatpush1.bf16.msra.mxu0 0
          %845 = vmatprep.subr.bf16.mxu0 0
          %846 = vmatpush1.bf16.msra.mxu0 0
          %847 = vmatprep.subr.bf16.mxu0 0
          %848 = vmatpush1.bf16.msra.mxu0 0
          %849 = vmatprep.subr.bf16.mxu0 0
          %850 = vmatpush1.bf16.msra.mxu0 0
          %851 = vmatprep.subr.bf16.mxu0 0
          %852 = vmatpush1.bf16.msra.mxu0 0
          %853 = vmatprep.subr.bf16.mxu0 0
          %854 = vmatpush1.bf16.msra.mxu0 0
          %855 = vmatprep.subr.bf16.mxu0 0
          %856 = vmatpush1.bf16.msra.mxu0 0
          %857 = vmatprep.subr.bf16.mxu0 0
          %858 = vmatpush1.bf16.msra.mxu0 0
          %859 = vmatprep.subr.bf16.mxu0 0
          %860 = vmatpush1.bf16.msra.mxu0 0
          %861 = vmatprep.subr.bf16.mxu0 0
          %862 = vmatpush1.bf16.msra.mxu0 0
          %863 = vmatprep.mubr.bf16.mxu0 0
          %864 = vmatmul.mubr.bf16.gmra.mrb[0].mxu0 %v534
          %v865 = vpop.f32.mrb[0].mxu0
          %v866 = vadd.f32 0.0, %v865
          %v867 = vpop.f32.mrb[0].mxu0
          %v868 = vpop.f32.mrb[0].mxu0
          %v869 = vpop.f32.mrb[0].mxu0
          %870 = vdwg.mxu0
          %v871 = vpack.c.bf16 %v809, %v809
          %s872 = scalar_lea.vmem [#allocation3], 8
          %873 = vst.msk [vmem:[%s872] sm:$0xf] %vm633, %v871
          %v874 = vpack.c.bf16 %v866, %v866
          %s875 = scalar_lea.vmem [#allocation4], 8
          %876 = vst.msk [vmem:[%s875] sm:$0xf] %vm633, %v874
          %s877 = scalar_lea.vmem %s4, 48
          %v878 = vld [vmem:[%s877] sm:$0xf]
          %v879 = vld [vmem:[%s877 + $0x4] sm:$0xf]
          %v880 = vld [vmem:[%s877 + $0x8] sm:$0xf]
          %v881 = vld [vmem:[%s877 + $0xc] sm:$0xf]
          %v886 = vunpack.c.l.b16 %v878
          %v887 = vunpack.c.l.b16 %v879
          %v888 = vunpack.c.l.b16 %v880
          %v889 = vunpack.c.l.b16 %v881
          %v890 = vpack.c.b16 %v887, %v886
          %v891 = vpack.c.b16 %v889, %v888
          %894 = vmatprep.subr.bf16.mxu0 0
          %895 = vmatpush1.bf16.msra.mxu0 %v890
          %896 = vmatprep.subr.bf16.mxu0 0
          %897 = vmatpush1.bf16.msra.mxu0 %v891
          %898 = vmatprep.subr.bf16.mxu0 0
          %899 = vmatpush1.bf16.msra.mxu0 0
          %900 = vmatprep.subr.bf16.mxu0 0
          %901 = vmatpush1.bf16.msra.mxu0 0
          %902 = vmatprep.subr.bf16.mxu0 0
          %903 = vmatpush1.bf16.msra.mxu0 0
          %904 = vmatprep.subr.bf16.mxu0 0
          %905 = vmatpush1.bf16.msra.mxu0 0
          %906 = vmatprep.subr.bf16.mxu0 0
          %907 = vmatpush1.bf16.msra.mxu0 0
          %908 = vmatprep.subr.bf16.mxu0 0
          %909 = vmatpush1.bf16.msra.mxu0 0
          %910 = vmatprep.subr.bf16.mxu0 0
          %911 = vmatpush1.bf16.msra.mxu0 0
          %912 = vmatprep.subr.bf16.mxu0 0
          %913 = vmatpush1.bf16.msra.mxu0 0
          %914 = vmatprep.subr.bf16.mxu0 0
          %915 = vmatpush1.bf16.msra.mxu0 0
          %916 = vmatprep.subr.bf16.mxu0 0
          %917 = vmatpush1.bf16.msra.mxu0 0
          %918 = vmatprep.subr.bf16.mxu0 0
          %919 = vmatpush1.bf16.msra.mxu0 0
          %920 = vmatprep.subr.bf16.mxu0 0
          %921 = vmatpush1.bf16.msra.mxu0 0
          %922 = vmatprep.subr.bf16.mxu0 0
          %923 = vmatpush1.bf16.msra.mxu0 0
          %924 = vmatprep.subr.bf16.mxu0 0
          %925 = vmatpush1.bf16.msra.mxu0 0
          %926 = vmatprep.mubr.bf16.mxu0 0
          %927 = vmatmul.mubr.bf16.gmra.mrb[0].mxu0 %v534
          %v928 = vpop.f32.mrb[0].mxu0
          %v929 = vadd.f32 0.0, %v928
          %v930 = vpop.f32.mrb[0].mxu0
          %v931 = vpop.f32.mrb[0].mxu0
          %v932 = vpop.f32.mrb[0].mxu0
          %933 = vdwg.mxu0
          %s934 = scalar_lea.vmem %s5, 48
          %v935 = vld [vmem:[%s934] sm:$0xf]
          %v936 = vld [vmem:[%s934 + $0x4] sm:$0xf]
          %v937 = vld [vmem:[%s934 + $0x8] sm:$0xf]
          %v938 = vld [vmem:[%s934 + $0xc] sm:$0xf]
          %v943 = vunpack.c.l.b16 %v935
          %v944 = vunpack.c.l.b16 %v936
          %v945 = vunpack.c.l.b16 %v937
          %v946 = vunpack.c.l.b16 %v938
          %v947 = vpack.c.b16 %v944, %v943
          %v948 = vpack.c.b16 %v946, %v945
          %951 = vmatprep.subr.bf16.mxu0 0
          %952 = vmatpush1.bf16.msra.mxu0 %v947
          %953 = vmatprep.subr.bf16.mxu0 0
          %954 = vmatpush1.bf16.msra.mxu0 %v948
          %955 = vmatprep.subr.bf16.mxu0 0
          %956 = vmatpush1.bf16.msra.mxu0 0
          %957 = vmatprep.subr.bf16.mxu0 0
          %958 = vmatpush1.bf16.msra.mxu0 0
          %959 = vmatprep.subr.bf16.mxu0 0
          %960 = vmatpush1.bf16.msra.mxu0 0
          %961 = vmatprep.subr.bf16.mxu0 0
          %962 = vmatpush1.bf16.msra.mxu0 0
          %963 = vmatprep.subr.bf16.mxu0 0
          %964 = vmatpush1.bf16.msra.mxu0 0
          %965 = vmatprep.subr.bf16.mxu0 0
          %966 = vmatpush1.bf16.msra.mxu0 0
          %967 = vmatprep.subr.bf16.mxu0 0
          %968 = vmatpush1.bf16.msra.mxu0 0
          %969 = vmatprep.subr.bf16.mxu0 0
          %970 = vmatpush1.bf16.msra.mxu0 0
          %971 = vmatprep.subr.bf16.mxu0 0
          %972 = vmatpush1.bf16.msra.mxu0 0
          %973 = vmatprep.subr.bf16.mxu0 0
          %974 = vmatpush1.bf16.msra.mxu0 0
          %975 = vmatprep.subr.bf16.mxu0 0
          %976 = vmatpush1.bf16.msra.mxu0 0
          %977 = vmatprep.subr.bf16.mxu0 0
          %978 = vmatpush1.bf16.msra.mxu0 0
          %979 = vmatprep.subr.bf16.mxu0 0
          %980 = vmatpush1.bf16.msra.mxu0 0
          %981 = vmatprep.subr.bf16.mxu0 0
          %982 = vmatpush1.bf16.msra.mxu0 0
          %983 = vmatprep.mubr.bf16.mxu0 0
          %984 = vmatmul.mubr.bf16.gmra.mrb[0].mxu0 %v534
          %v985 = vpop.f32.mrb[0].mxu0
          %v986 = vadd.f32 0.0, %v985
          %v987 = vpop.f32.mrb[0].mxu0
          %v988 = vpop.f32.mrb[0].mxu0
          %v989 = vpop.f32.mrb[0].mxu0
          %990 = vdwg.mxu0
          %v991 = vpack.c.bf16 %v929, %v929
          %s992 = scalar_lea.vmem [#allocation3], 12
          %993 = vst.msk [vmem:[%s992] sm:$0xf] %vm633, %v991
          %v994 = vpack.c.bf16 %v986, %v986
          %s995 = scalar_lea.vmem [#allocation4], 12
          %996 = vst.msk [vmem:[%s995] sm:$0xf] %vm633, %v994
        $region80: #{tpu_custom_call.1} parent=75 // pred_fallthru
          _
        %s997 = smul.u32 %s33, 8
        %s998 = scalar_lea.vmem %s476, %s997
        %v999 = vld [vmem:[%s998] sm:$0xff]
        %s1000 = sshra.s32 %s997, 3
        %s1001 = sand.u32 %s997, 7
        %s1002 = smul.addr %s1000, 4
        %s1003 = scalar_lea.vmem [#allocation2], %s1002
        %v1004 = vld [vmem:[%s1003] sm:$0xf]
        %v1005 = vld [vmem:[%s3] sm:$0xf]
        %v1006 = vld [vmem:[%s3 + $0x4] sm:$0xf]
        %v1007 = vld [vmem:[%s3 + $0x8] sm:$0xf]
        %v1008 = vld [vmem:[%s3 + $0xc] sm:$0xf]
        %v1013 = vunpack.c.l.b16 %v1005
        %v1014 = vunpack.c.l.b16 %v1006
        %v1015 = vunpack.c.l.b16 %v1007
        %v1016 = vunpack.c.l.b16 %v1008
        %v1017 = vpack.c.b16 %v1014, %v1013
        %v1018 = vpack.c.b16 %v1016, %v1015
        %vm1021 = vcmask 261120
        %v1023 = vsel %vm1021, %v1004, 0
        %1025 = vmatprep.subr.bf16.mxu0 0
        %1026 = vmatpush1.bf16.msra.mxu0 %v1017
        %1027 = vmatprep.subr.bf16.mxu0 0
        %1028 = vmatpush1.bf16.msra.mxu0 %v1018
        %1029 = vmatprep.subr.bf16.mxu0 0
        %1030 = vmatpush1.bf16.msra.mxu0 0
        %1031 = vmatprep.subr.bf16.mxu0 0
        %1032 = vmatpush1.bf16.msra.mxu0 0
        %1033 = vmatprep.subr.bf16.mxu0 0
        %1034 = vmatpush1.bf16.msra.mxu0 0
        %1035 = vmatprep.subr.bf16.mxu0 0
        %1036 = vmatpush1.bf16.msra.mxu0 0
        %1037 = vmatprep.subr.bf16.mxu0 0
        %1038 = vmatpush1.bf16.msra.mxu0 0
        %1039 = vmatprep.subr.bf16.mxu0 0
        %1040 = vmatpush1.bf16.msra.mxu0 0
        %1041 = vmatprep.subr.bf16.mxu0 0
        %1042 = vmatpush1.bf16.msra.mxu0 0
        %1043 = vmatprep.subr.bf16.mxu0 0
        %1044 = vmatpush1.bf16.msra.mxu0 0
        %1045 = vmatprep.subr.bf16.mxu0 0
        %1046 = vmatpush1.bf16.msra.mxu0 0
        %1047 = vmatprep.subr.bf16.mxu0 0
        %1048 = vmatpush1.bf16.msra.mxu0 0
        %1049 = vmatprep.subr.bf16.mxu0 0
        %1050 = vmatpush1.bf16.msra.mxu0 0
        %1051 = vmatprep.subr.bf16.mxu0 0
        %1052 = vmatpush1.bf16.msra.mxu0 0
        %1053 = vmatprep.subr.bf16.mxu0 0
        %1054 = vmatpush1.bf16.msra.mxu0 0
        %1055 = vmatprep.subr.bf16.mxu0 0
        %1056 = vmatpush1.bf16.msra.mxu0 0
        %1057 = vmatprep.mubr.bf16.mxu0 0
        %1058 = vmatmul.mubr.bf16.gmra.mrb[0].mxu0 %v1023
        %v1059 = vpop.f32.mrb[0].mxu0
        %v1060 = vadd.f32 0.0, %v1059
        %v1061 = vpop.f32.mrb[0].mxu0
        %v1062 = vpop.f32.mrb[0].mxu0
        %v1063 = vpop.f32.mrb[0].mxu0
        %1064 = vdwg.mxu0
        %s1065 = scalar_lea.vmem %s3, 16
        %v1066 = vld [vmem:[%s1065] sm:$0xf]
        %v1067 = vld [vmem:[%s1065 + $0x4] sm:$0xf]
        %v1068 = vld [vmem:[%s1065 + $0x8] sm:$0xf]
        %v1069 = vld [vmem:[%s1065 + $0xc] sm:$0xf]
        %v1074 = vunpack.c.l.b16 %v1066
        %v1075 = vunpack.c.l.b16 %v1067
        %v1076 = vunpack.c.l.b16 %v1068
        %v1077 = vunpack.c.l.b16 %v1069
        %v1078 = vpack.c.b16 %v1075, %v1074
        %v1079 = vpack.c.b16 %v1077, %v1076
        %1082 = vmatprep.subr.bf16.mxu0 0
        %1083 = vmatpush1.bf16.msra.mxu0 %v1078
        %1084 = vmatprep.subr.bf16.mxu0 0
        %1085 = vmatpush1.bf16.msra.mxu0 %v1079
        %1086 = vmatprep.subr.bf16.mxu0 0
        %1087 = vmatpush1.bf16.msra.mxu0 0
        %1088 = vmatprep.subr.bf16.mxu0 0
        %1089 = vmatpush1.bf16.msra.mxu0 0
        %1090 = vmatprep.subr.bf16.mxu0 0
        %1091 = vmatpush1.bf16.msra.mxu0 0
        %1092 = vmatprep.subr.bf16.mxu0 0
        %1093 = vmatpush1.bf16.msra.mxu0 0
        %1094 = vmatprep.subr.bf16.mxu0 0
        %1095 = vmatpush1.bf16.msra.mxu0 0
        %1096 = vmatprep.subr.bf16.mxu0 0
        %1097 = vmatpush1.bf16.msra.mxu0 0
        %1098 = vmatprep.subr.bf16.mxu0 0
        %1099 = vmatpush1.bf16.msra.mxu0 0
        %1100 = vmatprep.subr.bf16.mxu0 0
        %1101 = vmatpush1.bf16.msra.mxu0 0
        %1102 = vmatprep.subr.bf16.mxu0 0
        %1103 = vmatpush1.bf16.msra.mxu0 0
        %1104 = vmatprep.subr.bf16.mxu0 0
        %1105 = vmatpush1.bf16.msra.mxu0 0
        %1106 = vmatprep.subr.bf16.mxu0 0
        %1107 = vmatpush1.bf16.msra.mxu0 0
        %1108 = vmatprep.subr.bf16.mxu0 0
        %1109 = vmatpush1.bf16.msra.mxu0 0
        %1110 = vmatprep.subr.bf16.mxu0 0
        %1111 = vmatpush1.bf16.msra.mxu0 0
        %1112 = vmatprep.subr.bf16.mxu0 0
        %1113 = vmatpush1.bf16.msra.mxu0 0
        %1114 = vmatprep.mubr.bf16.mxu0 0
        %1115 = vmatmul.mubr.bf16.gmra.mrb[0].mxu0 %v1023
        %v1116 = vpop.f32.mrb[0].mxu0
        %v1117 = vadd.f32 0.0, %v1116
        %v1118 = vpop.f32.mrb[0].mxu0
        %v1119 = vpop.f32.mrb[0].mxu0
        %v1120 = vpop.f32.mrb[0].mxu0
        %1121 = vdwg.mxu0
        %s1122 = scalar_lea.vmem %s3, 32
        %v1123 = vld [vmem:[%s1122] sm:$0xf]
        %v1124 = vld [vmem:[%s1122 + $0x4] sm:$0xf]
        %v1125 = vld [vmem:[%s1122 + $0x8] sm:$0xf]
        %v1126 = vld [vmem:[%s1122 + $0xc] sm:$0xf]
        %v1131 = vunpack.c.l.b16 %v1123
        %v1132 = vunpack.c.l.b16 %v1124
        %v1133 = vunpack.c.l.b16 %v1125
        %v1134 = vunpack.c.l.b16 %v1126
        %v1135 = vpack.c.b16 %v1132, %v1131
        %v1136 = vpack.c.b16 %v1134, %v1133
        %1139 = vmatprep.subr.bf16.mxu0 0
        %1140 = vmatpush1.bf16.msra.mxu0 %v1135
        %1141 = vmatprep.subr.bf16.mxu0 0
        %1142 = vmatpush1.bf16.msra.mxu0 %v1136
        %1143 = vmatprep.subr.bf16.mxu0 0
        %1144 = vmatpush1.bf16.msra.mxu0 0
        %1145 = vmatprep.subr.bf16.mxu0 0
        %1146 = vmatpush1.bf16.msra.mxu0 0
        %1147 = vmatprep.subr.bf16.mxu0 0
        %1148 = vmatpush1.bf16.msra.mxu0 0
        %1149 = vmatprep.subr.bf16.mxu0 0
        %1150 = vmatpush1.bf16.msra.mxu0 0
        %1151 = vmatprep.subr.bf16.mxu0 0
        %1152 = vmatpush1.bf16.msra.mxu0 0
        %1153 = vmatprep.subr.bf16.mxu0 0
        %1154 = vmatpush1.bf16.msra.mxu0 0
        %1155 = vmatprep.subr.bf16.mxu0 0
        %1156 = vmatpush1.bf16.msra.mxu0 0
        %1157 = vmatprep.subr.bf16.mxu0 0
        %1158 = vmatpush1.bf16.msra.mxu0 0
        %1159 = vmatprep.subr.bf16.mxu0 0
        %1160 = vmatpush1.bf16.msra.mxu0 0
        %1161 = vmatprep.subr.bf16.mxu0 0
        %1162 = vmatpush1.bf16.msra.mxu0 0
        %1163 = vmatprep.subr.bf16.mxu0 0
        %1164 = vmatpush1.bf16.msra.mxu0 0
        %1165 = vmatprep.subr.bf16.mxu0 0
        %1166 = vmatpush1.bf16.msra.mxu0 0
        %1167 = vmatprep.subr.bf16.mxu0 0
        %1168 = vmatpush1.bf16.msra.mxu0 0
        %1169 = vmatprep.subr.bf16.mxu0 0
        %1170 = vmatpush1.bf16.msra.mxu0 0
        %1171 = vmatprep.mubr.bf16.mxu0 0
        %1172 = vmatmul.mubr.bf16.gmra.mrb[0].mxu0 %v1023
        %v1173 = vpop.f32.mrb[0].mxu0
        %v1174 = vadd.f32 0.0, %v1173
        %v1175 = vpop.f32.mrb[0].mxu0
        %v1176 = vpop.f32.mrb[0].mxu0
        %v1177 = vpop.f32.mrb[0].mxu0
        %1178 = vdwg.mxu0
        %s1179 = scalar_lea.vmem %s3, 48
        %v1180 = vld [vmem:[%s1179] sm:$0xf]
        %v1181 = vld [vmem:[%s1179 + $0x4] sm:$0xf]
        %v1182 = vld [vmem:[%s1179 + $0x8] sm:$0xf]
        %v1183 = vld [vmem:[%s1179 + $0xc] sm:$0xf]
        %v1188 = vunpack.c.l.b16 %v1180
        %v1189 = vunpack.c.l.b16 %v1181
        %v1190 = vunpack.c.l.b16 %v1182
        %v1191 = vunpack.c.l.b16 %v1183
        %v1192 = vpack.c.b16 %v1189, %v1188
        %v1193 = vpack.c.b16 %v1191, %v1190
        %1196 = vmatprep.subr.bf16.mxu0 0
        %1197 = vmatpush1.bf16.msra.mxu0 %v1192
        %1198 = vmatprep.subr.bf16.mxu0 0
        %1199 = vmatpush1.bf16.msra.mxu0 %v1193
        %1200 = vmatprep.subr.bf16.mxu0 0
        %1201 = vmatpush1.bf16.msra.mxu0 0
        %1202 = vmatprep.subr.bf16.mxu0 0
        %1203 = vmatpush1.bf16.msra.mxu0 0
        %1204 = vmatprep.subr.bf16.mxu0 0
        %1205 = vmatpush1.bf16.msra.mxu0 0
        %1206 = vmatprep.subr.bf16.mxu0 0
        %1207 = vmatpush1.bf16.msra.mxu0 0
        %1208 = vmatprep.subr.bf16.mxu0 0
        %1209 = vmatpush1.bf16.msra.mxu0 0
        %1210 = vmatprep.subr.bf16.mxu0 0
        %1211 = vmatpush1.bf16.msra.mxu0 0
        %1212 = vmatprep.subr.bf16.mxu0 0
        %1213 = vmatpush1.bf16.msra.mxu0 0
        %1214 = vmatprep.subr.bf16.mxu0 0
        %1215 = vmatpush1.bf16.msra.mxu0 0
        %1216 = vmatprep.subr.bf16.mxu0 0
        %1217 = vmatpush1.bf16.msra.mxu0 0
        %1218 = vmatprep.subr.bf16.mxu0 0
        %1219 = vmatpush1.bf16.msra.mxu0 0
        %1220 = vmatprep.subr.bf16.mxu0 0
        %1221 = vmatpush1.bf16.msra.mxu0 0
        %1222 = vmatprep.subr.bf16.mxu0 0
        %1223 = vmatpush1.bf16.msra.mxu0 0
        %1224 = vmatprep.subr.bf16.mxu0 0
        %1225 = vmatpush1.bf16.msra.mxu0 0
        %1226 = vmatprep.subr.bf16.mxu0 0
        %1227 = vmatpush1.bf16.msra.mxu0 0
        %1228 = vmatprep.mubr.bf16.mxu0 0
        %1229 = vmatmul.mubr.bf16.gmra.mrb[0].mxu0 %v1023
        %v1230 = vpop.f32.mrb[0].mxu0
        %v1231 = vadd.f32 0.0, %v1230
        %v1232 = vpop.f32.mrb[0].mxu0
        %v1233 = vpop.f32.mrb[0].mxu0
        %v1234 = vpop.f32.mrb[0].mxu0
        %1235 = vdwg.mxu0
        %v1236 = vpack.c.bf16 %v1060, %v1060
        %v1237 = vpack.c.bf16 %v1117, %v1117
        %v1238 = vpack.c.bf16 %v1174, %v1174
        %v1239 = vpack.c.bf16 %v1231, %v1231
        %s1240 = sadd.s32 %s33, 1
        // While loop
        $region81: #{tpu_custom_call.1} parent=75 // loop_pre_header
          _
        $region82: #{tpu_custom_call.1} parent=75 // loop_header
          %s1242 = sphi 0, %s1244
          %p1243 = scmp.ge.s32.totalorder %s1242, %s1240
          %v1247 = vphi -1e+30, %v1480
          %v1248 = vphi -1e+30, %v1481
          %v1249 = vphi -1e+30, %v1482
          %v1250 = vphi -1e+30, %v1483
          %v1251 = vphi 0.0, %v1524
          %v1252 = vphi 0.0, %v1525
          %v1253 = vphi 0.0, %v1526
          %v1254 = vphi 0.0, %v1527
          %v1255 = vphi 0.0, %v1721
          %v1256 = vphi 0.0, %v1722
          %v1257 = vphi 0.0, %v1723
          %v1258 = vphi 0.0, %v1724
        $region83: #{tpu_custom_call.1} parent=75 // loop_header_branch
          %1246 = sbr.rel (%p1243) target = $region87
        $region84: #{tpu_custom_call.1} parent=75 // loop_body
          %s1259 = smul.u32 %s1242, 4
          %s1260 = smul.addr %s1259, 4
          %s1261 = scalar_lea.vmem [#allocation3], %s1260
          %v1262 = vld [vmem:[%s1261] sm:$0xf]
          %v1263 = vld [vmem:[%s1261 + $0x4] sm:$0xf]
          %v1264 = vld [vmem:[%s1261 + $0x8] sm:$0xf]
          %v1265 = vld [vmem:[%s1261 + $0xc] sm:$0xf]
          %s1266 = smul.addr %s1259, 4
          %s1267 = scalar_lea.vmem [#allocation4], %s1266
          %v1268 = vld [vmem:[%s1267] sm:$0xf]
          %v1269 = vld [vmem:[%s1267 + $0x4] sm:$0xf]
          %v1270 = vld [vmem:[%s1267 + $0x8] sm:$0xf]
          %v1271 = vld [vmem:[%s1267 + $0xc] sm:$0xf]
          %v1272 = vlaneseq
          %v1273 = vshrl.u32 %v1272, 7
          %v1274 = vstv %s997
          %v1275 = vadd.s32 %v1274, %v1273
          %s1276 = smul.u32 %s1242, 8
          %v1277 = vlaneseq
          %v1278 = vand.u32 %v1277, 127
          %v1279 = vstv %s1276
          %v1280 = vadd.s32 %v1279, %v1278
          %vm1281 = vcmp.gt.s32.totalorder %v1280, %v1275
          %v1282 = vsel %vm1281, -1e+30, 0.0
          %vm1283 = vcmask 64512
          %v1285 = vsel %vm1283, %v1236, 0
          %v1288 = vsel %vm1283, %v1262, 0
          %1290 = vmatprep.subr.bf16.mxu0 0
          %1291 = vmatpush1.bf16.xpose.msra.mxu0 %v1288
          %1292 = vmatprep.subr.bf16.mxu0 0
          %1293 = vmatpush1.bf16.xpose.msra.mxu0 0
          %1294 = vmatprep.subr.bf16.mxu0 0
          %1295 = vmatpush1.bf16.xpose.msra.mxu0 0
          %1296 = vmatprep.subr.bf16.mxu0 0
          %1297 = vmatpush1.bf16.xpose.msra.mxu0 0
          %1298 = vmatprep.subr.bf16.mxu0 0
          %1299 = vmatpush1.bf16.xpose.msra.mxu0 0
          %1300 = vmatprep.subr.bf16.mxu0 0
          %1301 = vmatpush1.bf16.xpose.msra.mxu0 0
          %1302 = vmatprep.subr.bf16.mxu0 0
          %1303 = vmatpush1.bf16.xpose.msra.mxu0 0
          %1304 = vmatprep.subr.bf16.mxu0 0
          %1305 = vmatpush1.bf16.xpose.msra.mxu0 0
          %1306 = vmatprep.subr.bf16.mxu0 0
          %1307 = vmatpush1.bf16.xpose.msra.mxu0 0
          %1308 = vmatprep.subr.bf16.mxu0 0
          %1309 = vmatpush1.bf16.xpose.msra.mxu0 0
          %1310 = vmatprep.subr.bf16.mxu0 0
          %1311 = vmatpush1.bf16.xpose.msra.mxu0 0
          %1312 = vmatprep.subr.bf16.mxu0 0
          %1313 = vmatpush1.bf16.xpose.msra.mxu0 0
          %1314 = vmatprep.subr.bf16.mxu0 0
          %1315 = vmatpush1.bf16.xpose.msra.mxu0 0
          %1316 = vmatprep.subr.bf16.mxu0 0
          %1317 = vmatpush1.bf16.xpose.msra.mxu0 0
          %1318 = vmatprep.subr.bf16.mxu0 0
          %1319 = vmatpush1.bf16.xpose.msra.mxu0 0
          %1320 = vmatprep.subr.bf16.mxu0 0
          %1321 = vmatpush1.bf16.xpose.msra.mxu0 0
          %1322 = vmatprep.mubr.bf16.mxu0 0
          %1323 = vmatmul.mubr.bf16.gmra.mrb[0].mxu0 %v1285
          %v1324 = vpop.f32.mrb[0].mxu0
          %v1325 = vadd.f32 %v1282, %v1324
          %v1326 = vpop.f32.mrb[0].mxu0
          %v1327 = vpop.f32.mrb[0].mxu0
          %v1328 = vpop.f32.mrb[0].mxu0
          %1329 = vdwg.mxu0
          %v1331 = vsel %vm1283, %v1237, 0
          %v1334 = vsel %vm1283, %v1263, 0
          %1336 = vmatprep.subr.bf16.mxu0 0
          %1337 = vmatpush1.bf16.xpose.msra.mxu0 %v1334
          %1338 = vmatprep.subr.bf16.mxu0 0
          %1339 = vmatpush1.bf16.xpose.msra.mxu0 0
          %1340 = vmatprep.subr.bf16.mxu0 0
          %1341 = vmatpush1.bf16.xpose.msra.mxu0 0
          %1342 = vmatprep.subr.bf16.mxu0 0
          %1343 = vmatpush1.bf16.xpose.msra.mxu0 0
          %1344 = vmatprep.subr.bf16.mxu0 0
          %1345 = vmatpush1.bf16.xpose.msra.mxu0 0
          %1346 = vmatprep.subr.bf16.mxu0 0
          %1347 = vmatpush1.bf16.xpose.msra.mxu0 0
          %1348 = vmatprep.subr.bf16.mxu0 0
          %1349 = vmatpush1.bf16.xpose.msra.mxu0 0
          %1350 = vmatprep.subr.bf16.mxu0 0
          %1351 = vmatpush1.bf16.xpose.msra.mxu0 0
          %1352 = vmatprep.subr.bf16.mxu0 0
          %1353 = vmatpush1.bf16.xpose.msra.mxu0 0
          %1354 = vmatprep.subr.bf16.mxu0 0
          %1355 = vmatpush1.bf16.xpose.msra.mxu0 0
          %1356 = vmatprep.subr.bf16.mxu0 0
          %1357 = vmatpush1.bf16.xpose.msra.mxu0 0
          %1358 = vmatprep.subr.bf16.mxu0 0
          %1359 = vmatpush1.bf16.xpose.msra.mxu0 0
          %1360 = vmatprep.subr.bf16.mxu0 0
          %1361 = vmatpush1.bf16.xpose.msra.mxu0 0
          %1362 = vmatprep.subr.bf16.mxu0 0
          %1363 = vmatpush1.bf16.xpose.msra.mxu0 0
          %1364 = vmatprep.subr.bf16.mxu0 0
          %1365 = vmatpush1.bf16.xpose.msra.mxu0 0
          %1366 = vmatprep.subr.bf16.mxu0 0
          %1367 = vmatpush1.bf16.xpose.msra.mxu0 0
          %1368 = vmatprep.mubr.bf16.mxu0 0
          %1369 = vmatmul.mubr.bf16.gmra.mrb[0].mxu0 %v1331
          %v1370 = vpop.f32.mrb[0].mxu0
          %v1371 = vadd.f32 %v1282, %v1370
          %v1372 = vpop.f32.mrb[0].mxu0
          %v1373 = vpop.f32.mrb[0].mxu0
          %v1374 = vpop.f32.mrb[0].mxu0
          %1375 = vdwg.mxu0
          %v1377 = vsel %vm1283, %v1238, 0
          %v1380 = vsel %vm1283, %v1264, 0
          %1382 = vmatprep.subr.bf16.mxu0 0
          %1383 = vmatpush1.bf16.xpose.msra.mxu0 %v1380
          %1384 = vmatprep.subr.bf16.mxu0 0
          %1385 = vmatpush1.bf16.xpose.msra.mxu0 0
          %1386 = vmatprep.subr.bf16.mxu0 0
          %1387 = vmatpush1.bf16.xpose.msra.mxu0 0
          %1388 = vmatprep.subr.bf16.mxu0 0
          %1389 = vmatpush1.bf16.xpose.msra.mxu0 0
          %1390 = vmatprep.subr.bf16.mxu0 0
          %1391 = vmatpush1.bf16.xpose.msra.mxu0 0
          %1392 = vmatprep.subr.bf16.mxu0 0
          %1393 = vmatpush1.bf16.xpose.msra.mxu0 0
          %1394 = vmatprep.subr.bf16.mxu0 0
          %1395 = vmatpush1.bf16.xpose.msra.mxu0 0
          %1396 = vmatprep.subr.bf16.mxu0 0
          %1397 = vmatpush1.bf16.xpose.msra.mxu0 0
          %1398 = vmatprep.subr.bf16.mxu0 0
          %1399 = vmatpush1.bf16.xpose.msra.mxu0 0
          %1400 = vmatprep.subr.bf16.mxu0 0
          %1401 = vmatpush1.bf16.xpose.msra.mxu0 0
          %1402 = vmatprep.subr.bf16.mxu0 0
          %1403 = vmatpush1.bf16.xpose.msra.mxu0 0
          %1404 = vmatprep.subr.bf16.mxu0 0
          %1405 = vmatpush1.bf16.xpose.msra.mxu0 0
          %1406 = vmatprep.subr.bf16.mxu0 0
          %1407 = vmatpush1.bf16.xpose.msra.mxu0 0
          %1408 = vmatprep.subr.bf16.mxu0 0
          %1409 = vmatpush1.bf16.xpose.msra.mxu0 0
          %1410 = vmatprep.subr.bf16.mxu0 0
          %1411 = vmatpush1.bf16.xpose.msra.mxu0 0
          %1412 = vmatprep.subr.bf16.mxu0 0
          %1413 = vmatpush1.bf16.xpose.msra.mxu0 0
          %1414 = vmatprep.mubr.bf16.mxu0 0
          %1415 = vmatmul.mubr.bf16.gmra.mrb[0].mxu0 %v1377
          %v1416 = vpop.f32.mrb[0].mxu0
          %v1417 = vadd.f32 %v1282, %v1416
          %v1418 = vpop.f32.mrb[0].mxu0
          %v1419 = vpop.f32.mrb[0].mxu0
          %v1420 = vpop.f32.mrb[0].mxu0
          %1421 = vdwg.mxu0
          %v1423 = vsel %vm1283, %v1239, 0
          %v1426 = vsel %vm1283, %v1265, 0
          %1428 = vmatprep.subr.bf16.mxu0 0
          %1429 = vmatpush1.bf16.xpose.msra.mxu0 %v1426
          %1430 = vmatprep.subr.bf16.mxu0 0
          %1431 = vmatpush1.bf16.xpose.msra.mxu0 0
          %1432 = vmatprep.subr.bf16.mxu0 0
          %1433 = vmatpush1.bf16.xpose.msra.mxu0 0
          %1434 = vmatprep.subr.bf16.mxu0 0
          %1435 = vmatpush1.bf16.xpose.msra.mxu0 0
          %1436 = vmatprep.subr.bf16.mxu0 0
          %1437 = vmatpush1.bf16.xpose.msra.mxu0 0
          %1438 = vmatprep.subr.bf16.mxu0 0
          %1439 = vmatpush1.bf16.xpose.msra.mxu0 0
          %1440 = vmatprep.subr.bf16.mxu0 0
          %1441 = vmatpush1.bf16.xpose.msra.mxu0 0
          %1442 = vmatprep.subr.bf16.mxu0 0
          %1443 = vmatpush1.bf16.xpose.msra.mxu0 0
          %1444 = vmatprep.subr.bf16.mxu0 0
          %1445 = vmatpush1.bf16.xpose.msra.mxu0 0
          %1446 = vmatprep.subr.bf16.mxu0 0
          %1447 = vmatpush1.bf16.xpose.msra.mxu0 0
          %1448 = vmatprep.subr.bf16.mxu0 0
          %1449 = vmatpush1.bf16.xpose.msra.mxu0 0
          %1450 = vmatprep.subr.bf16.mxu0 0
          %1451 = vmatpush1.bf16.xpose.msra.mxu0 0
          %1452 = vmatprep.subr.bf16.mxu0 0
          %1453 = vmatpush1.bf16.xpose.msra.mxu0 0
          %1454 = vmatprep.subr.bf16.mxu0 0
          %1455 = vmatpush1.bf16.xpose.msra.mxu0 0
          %1456 = vmatprep.subr.bf16.mxu0 0
          %1457 = vmatpush1.bf16.xpose.msra.mxu0 0
          %1458 = vmatprep.subr.bf16.mxu0 0
          %1459 = vmatpush1.bf16.xpose.msra.mxu0 0
          %1460 = vmatprep.mubr.bf16.mxu0 0
          %1461 = vmatmul.mubr.bf16.gmra.mrb[0].mxu0 %v1423
          %v1462 = vpop.f32.mrb[0].mxu0
          %v1463 = vadd.f32 %v1282, %v1462
          %v1464 = vpop.f32.mrb[0].mxu0
          %v1465 = vpop.f32.mrb[0].mxu0
          %v1466 = vpop.f32.mrb[0].mxu0
          %1467 = vdwg.mxu0
          %v1468 = vsel %vm1283, %v1325, -inf
          %1469 = vmax.xlane.f32.xlu0 %v1468
          %v1470 = vpop.xlane.xlu0 %1469
          %v1471 = vsel %vm1283, %v1371, -inf
          %1472 = vmax.xlane.f32.xlu0 %v1471
          %v1473 = vpop.xlane.xlu0 %1472
          %v1474 = vsel %vm1283, %v1417, -inf
          %1475 = vmax.xlane.f32.xlu0 %v1474
          %v1476 = vpop.xlane.xlu0 %1475
          %v1477 = vsel %vm1283, %v1463, -inf
          %1478 = vmax.xlane.f32.xlu0 %v1477
          %v1479 = vpop.xlane.xlu0 %1478
          %v1480 = vmax.f32 %v1247, %v1470
          %v1481 = vmax.f32 %v1248, %v1473
          %v1482 = vmax.f32 %v1249, %v1476
          %v1483 = vmax.f32 %v1250, %v1479
          %v1484 = vsub.f32 %v1247, %v1480
          %v1485 = vsub.f32 %v1248, %v1481
          %v1486 = vsub.f32 %v1249, %v1482
          %v1487 = vsub.f32 %v1250, %v1483
          %v1488 = vmul.f32 %v1484, 1.442695
          %v1489 = vpow.pop %v1488
          %v1490 = vmul.f32 %v1485, 1.442695
          %v1491 = vpow.pop %v1490
          %v1492 = vmul.f32 %v1486, 1.442695
          %v1493 = vpow.pop %v1492
          %v1494 = vmul.f32 %v1487, 1.442695
          %v1495 = vpow.pop %v1494
          %v1496 = vsub.f32 %v1325, %v1480
          %v1497 = vsub.f32 %v1371, %v1481
          %v1498 = vsub.f32 %v1417, %v1482
          %v1499 = vsub.f32 %v1463, %v1483
          %v1500 = vmul.f32 %v1496, 1.442695
          %v1501 = vpow.pop %v1500
          %v1502 = vmul.f32 %v1497, 1.442695
          %v1503 = vpow.pop %v1502
          %v1504 = vmul.f32 %v1498, 1.442695
          %v1505 = vpow.pop %v1504
          %v1506 = vmul.f32 %v1499, 1.442695
          %v1507 = vpow.pop %v1506
          %v1508 = vmul.f32 %v1489, %v1251
          %v1509 = vmul.f32 %v1491, %v1252
          %v1510 = vmul.f32 %v1493, %v1253
          %v1511 = vmul.f32 %v1495, %v1254
          %v1512 = vsel %vm1283, %v1501, 0.0
          %1513 = vadd.xlane.f32.xlu0 %v1512
          %v1514 = vpop.xlane.xlu0 %1513
          %v1515 = vsel %vm1283, %v1503, 0.0
          %1516 = vadd.xlane.f32.xlu0 %v1515
          %v1517 = vpop.xlane.xlu0 %1516
          %v1518 = vsel %vm1283, %v1505, 0.0
          %1519 = vadd.xlane.f32.xlu0 %v1518
          %v1520 = vpop.xlane.xlu0 %1519
          %v1521 = vsel %vm1283, %v1507, 0.0
          %1522 = vadd.xlane.f32.xlu0 %v1521
          %v1523 = vpop.xlane.xlu0 %1522
          %v1524 = vadd.f32 %v1508, %v1514
          %v1525 = vadd.f32 %v1509, %v1517
          %v1526 = vadd.f32 %v1510, %v1520
          %v1527 = vadd.f32 %v1511, %v1523
          %v1528 = vmul.f32 %v1489, %v1255
          %v1529 = vmul.f32 %v1491, %v1256
          %v1530 = vmul.f32 %v1493, %v1257
          %v1531 = vmul.f32 %v1495, %v1258
          %v1532 = vpack.c.bf16 %v1501, %v1501
          %v1533 = vpack.c.bf16 %v1503, %v1503
          %v1534 = vpack.c.bf16 %v1505, %v1505
          %v1535 = vpack.c.bf16 %v1507, %v1507
          %v1537 = vsel %vm1283, %v1532, 0
          %vm1539 = vcmask 1043456
          %v1541 = vsel %vm1539, %v1268, 0
          %1543 = vmatprep.subr.bf16.mxu0 0
          %1544 = vmatpush1.bf16.msra.mxu0 %v1541
          %1545 = vmatprep.subr.bf16.mxu0 0
          %1546 = vmatpush1.bf16.msra.mxu0 0
          %1547 = vmatprep.subr.bf16.mxu0 0
          %1548 = vmatpush1.bf16.msra.mxu0 0
          %1549 = vmatprep.subr.bf16.mxu0 0
          %1550 = vmatpush1.bf16.msra.mxu0 0
          %1551 = vmatprep.subr.bf16.mxu0 0
          %1552 = vmatpush1.bf16.msra.mxu0 0
          %1553 = vmatprep.subr.bf16.mxu0 0
          %1554 = vmatpush1.bf16.msra.mxu0 0
          %1555 = vmatprep.subr.bf16.mxu0 0
          %1556 = vmatpush1.bf16.msra.mxu0 0
          %1557 = vmatprep.subr.bf16.mxu0 0
          %1558 = vmatpush1.bf16.msra.mxu0 0
          %1559 = vmatprep.subr.bf16.mxu0 0
          %1560 = vmatpush1.bf16.msra.mxu0 0
          %1561 = vmatprep.subr.bf16.mxu0 0
          %1562 = vmatpush1.bf16.msra.mxu0 0
          %1563 = vmatprep.subr.bf16.mxu0 0
          %1564 = vmatpush1.bf16.msra.mxu0 0
          %1565 = vmatprep.subr.bf16.mxu0 0
          %1566 = vmatpush1.bf16.msra.mxu0 0
          %1567 = vmatprep.subr.bf16.mxu0 0
          %1568 = vmatpush1.bf16.msra.mxu0 0
          %1569 = vmatprep.subr.bf16.mxu0 0
          %1570 = vmatpush1.bf16.msra.mxu0 0
          %1571 = vmatprep.subr.bf16.mxu0 0
          %1572 = vmatpush1.bf16.msra.mxu0 0
          %1573 = vmatprep.subr.bf16.mxu0 0
          %1574 = vmatpush1.bf16.msra.mxu0 0
          %1575 = vmatprep.mubr.bf16.mxu0 0
          %1576 = vmatmul.mubr.bf16.gmra.mrb[0].mxu0 %v1537
          %v1577 = vpop.f32.mrb[0].mxu0
          %v1578 = vadd.f32 0.0, %v1577
          %v1579 = vpop.f32.mrb[0].mxu0
          %v1580 = vpop.f32.mrb[0].mxu0
          %v1581 = vpop.f32.mrb[0].mxu0
          %1582 = vdwg.mxu0
          %v1584 = vsel %vm1283, %v1533, 0
          %v1587 = vsel %vm1539, %v1269, 0
          %1589 = vmatprep.subr.bf16.mxu0 0
          %1590 = vmatpush1.bf16.msra.mxu0 %v1587
          %1591 = vmatprep.subr.bf16.mxu0 0
          %1592 = vmatpush1.bf16.msra.mxu0 0
          %1593 = vmatprep.subr.bf16.mxu0 0
          %1594 = vmatpush1.bf16.msra.mxu0 0
          %1595 = vmatprep.subr.bf16.mxu0 0
          %1596 = vmatpush1.bf16.msra.mxu0 0
          %1597 = vmatprep.subr.bf16.mxu0 0
          %1598 = vmatpush1.bf16.msra.mxu0 0
          %1599 = vmatprep.subr.bf16.mxu0 0
          %1600 = vmatpush1.bf16.msra.mxu0 0
          %1601 = vmatprep.subr.bf16.mxu0 0
          %1602 = vmatpush1.bf16.msra.mxu0 0
          %1603 = vmatprep.subr.bf16.mxu0 0
          %1604 = vmatpush1.bf16.msra.mxu0 0
          %1605 = vmatprep.subr.bf16.mxu0 0
          %1606 = vmatpush1.bf16.msra.mxu0 0
          %1607 = vmatprep.subr.bf16.mxu0 0
          %1608 = vmatpush1.bf16.msra.mxu0 0
          %1609 = vmatprep.subr.bf16.mxu0 0
          %1610 = vmatpush1.bf16.msra.mxu0 0
          %1611 = vmatprep.subr.bf16.mxu0 0
          %1612 = vmatpush1.bf16.msra.mxu0 0
          %1613 = vmatprep.subr.bf16.mxu0 0
          %1614 = vmatpush1.bf16.msra.mxu0 0
          %1615 = vmatprep.subr.bf16.mxu0 0
          %1616 = vmatpush1.bf16.msra.mxu0 0
          %1617 = vmatprep.subr.bf16.mxu0 0
          %1618 = vmatpush1.bf16.msra.mxu0 0
          %1619 = vmatprep.subr.bf16.mxu0 0
          %1620 = vmatpush1.bf16.msra.mxu0 0
          %1621 = vmatprep.mubr.bf16.mxu0 0
          %1622 = vmatmul.mubr.bf16.gmra.mrb[0].mxu0 %v1584
          %v1623 = vpop.f32.mrb[0].mxu0
          %v1624 = vadd.f32 0.0, %v1623
          %v1625 = vpop.f32.mrb[0].mxu0
          %v1626 = vpop.f32.mrb[0].mxu0
          %v1627 = vpop.f32.mrb[0].mxu0
          %1628 = vdwg.mxu0
          %v1630 = vsel %vm1283, %v1534, 0
          %v1633 = vsel %vm1539, %v1270, 0
          %1635 = vmatprep.subr.bf16.mxu0 0
          %1636 = vmatpush1.bf16.msra.mxu0 %v1633
          %1637 = vmatprep.subr.bf16.mxu0 0
          %1638 = vmatpush1.bf16.msra.mxu0 0
          %1639 = vmatprep.subr.bf16.mxu0 0
          %1640 = vmatpush1.bf16.msra.mxu0 0
          %1641 = vmatprep.subr.bf16.mxu0 0
          %1642 = vmatpush1.bf16.msra.mxu0 0
          %1643 = vmatprep.subr.bf16.mxu0 0
          %1644 = vmatpush1.bf16.msra.mxu0 0
          %1645 = vmatprep.subr.bf16.mxu0 0
          %1646 = vmatpush1.bf16.msra.mxu0 0
          %1647 = vmatprep.subr.bf16.mxu0 0
          %1648 = vmatpush1.bf16.msra.mxu0 0
          %1649 = vmatprep.subr.bf16.mxu0 0
          %1650 = vmatpush1.bf16.msra.mxu0 0
          %1651 = vmatprep.subr.bf16.mxu0 0
          %1652 = vmatpush1.bf16.msra.mxu0 0
          %1653 = vmatprep.subr.bf16.mxu0 0
          %1654 = vmatpush1.bf16.msra.mxu0 0
          %1655 = vmatprep.subr.bf16.mxu0 0
          %1656 = vmatpush1.bf16.msra.mxu0 0
          %1657 = vmatprep.subr.bf16.mxu0 0
          %1658 = vmatpush1.bf16.msra.mxu0 0
          %1659 = vmatprep.subr.bf16.mxu0 0
          %1660 = vmatpush1.bf16.msra.mxu0 0
          %1661 = vmatprep.subr.bf16.mxu0 0
          %1662 = vmatpush1.bf16.msra.mxu0 0
          %1663 = vmatprep.subr.bf16.mxu0 0
          %1664 = vmatpush1.bf16.msra.mxu0 0
          %1665 = vmatprep.subr.bf16.mxu0 0
          %1666 = vmatpush1.bf16.msra.mxu0 0
          %1667 = vmatprep.mubr.bf16.mxu0 0
          %1668 = vmatmul.mubr.bf16.gmra.mrb[0].mxu0 %v1630
          %v1669 = vpop.f32.mrb[0].mxu0
          %v1670 = vadd.f32 0.0, %v1669
          %v1671 = vpop.f32.mrb[0].mxu0
          %v1672 = vpop.f32.mrb[0].mxu0
          %v1673 = vpop.f32.mrb[0].mxu0
          %1674 = vdwg.mxu0
          %v1676 = vsel %vm1283, %v1535, 0
          %v1679 = vsel %vm1539, %v1271, 0
          %1681 = vmatprep.subr.bf16.mxu0 0
          %1682 = vmatpush1.bf16.msra.mxu0 %v1679
          %1683 = vmatprep.subr.bf16.mxu0 0
          %1684 = vmatpush1.bf16.msra.mxu0 0
          %1685 = vmatprep.subr.bf16.mxu0 0
          %1686 = vmatpush1.bf16.msra.mxu0 0
          %1687 = vmatprep.subr.bf16.mxu0 0
          %1688 = vmatpush1.bf16.msra.mxu0 0
          %1689 = vmatprep.subr.bf16.mxu0 0
          %1690 = vmatpush1.bf16.msra.mxu0 0
          %1691 = vmatprep.subr.bf16.mxu0 0
          %1692 = vmatpush1.bf16.msra.mxu0 0
          %1693 = vmatprep.subr.bf16.mxu0 0
          %1694 = vmatpush1.bf16.msra.mxu0 0
          %1695 = vmatprep.subr.bf16.mxu0 0
          %1696 = vmatpush1.bf16.msra.mxu0 0
          %1697 = vmatprep.subr.bf16.mxu0 0
          %1698 = vmatpush1.bf16.msra.mxu0 0
          %1699 = vmatprep.subr.bf16.mxu0 0
          %1700 = vmatpush1.bf16.msra.mxu0 0
          %1701 = vmatprep.subr.bf16.mxu0 0
          %1702 = vmatpush1.bf16.msra.mxu0 0
          %1703 = vmatprep.subr.bf16.mxu0 0
          %1704 = vmatpush1.bf16.msra.mxu0 0
          %1705 = vmatprep.subr.bf16.mxu0 0
          %1706 = vmatpush1.bf16.msra.mxu0 0
          %1707 = vmatprep.subr.bf16.mxu0 0
          %1708 = vmatpush1.bf16.msra.mxu0 0
          %1709 = vmatprep.subr.bf16.mxu0 0
          %1710 = vmatpush1.bf16.msra.mxu0 0
          %1711 = vmatprep.subr.bf16.mxu0 0
          %1712 = vmatpush1.bf16.msra.mxu0 0
          %1713 = vmatprep.mubr.bf16.mxu0 0
          %1714 = vmatmul.mubr.bf16.gmra.mrb[0].mxu0 %v1676
          %v1715 = vpop.f32.mrb[0].mxu0
          %v1716 = vadd.f32 0.0, %v1715
          %v1717 = vpop.f32.mrb[0].mxu0
          %v1718 = vpop.f32.mrb[0].mxu0
          %v1719 = vpop.f32.mrb[0].mxu0
          %1720 = vdwg.mxu0
          %v1721 = vadd.f32 %v1528, %v1578
          %v1722 = vadd.f32 %v1529, %v1624
          %v1723 = vadd.f32 %v1530, %v1670
          %v1724 = vadd.f32 %v1531, %v1716
        $region85: #{tpu_custom_call.1} parent=75 // loop_footer
          %s1244 = sadd.s32 %s1242, 1
        $region86: #{tpu_custom_call.1} parent=75 // loop_footer_branch
          %1241 = sbr.rel target = $region82
        $region87: #{tpu_custom_call.1} parent=75 // loop_exit
          _
        %v1725 = vrcp.pop %v1251
        %v1726 = vrcp.pop %v1252
        %v1727 = vrcp.pop %v1253
        %v1728 = vrcp.pop %v1254
        %v1729 = vmul.f32 %v1255, %v1725
        %v1730 = vmul.f32 %v1256, %v1726
        %v1731 = vmul.f32 %v1257, %v1727
        %v1732 = vmul.f32 %v1258, %v1728
        %v1733 = vpack.c.bf16 %v1729, %v1729
        %v1734 = vpack.c.bf16 %v1730, %v1730
        %v1735 = vpack.c.bf16 %v1731, %v1731
        %v1736 = vpack.c.bf16 %v1732, %v1732
        %v1737 = vld [vmem:[%s6] sm:$0xf]
        %s1738 = scalar_lea.vmem %s6, 4
        %v1739 = vld [vmem:[%s1738] sm:$0xf]
        %vm1740 = vcmask 64512
        %v1742 = vsel %vm1740, %v1734, 0
        %vm1744 = vcmask 1043456
        %v1746 = vsel %vm1744, %v1739, 0
        %1748 = vmatprep.subr.bf16.mxu0 0
        %1749 = vmatpush1.bf16.msra.mxu0 %v1746
        %1750 = vmatprep.subr.bf16.mxu0 0
        %1751 = vmatpush1.bf16.msra.mxu0 0
        %1752 = vmatprep.subr.bf16.mxu0 0
        %1753 = vmatpush1.bf16.msra.mxu0 0
        %1754 = vmatprep.subr.bf16.mxu0 0
        %1755 = vmatpush1.bf16.msra.mxu0 0
        %1756 = vmatprep.subr.bf16.mxu0 0
        %1757 = vmatpush1.bf16.msra.mxu0 0
        %1758 = vmatprep.subr.bf16.mxu0 0
        %1759 = vmatpush1.bf16.msra.mxu0 0
        %1760 = vmatprep.subr.bf16.mxu0 0
        %1761 = vmatpush1.bf16.msra.mxu0 0
        %1762 = vmatprep.subr.bf16.mxu0 0
        %1763 = vmatpush1.bf16.msra.mxu0 0
        %1764 = vmatprep.subr.bf16.mxu0 0
        %1765 = vmatpush1.bf16.msra.mxu0 0
        %1766 = vmatprep.subr.bf16.mxu0 0
        %1767 = vmatpush1.bf16.msra.mxu0 0
        %1768 = vmatprep.subr.bf16.mxu0 0
        %1769 = vmatpush1.bf16.msra.mxu0 0
        %1770 = vmatprep.subr.bf16.mxu0 0
        %1771 = vmatpush1.bf16.msra.mxu0 0
        %1772 = vmatprep.subr.bf16.mxu0 0
        %1773 = vmatpush1.bf16.msra.mxu0 0
        %1774 = vmatprep.subr.bf16.mxu0 0
        %1775 = vmatpush1.bf16.msra.mxu0 0
        %1776 = vmatprep.subr.bf16.mxu0 0
        %1777 = vmatpush1.bf16.msra.mxu0 0
        %1778 = vmatprep.subr.bf16.mxu0 0
        %1779 = vmatpush1.bf16.msra.mxu0 0
        %1780 = vmatprep.mubr.bf16.mxu0 0
        %1781 = vmatmul.mubr.bf16.gmra.mrb[0].mxu0 %v1742
        %v1782 = vpop.f32.mrb[0].mxu0
        %v1783 = vadd.f32 0.0, %v1782
        %v1784 = vpop.f32.mrb[0].mxu0
        %v1785 = vpop.f32.mrb[0].mxu0
        %v1786 = vpop.f32.mrb[0].mxu0
        %1787 = vdwg.mxu0
        %v1789 = vsel %vm1740, %v1733, 0
        %v1792 = vsel %vm1744, %v1737, 0
        %1794 = vmatprep.subr.bf16.mxu0 0
        %1795 = vmatpush1.bf16.msra.mxu0 %v1792
        %1796 = vmatprep.subr.bf16.mxu0 0
        %1797 = vmatpush1.bf16.msra.mxu0 0
        %1798 = vmatprep.subr.bf16.mxu0 0
        %1799 = vmatpush1.bf16.msra.mxu0 0
        %1800 = vmatprep.subr.bf16.mxu0 0
        %1801 = vmatpush1.bf16.msra.mxu0 0
        %1802 = vmatprep.subr.bf16.mxu0 0
        %1803 = vmatpush1.bf16.msra.mxu0 0
        %1804 = vmatprep.subr.bf16.mxu0 0
        %1805 = vmatpush1.bf16.msra.mxu0 0
        %1806 = vmatprep.subr.bf16.mxu0 0
        %1807 = vmatpush1.bf16.msra.mxu0 0
        %1808 = vmatprep.subr.bf16.mxu0 0
        %1809 = vmatpush1.bf16.msra.mxu0 0
        %1810 = vmatprep.subr.bf16.mxu0 0
        %1811 = vmatpush1.bf16.msra.mxu0 0
        %1812 = vmatprep.subr.bf16.mxu0 0
        %1813 = vmatpush1.bf16.msra.mxu0 0
        %1814 = vmatprep.subr.bf16.mxu0 0
        %1815 = vmatpush1.bf16.msra.mxu0 0
        %1816 = vmatprep.subr.bf16.mxu0 0
        %1817 = vmatpush1.bf16.msra.mxu0 0
        %1818 = vmatprep.subr.bf16.mxu0 0
        %1819 = vmatpush1.bf16.msra.mxu0 0
        %1820 = vmatprep.subr.bf16.mxu0 0
        %1821 = vmatpush1.bf16.msra.mxu0 0
        %1822 = vmatprep.subr.bf16.mxu0 0
        %1823 = vmatpush1.bf16.msra.mxu0 0
        %1824 = vmatprep.subr.bf16.mxu0 0
        %1825 = vmatpush1.bf16.msra.mxu0 0
        %1826 = vmatprep.mubr.bf16.mxu0 0
        %1827 = vmatmul.mubr.bf16.gmra.mrb[0].mxu0 %v1789
        %v1828 = vpop.f32.mrb[0].mxu0
        %v1829 = vadd.f32 %v1783, %v1828
        %v1830 = vpop.f32.mrb[0].mxu0
        %v1831 = vpop.f32.mrb[0].mxu0
        %v1832 = vpop.f32.mrb[0].mxu0
        %1833 = vdwg.mxu0
        %s1834 = scalar_lea.vmem %s6, 8
        %v1835 = vld [vmem:[%s1834] sm:$0xf]
        %v1837 = vsel %vm1740, %v1735, 0
        %v1840 = vsel %vm1744, %v1835, 0
        %1842 = vmatprep.subr.bf16.mxu0 0
        %1843 = vmatpush1.bf16.msra.mxu0 %v1840
        %1844 = vmatprep.subr.bf16.mxu0 0
        %1845 = vmatpush1.bf16.msra.mxu0 0
        %1846 = vmatprep.subr.bf16.mxu0 0
        %1847 = vmatpush1.bf16.msra.mxu0 0
        %1848 = vmatprep.subr.bf16.mxu0 0
        %1849 = vmatpush1.bf16.msra.mxu0 0
        %1850 = vmatprep.subr.bf16.mxu0 0
        %1851 = vmatpush1.bf16.msra.mxu0 0
        %1852 = vmatprep.subr.bf16.mxu0 0
        %1853 = vmatpush1.bf16.msra.mxu0 0
        %1854 = vmatprep.subr.bf16.mxu0 0
        %1855 = vmatpush1.bf16.msra.mxu0 0
        %1856 = vmatprep.subr.bf16.mxu0 0
        %1857 = vmatpush1.bf16.msra.mxu0 0
        %1858 = vmatprep.subr.bf16.mxu0 0
        %1859 = vmatpush1.bf16.msra.mxu0 0
        %1860 = vmatprep.subr.bf16.mxu0 0
        %1861 = vmatpush1.bf16.msra.mxu0 0
        %1862 = vmatprep.subr.bf16.mxu0 0
        %1863 = vmatpush1.bf16.msra.mxu0 0
        %1864 = vmatprep.subr.bf16.mxu0 0
        %1865 = vmatpush1.bf16.msra.mxu0 0
        %1866 = vmatprep.subr.bf16.mxu0 0
        %1867 = vmatpush1.bf16.msra.mxu0 0
        %1868 = vmatprep.subr.bf16.mxu0 0
        %1869 = vmatpush1.bf16.msra.mxu0 0
        %1870 = vmatprep.subr.bf16.mxu0 0
        %1871 = vmatpush1.bf16.msra.mxu0 0
        %1872 = vmatprep.subr.bf16.mxu0 0
        %1873 = vmatpush1.bf16.msra.mxu0 0
        %1874 = vmatprep.mubr.bf16.mxu0 0
        %1875 = vmatmul.mubr.bf16.gmra.mrb[0].mxu0 %v1837
        %v1876 = vpop.f32.mrb[0].mxu0
        %v1877 = vadd.f32 0.0, %v1876
        %v1878 = vpop.f32.mrb[0].mxu0
        %v1879 = vpop.f32.mrb[0].mxu0
        %v1880 = vpop.f32.mrb[0].mxu0
        %1881 = vdwg.mxu0
        %v1882 = vadd.f32 %v1829, %v1877
        %s1883 = scalar_lea.vmem %s6, 12
        %v1884 = vld [vmem:[%s1883] sm:$0xf]
        %v1886 = vsel %vm1740, %v1736, 0
        %v1889 = vsel %vm1744, %v1884, 0
        %1891 = vmatprep.subr.bf16.mxu0 0
        %1892 = vmatpush1.bf16.msra.mxu0 %v1889
        %1893 = vmatprep.subr.bf16.mxu0 0
        %1894 = vmatpush1.bf16.msra.mxu0 0
        %1895 = vmatprep.subr.bf16.mxu0 0
        %1896 = vmatpush1.bf16.msra.mxu0 0
        %1897 = vmatprep.subr.bf16.mxu0 0
        %1898 = vmatpush1.bf16.msra.mxu0 0
        %1899 = vmatprep.subr.bf16.mxu0 0
        %1900 = vmatpush1.bf16.msra.mxu0 0
        %1901 = vmatprep.subr.bf16.mxu0 0
        %1902 = vmatpush1.bf16.msra.mxu0 0
        %1903 = vmatprep.subr.bf16.mxu0 0
        %1904 = vmatpush1.bf16.msra.mxu0 0
        %1905 = vmatprep.subr.bf16.mxu0 0
        %1906 = vmatpush1.bf16.msra.mxu0 0
        %1907 = vmatprep.subr.bf16.mxu0 0
        %1908 = vmatpush1.bf16.msra.mxu0 0
        %1909 = vmatprep.subr.bf16.mxu0 0
        %1910 = vmatpush1.bf16.msra.mxu0 0
        %1911 = vmatprep.subr.bf16.mxu0 0
        %1912 = vmatpush1.bf16.msra.mxu0 0
        %1913 = vmatprep.subr.bf16.mxu0 0
        %1914 = vmatpush1.bf16.msra.mxu0 0
        %1915 = vmatprep.subr.bf16.mxu0 0
        %1916 = vmatpush1.bf16.msra.mxu0 0
        %1917 = vmatprep.subr.bf16.mxu0 0
        %1918 = vmatpush1.bf16.msra.mxu0 0
        %1919 = vmatprep.subr.bf16.mxu0 0
        %1920 = vmatpush1.bf16.msra.mxu0 0
        %1921 = vmatprep.subr.bf16.mxu0 0
        %1922 = vmatpush1.bf16.msra.mxu0 0
        %1923 = vmatprep.mubr.bf16.mxu0 0
        %1924 = vmatmul.mubr.bf16.gmra.mrb[0].mxu0 %v1886
        %v1925 = vpop.f32.mrb[0].mxu0
        %v1926 = vadd.f32 0.0, %v1925
        %v1927 = vpop.f32.mrb[0].mxu0
        %v1928 = vpop.f32.mrb[0].mxu0
        %v1929 = vpop.f32.mrb[0].mxu0
        %1930 = vdwg.mxu0
        %v1931 = vadd.f32 %v1882, %v1926
        %v1932 = vld [vmem:[%s7] sm:$0x1]
        %v1934 = vlaneseq
        %v1935 = vshrl.u32 %v1934, 7
        %v1936 = vsub.s32 0, %v1935
        %v1937 = vrot.slane %v1932, %v1936
        %v1939 = vadd.f32 %v1931, %v1937
        %v1940 = vadd.f32 %v999, %v1939
        %v1941 = vld [vmem:[%s8] sm:$0x1]
        %v1942 = vld [vmem:[%s9] sm:$0x1]
        %v1943 = vsel %vm1021, %v1940, 0.0
        %1944 = vadd.xlane.f32.xlu0 %v1943
        %v1945 = vpop.xlane.xlu0 %1944
        %v1946 = vrcp.pop 32.0
        %v1947 = vmul.f32 %v1945, %v1946
        %v1948 = vsub.f32 %v1940, %v1947
        %v1949 = vmul.f32 %v1948, %v1948
        %v1950 = vsel %vm1021, %v1949, 0.0
        %1951 = vadd.xlane.f32.xlu0 %v1950
        %v1952 = vpop.xlane.xlu0 %1951
        %v1953 = vmul.f32 %v1952, %v1946
        %v1954 = vadd.f32 %v1953, 1e-05
        %v1955 = vrsqrt.pop %v1954
        %v1956 = vmul.f32 %v1948, %v1955
        %v1958 = vlaneseq
        %v1959 = vshrl.u32 %v1958, 7
        %v1960 = vsub.s32 0, %v1959
        %v1961 = vrot.slane %v1941, %v1960
        %v1963 = vmul.f32 %v1956, %v1961
        %v1965 = vlaneseq
        %v1966 = vshrl.u32 %v1965, 7
        %v1967 = vsub.s32 0, %v1966
        %v1968 = vrot.slane %v1942, %v1967
        %v1970 = vadd.f32 %v1963, %v1968
        %v1971 = vpack.c.bf16 %v1970, %v1970
        %v1972 = vld [vmem:[%s10] sm:$0xf]
        %v1973 = vld [vmem:[%s10 + $0x4] sm:$0xf]
        %v1974 = vld [vmem:[%s10 + $0x8] sm:$0xf]
        %v1975 = vld [vmem:[%s10 + $0xc] sm:$0xf]
        %v1976 = vld [vmem:[%s11] sm:$0x1]
        %v1978 = vlaneseq
        %v1979 = vshrl.u32 %v1978, 7
        %v1980 = vsub.s32 0, %v1979
        %v1981 = vrot.slane %v1976, %v1980
        %v1987 = vunpack.c.l.b16 %v1972
        %v1988 = vunpack.c.l.b16 %v1973
        %v1989 = vunpack.c.l.b16 %v1974
        %v1990 = vunpack.c.l.b16 %v1975
        %v1991 = vpack.c.b16 %v1988, %v1987
        %v1992 = vpack.c.b16 %v1990, %v1989
        %v1996 = vsel %vm1021, %v1971, 0
        %1998 = vmatprep.subr.bf16.mxu0 0
        %1999 = vmatpush1.bf16.msra.mxu0 %v1991
        %2000 = vmatprep.subr.bf16.mxu0 0
        %2001 = vmatpush1.bf16.msra.mxu0 %v1992
        %2002 = vmatprep.subr.bf16.mxu0 0
        %2003 = vmatpush1.bf16.msra.mxu0 0
        %2004 = vmatprep.subr.bf16.mxu0 0
        %2005 = vmatpush1.bf16.msra.mxu0 0
        %2006 = vmatprep.subr.bf16.mxu0 0
        %2007 = vmatpush1.bf16.msra.mxu0 0
        %2008 = vmatprep.subr.bf16.mxu0 0
        %2009 = vmatpush1.bf16.msra.mxu0 0
        %2010 = vmatprep.subr.bf16.mxu0 0
        %2011 = vmatpush1.bf16.msra.mxu0 0
        %2012 = vmatprep.subr.bf16.mxu0 0
        %2013 = vmatpush1.bf16.msra.mxu0 0
        %2014 = vmatprep.subr.bf16.mxu0 0
        %2015 = vmatpush1.bf16.msra.mxu0 0
        %2016 = vmatprep.subr.bf16.mxu0 0
        %2017 = vmatpush1.bf16.msra.mxu0 0
        %2018 = vmatprep.subr.bf16.mxu0 0
        %2019 = vmatpush1.bf16.msra.mxu0 0
        %2020 = vmatprep.subr.bf16.mxu0 0
        %2021 = vmatpush1.bf16.msra.mxu0 0
        %2022 = vmatprep.subr.bf16.mxu0 0
        %2023 = vmatpush1.bf16.msra.mxu0 0
        %2024 = vmatprep.subr.bf16.mxu0 0
        %2025 = vmatpush1.bf16.msra.mxu0 0
        %2026 = vmatprep.subr.bf16.mxu0 0
        %2027 = vmatpush1.bf16.msra.mxu0 0
        %2028 = vmatprep.subr.bf16.mxu0 0
        %2029 = vmatpush1.bf16.msra.mxu0 0
        %2030 = vmatprep.mubr.bf16.mxu0 0
        %2031 = vmatmul.mubr.bf16.gmra.mrb[0].mxu0 %v1996
        %v2032 = vpop.f32.mrb[0].mxu0
        %v2033 = vadd.f32 %v1981, %v2032
        %v2034 = vpop.f32.mrb[0].mxu0
        %v2035 = vpop.f32.mrb[0].mxu0
        %v2036 = vpop.f32.mrb[0].mxu0
        %2037 = vdwg.mxu0
        %v2038 = vmul.f32 %v2033, 0.5
        %v2039 = vmul.f32 %v2033, 0.70710677
        %v2040 = verf.f32.pop %v2039
        %v2041 = vadd.f32 %v2040, 1.0
        %v2042 = vmul.f32 %v2038, %v2041
        %v2043 = vpack.c.bf16 %v2042, %v2042
        %v2044 = vld [vmem:[%s12] sm:$0xf]
        %v2045 = vld [vmem:[%s12 + $0x4] sm:$0xf]
        %v2046 = vld [vmem:[%s12 + $0x8] sm:$0xf]
        %v2047 = vld [vmem:[%s12 + $0xc] sm:$0xf]
        %v2048 = vld [vmem:[%s12 + $0x10] sm:$0xf]
        %v2049 = vld [vmem:[%s12 + $0x14] sm:$0xf]
        %v2050 = vld [vmem:[%s12 + $0x18] sm:$0xf]
        %v2051 = vld [vmem:[%s12 + $0x1c] sm:$0xf]
        %v2052 = vld [vmem:[%s12 + $0x20] sm:$0xf]
        %v2053 = vld [vmem:[%s12 + $0x24] sm:$0xf]
        %v2054 = vld [vmem:[%s12 + $0x28] sm:$0xf]
        %v2055 = vld [vmem:[%s12 + $0x2c] sm:$0xf]
        %v2056 = vld [vmem:[%s12 + $0x30] sm:$0xf]
        %v2057 = vld [vmem:[%s12 + $0x34] sm:$0xf]
        %v2058 = vld [vmem:[%s12 + $0x38] sm:$0xf]
        %v2059 = vld [vmem:[%s12 + $0x3c] sm:$0xf]
        %v2060 = vld [vmem:[%s13] sm:$0x1]
        %v2062 = vlaneseq
        %v2063 = vshrl.u32 %v2062, 7
        %v2064 = vsub.s32 0, %v2063
        %v2065 = vrot.slane %v2060, %v2064
        %v2083 = vunpack.c.l.b16 %v2044
        %v2084 = vunpack.c.l.b16 %v2045
        %v2085 = vunpack.c.l.b16 %v2046
        %v2086 = vunpack.c.l.b16 %v2047
        %v2087 = vunpack.c.l.b16 %v2048
        %v2088 = vunpack.c.l.b16 %v2049
        %v2089 = vunpack.c.l.b16 %v2050
        %v2090 = vunpack.c.l.b16 %v2051
        %v2091 = vunpack.c.l.b16 %v2052
        %v2092 = vunpack.c.l.b16 %v2053
        %v2093 = vunpack.c.l.b16 %v2054
        %v2094 = vunpack.c.l.b16 %v2055
        %v2095 = vunpack.c.l.b16 %v2056
        %v2096 = vunpack.c.l.b16 %v2057
        %v2097 = vunpack.c.l.b16 %v2058
        %v2098 = vunpack.c.l.b16 %v2059
        %v2099 = vpack.c.b16 %v2084, %v2083
        %v2100 = vpack.c.b16 %v2086, %v2085
        %v2101 = vpack.c.b16 %v2088, %v2087
        %v2102 = vpack.c.b16 %v2090, %v2089
        %v2103 = vpack.c.b16 %v2092, %v2091
        %v2104 = vpack.c.b16 %v2094, %v2093
        %v2105 = vpack.c.b16 %v2096, %v2095
        %v2106 = vpack.c.b16 %v2098, %v2097
        %2115 = vmatprep.subr.bf16.mxu0 0
        %2116 = vmatpush1.bf16.msra.mxu0 %v2099
        %2117 = vmatprep.subr.bf16.mxu0 0
        %2118 = vmatpush1.bf16.msra.mxu0 %v2100
        %2119 = vmatprep.subr.bf16.mxu0 0
        %2120 = vmatpush1.bf16.msra.mxu0 %v2101
        %2121 = vmatprep.subr.bf16.mxu0 0
        %2122 = vmatpush1.bf16.msra.mxu0 %v2102
        %2123 = vmatprep.subr.bf16.mxu0 0
        %2124 = vmatpush1.bf16.msra.mxu0 %v2103
        %2125 = vmatprep.subr.bf16.mxu0 0
        %2126 = vmatpush1.bf16.msra.mxu0 %v2104
        %2127 = vmatprep.subr.bf16.mxu0 0
        %2128 = vmatpush1.bf16.msra.mxu0 %v2105
        %2129 = vmatprep.subr.bf16.mxu0 0
        %2130 = vmatpush1.bf16.msra.mxu0 %v2106
        %2131 = vmatprep.subr.bf16.mxu0 0
        %2132 = vmatpush1.bf16.msra.mxu0 0
        %2133 = vmatprep.subr.bf16.mxu0 0
        %2134 = vmatpush1.bf16.msra.mxu0 0
        %2135 = vmatprep.subr.bf16.mxu0 0
        %2136 = vmatpush1.bf16.msra.mxu0 0
        %2137 = vmatprep.subr.bf16.mxu0 0
        %2138 = vmatpush1.bf16.msra.mxu0 0
        %2139 = vmatprep.subr.bf16.mxu0 0
        %2140 = vmatpush1.bf16.msra.mxu0 0
        %2141 = vmatprep.subr.bf16.mxu0 0
        %2142 = vmatpush1.bf16.msra.mxu0 0
        %2143 = vmatprep.subr.bf16.mxu0 0
        %2144 = vmatpush1.bf16.msra.mxu0 0
        %2145 = vmatprep.subr.bf16.mxu0 0
        %2146 = vmatpush1.bf16.msra.mxu0 0
        %2147 = vmatprep.mubr.bf16.mxu0 0
        %2148 = vmatmul.mubr.bf16.gmra.mrb[0].mxu0 %v2043
        %v2149 = vpop.f32.mrb[0].mxu0
        %v2150 = vadd.f32 %v2065, %v2149
        %v2151 = vpop.f32.mrb[0].mxu0
        %v2152 = vpop.f32.mrb[0].mxu0
        %v2153 = vpop.f32.mrb[0].mxu0
        %2154 = vdwg.mxu0
        %v2155 = vadd.f32 %v1940, %v2150
        %2156 = vst.msk [vmem:[%s472] sm:$0xff] %vm1021, %v2155
        %s2157 = sand.u32 %s349, 1
        %s2158 = scalar_lea.sflag [#allocation6], %s2157
        %s2159 = sand.u32 %s349, 1
        %s2160 = smul.addr %s2159, 8
        %s2161 = scalar_lea.vmem [#allocation5], %s2160
        // Predicated region
        $region88: #{tpu_custom_call.1} parent=75 // pred_check
          %p2162 = pneg %p359
        $region89: #{tpu_custom_call.1} parent=75 // pred_check_branch
          %2164 = sbr.rel (%p2162) target = $region91
        $region90: #{tpu_custom_call.1} parent=75 // pred_region
          %s2166 = ssub.s32 128, 128
          %2167 = vsyncadd %s2158, %s2166
          %s2168 = sadd.s32 %s33, %s32
          %s2169 = smul.addr %s2168, 128
          %s2170 = scalar_lea.hbm %s14, %s2169
          %s2172 = sshll.u32 %s2161, 4
          %s2173 = int_to_ptr.vmem [resolvable:$true] %s2172
          %2175 = dma.vmem_to_hbm [thread:$0]  %s2173, 128, %s2170, %s2158
        $region91: #{tpu_custom_call.1} parent=75 // pred_fallthru
          _
      $region76: #{tpu_custom_call.1} parent=5 // pred_fallthru
        _
      %p2176 = scmp.le.s32.totalorder 2, %s23
      // Predicated region
      $region92: #{tpu_custom_call.1} parent=5 // pred_check
        %p2177 = pneg %p2176
      $region93: #{tpu_custom_call.1} parent=5 // pred_check_branch
        %2179 = sbr.rel (%p2177) target = $region95
      $region94: #{tpu_custom_call.1} parent=5 // pred_region
        %s2180 = ssub.s32 %s23, 2
        // Predicated region
        $region96: #{tpu_custom_call.1} parent=94 // pred_check
          %p2181 = pneg %p365
        $region97: #{tpu_custom_call.1} parent=94 // pred_check_branch
          %2183 = sbr.rel (%p2181) target = $region99
        $region98: #{tpu_custom_call.1} parent=94 // pred_region
          %s2184 = sand.u32 %s350, 1
          %s2185 = scalar_lea.sflag [#allocation6], %s2184
          %s2186 = sand.u32 %s350, 1
          %s2187 = smul.addr %s2186, 8
          %s2188 = scalar_lea.vmem [#allocation5], %s2187
          %2189 = dma.done %s2185, 128
        $region99: #{tpu_custom_call.1} parent=94 // pred_fallthru
          _
      $region95: #{tpu_custom_call.1} parent=5 // pred_fallthru
        _
    $region6: #{tpu_custom_call.1} parent=1 // loop_footer
      %s27 = sadd.s32 1, %s23
    $region7: #{tpu_custom_call.1} parent=1 // loop_footer_branch
      %22 = sbr.rel target = $region3
    $region8: #{tpu_custom_call.1} parent=1 // loop_exit
      _
    %2190 = vsyncpa [#allocation6], 1
    %s2191 = scalar_lea.sflag [#allocation6], 1
    %2192 = vsyncpa %s2191, 1

</llo_original>
